<compile_context>
chip_gen: v7x
topology: tpu7x:2x2x1
jax: 0.10.0
libtpu: 0.0.40
codegen_flags: <defaults>
</compile_context>

<pallas_src>
from functools import partial

import jax
import jax.numpy as jnp
from jax import lax
from jax.experimental import pallas as pl
from jax.experimental.pallas import tpu as pltpu

EPS = 1e-5
LANES = 128                     # lane-dense channel padding target
MAX_TILE_ROWS = 256             # rows (M) per grid step
VMEM_LIMIT = 32 * 1024 * 1024   # fits scoped default on v5e/v6e/v7x


# ----------------------------------------------------------------------------- kernels

def _matmul_bias_stats_kernel(x_ref, w_ref, b_ref, o_ref, psum_ref, psumsq_ref):
    """One M-tile of  O = X @ W + b  (bf16 operands, f32 accumulation) plus per-tile
    per-column sum and sum-of-squares (partial stats for a two-pass BatchNorm).

    x_ref: [TM, Kd] bf16   w_ref: [Kd, C] bf16   b_ref: [1, C] f32
    o_ref: [TM, C] f32     psum_ref/psumsq_ref: [1, 8, C] f32 (row 0 replicated)
    """
    acc = jnp.dot(x_ref[...], w_ref[...], preferred_element_type=jnp.float32)
    acc = acc + b_ref[...]
    o_ref[...] = acc
    s = jnp.sum(acc, axis=0, keepdims=True)          # [1, C]
    ss = jnp.sum(acc * acc, axis=0, keepdims=True)   # [1, C]
    psum_ref[...] = jnp.broadcast_to(s[None], psum_ref.shape)
    psumsq_ref[...] = jnp.broadcast_to(ss[None], psumsq_ref.shape)


def _bn_apply_relu_kernel(x_ref, scale_ref, shift_ref, o_ref):
    """y = relu(x * scale + shift) with per-column (folded BatchNorm) scale/shift.

    x_ref: [TM, C] f32   scale_ref/shift_ref: [1, C] f32   o_ref: [TM, C] (any dtype)
    """
    y = x_ref[...] * scale_ref[...] + shift_ref[...]
    o_ref[...] = jnp.maximum(y, 0.0).astype(o_ref.dtype)


# ----------------------------------------------------------------------------- wrappers

def _round_up(v, m):
    return (v + m - 1) // m * m


def _pad_last(a, target):
    pad = target - a.shape[-1]
    if pad == 0:
        return a
    cfg = [(0, 0)] * (a.ndim - 1) + [(0, pad)]
    return jnp.pad(a, cfg)


def _pad_to(a, shape):
    return jnp.pad(a, [(0, t - s) for s, t in zip(a.shape, shape)])


def _pick_tile(m, cap=MAX_TILE_ROWS):
    t = min(cap, m)
    while t > 8 and m % t:
        t //= 2
    return t if (m % t == 0 and t % 8 == 0) else m


def _matmul_bias_stats(x2d, w, bias_row):
    """Row-tiled lane-dense matmul + bias.  Returns raw f32 result and the global
    per-column sum / sum-of-squares (reduced from per-tile partials)."""
    m, kdim = x2d.shape
    cout = w.shape[1]
    tm = _pick_tile(m)
    g = m // tm
    raw, psum, psumsq = pl.pallas_call(
        _matmul_bias_stats_kernel,
        grid=(g,),
        in_specs=[
            pl.BlockSpec((tm, kdim), lambda i: (i, 0)),
            pl.BlockSpec((kdim, cout), lambda i: (0, 0)),
            pl.BlockSpec((1, cout), lambda i: (0, 0)),
        ],
        out_specs=(
            pl.BlockSpec((tm, cout), lambda i: (i, 0)),
            pl.BlockSpec((1, 8, cout), lambda i: (i, 0, 0)),
            pl.BlockSpec((1, 8, cout), lambda i: (i, 0, 0)),
        ),
        out_shape=(
            jax.ShapeDtypeStruct((m, cout), jnp.float32),
            jax.ShapeDtypeStruct((g, 8, cout), jnp.float32),
            jax.ShapeDtypeStruct((g, 8, cout), jnp.float32),
        ),
        compiler_params=pltpu.CompilerParams(
            dimension_semantics=("parallel",),
            vmem_limit_bytes=VMEM_LIMIT,
        ),
    )(x2d, w, bias_row)
    return raw, psum[:, 0, :].sum(axis=0), psumsq[:, 0, :].sum(axis=0)


def _bn_apply_relu(raw, scale_row, shift_row, out_dtype):
    m, c = raw.shape
    tm = _pick_tile(m)
    g = m // tm
    return pl.pallas_call(
        _bn_apply_relu_kernel,
        grid=(g,),
        in_specs=[
            pl.BlockSpec((tm, c), lambda i: (i, 0)),
            pl.BlockSpec((1, c), lambda i: (0, 0)),
            pl.BlockSpec((1, c), lambda i: (0, 0)),
        ],
        out_specs=pl.BlockSpec((tm, c), lambda i: (i, 0)),
        out_shape=jax.ShapeDtypeStruct((m, c), out_dtype),
        compiler_params=pltpu.CompilerParams(
            dimension_semantics=("parallel",),
            vmem_limit_bytes=VMEM_LIMIT,
        ),
    )(raw, scale_row, shift_row)


def _fold_bn(col_sum, col_sumsq, count, gamma, beta):
    """Fold training-mode BN (biased variance) into per-column scale/shift."""
    mean = col_sum / count
    var = col_sumsq / count - mean * mean
    inv_std = lax.rsqrt(var + EPS)
    scale = gamma * inv_std
    shift = beta - mean * scale
    return scale, shift


def _im2col(z_nhwc, ksize, padding):
    """[N,H,W,C] -> [N*Ho*Wo, K*K*C] patch matrix (columns ordered kh, kw, c)."""
    n, h, w, c = z_nhwc.shape
    ho = h + 2 * padding - ksize + 1
    wo = w + 2 * padding - ksize + 1
    zp = jnp.pad(z_nhwc, ((0, 0), (padding, padding), (padding, padding), (0, 0)))
    cols = [zp[:, kh:kh + ho, kw:kw + wo, :]
            for kh in range(ksize) for kw in range(ksize)]
    return jnp.concatenate(cols, axis=-1).reshape(n * ho * wo, ksize * ksize * c), ho, wo


@partial(jax.jit, static_argnames=("scale", "padding"))
def up_layer_forward(x_nchw, c_nchw, params, *, scale, padding):
    """Pallas implementation of UpLayer.forward. Inputs/outputs are NCHW (PyTorch)."""
    s, p = scale, padding
    x = jnp.transpose(x_nchw, (0, 2, 3, 1))   # NHWC
    c = jnp.transpose(c_nchw, (0, 2, 3, 1))   # NHWC
    n, h, w, cin = x.shape
    cpart = params["up_b"].shape[0]
    sscp = s * s * cpart

    # --- ConvTranspose2d(kernel=stride=s) as lane-dense matmul + bias + BN0 stats ---
    cin_p = _round_up(cin, LANES)
    up_p = _round_up(sscp, LANES)
    x2d = _pad_last(x.reshape(n * h * w, cin), cin_p).astype(jnp.bfloat16)
    # torch weight (Cin, Cpart, s, s) -> (Cin, s, s, Cpart) -> (Cin, s*s*Cpart)
    w_up = jnp.transpose(params["up_w"], (0, 2, 3, 1)).reshape(cin, sscp)
    w_up = _pad_to(w_up, (cin_p, up_p)).astype(jnp.bfloat16)
    b_up = _pad_last(jnp.tile(params["up_b"], s * s), up_p).reshape(1, up_p)
    b_up = b_up.astype(jnp.float32)

    raw_up, col_sum, col_sumsq = _matmul_bias_stats(x2d, w_up, b_up)

    # Fold the per-column stats (column order = (p, q, cpart)) into per-channel BN0.
    ch_sum = col_sum[:sscp].reshape(s * s, cpart).sum(axis=0)
    ch_sumsq = col_sumsq[:sscp].reshape(s * s, cpart).sum(axis=0)
    sc0, sh0 = _fold_bn(ch_sum, ch_sumsq, n * h * w * s * s,
                        params["bn0_g"], params["bn0_b"])
    scale_cols = _pad_last(jnp.tile(sc0, s * s), up_p).reshape(1, up_p)
    shift_cols = _pad_last(jnp.tile(sh0, s * s), up_p).reshape(1, up_p)

    # --- BN0 normalize + ReLU (still in the pre-pixel-shuffle, lane-dense layout) ---
    up_norm = _bn_apply_relu(raw_up, scale_cols, shift_cols, jnp.bfloat16)

    # --- pixel-shuffle + channel concat (pure layout glue) --------------------------
    # TODO(synk): could be folded into the kernel via an output index_map; left as
    # XLA layout glue since it carries no compute.
    hs, ws = h * s, w * s
    up = (up_norm[:, :sscp]
          .reshape(n, h, w, s, s, cpart)
          .transpose(0, 1, 3, 2, 4, 5)
          .reshape(n, hs, ws, cpart))
    z = jnp.concatenate([c.astype(jnp.bfloat16), up], axis=-1)
    cout = z.shape[-1]
    cp = _round_up(cout, LANES)
    z = _pad_last(z, cp)                       # lane-dense channels
    hh, ww = hs, ws

    # --- cross convs: im2col -> (matmul+bias+stats) kernel -> (BN+ReLU) kernel ------
    for i in range(len(params["cross_w"])):
        wt = params["cross_w"][i]              # (Cout, Cin, K, K)
        k = wt.shape[2]
        w_hwio = jnp.transpose(wt, (2, 3, 1, 0))                  # (K,K,Cin,Cout)
        w_mat = _pad_to(w_hwio, (k, k, cp, cp)).reshape(k * k * cp, cp)
        w_mat = w_mat.astype(jnp.bfloat16)
        b_row = _pad_last(params["cross_b"][i], cp).reshape(1, cp).astype(jnp.float32)

        patches, ho, wo = _im2col(z, k, p)     # [M, K*K*cp] bf16
        raw, col_sum, col_sumsq = _matmul_bias_stats(patches, w_mat, b_row)

        g_pad = _pad_last(params["bn_g"][i], cp)
        be_pad = _pad_last(params["bn_b"][i], cp)
        sc, sh = _fold_bn(col_sum, col_sumsq, n * ho * wo, g_pad, be_pad)
        z2d = _bn_apply_relu(raw, sc.reshape(1, cp), sh.reshape(1, cp), jnp.bfloat16)
        z = z2d.reshape(n, ho, wo, cp)
        hh, ww = ho, wo

    out = z[..., :cout].astype(jnp.float32)
    return jnp.transpose(out, (0, 3, 1, 2))    # back to NCHW


# ----------------------------------------------------------------------------- reference

def _bn_relu_ref(x_nhwc, gamma, beta):
    mean = x_nhwc.mean(axis=(0, 1, 2), keepdims=True)
    var = ((x_nhwc - mean) ** 2).mean(axis=(0, 1, 2), keepdims=True)
    return jnp.maximum((x_nhwc - mean) / jnp.sqrt(var + EPS) * gamma + beta, 0.0)


def up_layer_ref(x_nchw, c_nchw, params, scale, padding):
    """Pure-JAX reference (no Pallas) mirroring the torch forward."""
    s, p = scale, padding
    x = jnp.transpose(x_nchw, (0, 2, 3, 1))
    c = jnp.transpose(c_nchw, (0, 2, 3, 1))
    n, h, w, _ = x.shape
    cpart = params["up_b"].shape[0]

    y6 = jnp.einsum("nhwi,iopq->nhwpqo", x, params["up_w"]) + params["up_b"]
    up = y6.transpose(0, 1, 3, 2, 4, 5).reshape(n, h * s, w * s, cpart)
    up = _bn_relu_ref(up, params["bn0_g"], params["bn0_b"])
    z = jnp.concatenate([c, up], axis=-1)

    for i in range(len(params["cross_w"])):
        w_hwio = jnp.transpose(params["cross_w"][i], (2, 3, 1, 0))
        z = (
            lax.conv_general_dilated(
                z, w_hwio, (1, 1), [(p, p), (p, p)],
                dimension_numbers=("NHWC", "HWIO", "NHWC"),
            )
            + params["cross_b"][i]
        )
        z = _bn_relu_ref(z, params["bn_g"][i], params["bn_b"][i])
    return jnp.transpose(z, (0, 3, 1, 2))


# ----------------------------------------------------------------------------- main

if __name__ == "__main__":
    # Module hyperparameters (small, consistent with the torch module).
    in_channels = 8
    concat_channels = 4
    out_channels = 8
    kernel_size = 3
    scale = 2
    padding = 1
    cross_convs = 2
    partial_out = out_channels - concat_channels  # 4

    N, H, W = 2, 8, 8  # x spatial; c spatial is H*scale, W*scale

    key = jax.random.PRNGKey(0)
    keys = jax.random.split(key, 8)

    x = jax.random.normal(keys[0], (N, in_channels, H, W), jnp.float32)          # NCHW
    c = jax.random.normal(keys[1], (N, concat_channels, H * scale, W * scale),
                          jnp.float32)                                           # NCHW

    params = {
        # ConvTranspose2d weight: (Cin, Cpart, s, s); bias: (Cpart,)
        "up_w": 0.1 * jax.random.normal(keys[2], (in_channels, partial_out, scale, scale),
                                        jnp.float32),
        "up_b": 0.1 * jax.random.normal(keys[3], (partial_out,), jnp.float32),
        # BatchNorm2d(partial_out) fresh init
        "bn0_g": jnp.ones((partial_out,), jnp.float32),
        "bn0_b": jnp.zeros((partial_out,), jnp.float32),
        # Conv2d weights: (Cout, Cin, K, K); biases: (Cout,)
        "cross_w": [
            0.1 * jax.random.normal(keys[4 + i],
                                    (out_channels, out_channels, kernel_size, kernel_size),
                                    jnp.float32)
            for i in range(cross_convs)
        ],
        "cross_b": [
            0.1 * jax.random.normal(keys[6 + i], (out_channels,), jnp.float32)
            for i in range(cross_convs)
        ],
        "bn_g": [jnp.ones((out_channels,), jnp.float32) for _ in range(cross_convs)],
        "bn_b": [jnp.zeros((out_channels,), jnp.float32) for _ in range(cross_convs)],
    }

    out = jax.block_until_ready(
        up_layer_forward(x, c, params, scale=scale, padding=padding))
    ref = jax.block_until_ready(up_layer_ref(x, c, params, scale, padding))

    assert out.shape == (N, out_channels, H * scale, W * scale), out.shape
    assert jnp.allclose(out, ref, atol=3e-2, rtol=3e-2), float(jnp.max(jnp.abs(out - ref)))

    print("KERNEL_OK")
</pallas_src>

<mosaic_0001>
module attributes {stable_mosaic.version = 11 : i64} {
  func.func @_matmul_bias_stats_kernel(%arg0: i32, %arg1: memref<128x128xbf16, #tpu.memory_space<vmem>>, %arg2: memref<128x128xbf16, #tpu.memory_space<vmem>>, %arg3: memref<1x128xf32, #tpu.memory_space<vmem>>, %arg4: memref<128x128xf32, #tpu.memory_space<vmem>>, %arg5: memref<1x8x128xf32, #tpu.memory_space<vmem>>, %arg6: memref<1x8x128xf32, #tpu.memory_space<vmem>>) attributes {dimension_semantics = [#tpu.dimension_semantics<parallel>], iteration_bounds = array<i64: 1>, scalar_prefetch = 0 : i64, scratch_operands = 0 : i64, tpu.core_type = #tpu.core_type<tc>, window_params = [{transform_indices = @transform_0, window_bounds = array<i64: 128, 128>}, {pipeline_mode = #tpu.pipeline_mode<synchronous>, transform_indices = @transform_1, window_bounds = array<i64: 128, 128>}, {pipeline_mode = #tpu.pipeline_mode<synchronous>, transform_indices = @transform_2, window_bounds = array<i64: 1, 128>}, {transform_indices = @transform_3, window_bounds = array<i64: 128, 128>}, {transform_indices = @transform_4, window_bounds = array<i64: 1, 8, 128>}, {transform_indices = @transform_5, window_bounds = array<i64: 1, 8, 128>}]} {
    %c0 = arith.constant 0 : index
    %c0_0 = arith.constant 0 : index
    %0 = vector.load %arg1[%c0, %c0_0] : memref<128x128xbf16, #tpu.memory_space<vmem>>, vector<128x128xbf16>
    %c0_1 = arith.constant 0 : index
    %c0_2 = arith.constant 0 : index
    %1 = vector.load %arg2[%c0_1, %c0_2] : memref<128x128xbf16, #tpu.memory_space<vmem>>, vector<128x128xbf16>
    %cst = arith.constant dense<0.000000e+00> : vector<128x128xf32>
    %2 = tpu.matmul %0, %1, %cst {dimension_numbers = #tpu.dot_dimension_numbers<[1], [0], [0], [1], [0, 0, 1, 1], [], []>} : vector<128x128xbf16>, vector<128x128xbf16>, vector<128x128xf32> -> vector<128x128xf32>
    %c0_3 = arith.constant 0 : index
    %c0_4 = arith.constant 0 : index
    %3 = vector.load %arg3[%c0_3, %c0_4] : memref<1x128xf32, #tpu.memory_space<vmem>>, vector<1x128xf32>
    %4 = vector.broadcast %3 : vector<1x128xf32> to vector<128x128xf32>
    %5 = arith.addf %2, %4 : vector<128x128xf32>
    %c0_5 = arith.constant 0 : index
    %c0_6 = arith.constant 0 : index
    %6 = vector.load %arg4[%c0_5, %c0_6] : memref<128x128xf32, #tpu.memory_space<vmem>>, vector<128x128xf32>
    tpu.vector_store %arg4[%c0_5, %c0_6], %5 {strides = array<i32>} : memref<128x128xf32, #tpu.memory_space<vmem>>, vector<128x128xf32>,
    %cst_7 = arith.constant dense<0.000000e+00> : vector<128xf32>
    %7 = vector.multi_reduction <add>, %5, %cst_7 [0] : vector<128x128xf32> to vector<128xf32>
    %8 = vector.shape_cast %7 : vector<128xf32> to vector<1x128xf32>
    %9 = arith.mulf %5, %5 : vector<128x128xf32>
    %cst_8 = arith.constant dense<0.000000e+00> : vector<128xf32>
    %10 = vector.multi_reduction <add>, %9, %cst_8 [0] : vector<128x128xf32> to vector<128xf32>
    %11 = vector.shape_cast %10 : vector<128xf32> to vector<1x128xf32>
    %12 = vector.shape_cast %8 : vector<1x128xf32> to vector<1x1x128xf32>
    %13 = vector.shape_cast %12 : vector<1x1x128xf32> to vector<1x1x128xf32>
    %14 = vector.broadcast %13 : vector<1x1x128xf32> to vector<1x8x128xf32>
    %c0_9 = arith.constant 0 : index
    %c0_10 = arith.constant 0 : index
    %c0_11 = arith.constant 0 : index
    %15 = vector.load %arg5[%c0_9, %c0_10, %c0_11] : memref<1x8x128xf32, #tpu.memory_space<vmem>>, vector<1x8x128xf32>
    tpu.vector_store %arg5[%c0_9, %c0_10, %c0_11], %14 {strides = array<i32>} : memref<1x8x128xf32, #tpu.memory_space<vmem>>, vector<1x8x128xf32>,
    %16 = vector.shape_cast %11 : vector<1x128xf32> to vector<1x1x128xf32>
    %17 = vector.shape_cast %16 : vector<1x1x128xf32> to vector<1x1x128xf32>
    %18 = vector.broadcast %17 : vector<1x1x128xf32> to vector<1x8x128xf32>
    %c0_12 = arith.constant 0 : index
    %c0_13 = arith.constant 0 : index
    %c0_14 = arith.constant 0 : index
    %19 = vector.load %arg6[%c0_12, %c0_13, %c0_14] : memref<1x8x128xf32, #tpu.memory_space<vmem>>, vector<1x8x128xf32>
    tpu.vector_store %arg6[%c0_12, %c0_13, %c0_14], %18 {strides = array<i32>} : memref<1x8x128xf32, #tpu.memory_space<vmem>>, vector<1x8x128xf32>,
    return
  }
  func.func @transform_0(%arg0: i32) -> (i32, i32) {
    %c0_i32 = arith.constant 0 : i32
    %c0_i32_0 = arith.constant 0 : i32
    return %arg0, %c0_i32 : i32, i32
  }
  func.func @transform_1(%arg0: i32) -> (i32, i32) {
    %c0_i32 = arith.constant 0 : i32
    %c0_i32_0 = arith.constant 0 : i32
    %c0_i32_1 = arith.constant 0 : i32
    return %c0_i32, %c0_i32_0 : i32, i32
  }
  func.func @transform_2(%arg0: i32) -> (i32, i32) {
    %c0_i32 = arith.constant 0 : i32
    %c0_i32_0 = arith.constant 0 : i32
    %c0_i32_1 = arith.constant 0 : i32
    return %c0_i32, %c0_i32_0 : i32, i32
  }
  func.func @transform_3(%arg0: i32) -> (i32, i32) {
    %c0_i32 = arith.constant 0 : i32
    %c0_i32_0 = arith.constant 0 : i32
    return %arg0, %c0_i32 : i32, i32
  }
  func.func @transform_4(%arg0: i32) -> (i32, i32, i32) {
    %c0_i32 = arith.constant 0 : i32
    %c0_i32_0 = arith.constant 0 : i32
    %c0_i32_1 = arith.constant 0 : i32
    return %arg0, %c0_i32, %c0_i32_0 : i32, i32, i32
  }
  func.func @transform_5(%arg0: i32) -> (i32, i32, i32) {
    %c0_i32 = arith.constant 0 : i32
    %c0_i32_0 = arith.constant 0 : i32
    %c0_i32_1 = arith.constant 0 : i32
    return %arg0, %c0_i32, %c0_i32_0 : i32, i32, i32
  }
}

module attributes {stable_mosaic.version = 11 : i64} {
  func.func @_bn_apply_relu_kernel(%arg0: i32, %arg1: memref<128x128xf32, #tpu.memory_space<vmem>>, %arg2: memref<1x128xf32, #tpu.memory_space<vmem>>, %arg3: memref<1x128xf32, #tpu.memory_space<vmem>>, %arg4: memref<128x128xbf16, #tpu.memory_space<vmem>>) attributes {dimension_semantics = [#tpu.dimension_semantics<parallel>], iteration_bounds = array<i64: 1>, scalar_prefetch = 0 : i64, scratch_operands = 0 : i64, tpu.core_type = #tpu.core_type<tc>, window_params = [{transform_indices = @transform_0, window_bounds = array<i64: 128, 128>}, {pipeline_mode = #tpu.pipeline_mode<synchronous>, transform_indices = @transform_1, window_bounds = array<i64: 1, 128>}, {pipeline_mode = #tpu.pipeline_mode<synchronous>, transform_indices = @transform_2, window_bounds = array<i64: 1, 128>}, {transform_indices = @transform_3, window_bounds = array<i64: 128, 128>}]} {
    %c0 = arith.constant 0 : index
    %c0_0 = arith.constant 0 : index
    %0 = vector.load %arg1[%c0, %c0_0] : memref<128x128xf32, #tpu.memory_space<vmem>>, vector<128x128xf32>
    %c0_1 = arith.constant 0 : index
    %c0_2 = arith.constant 0 : index
    %1 = vector.load %arg2[%c0_1, %c0_2] : memref<1x128xf32, #tpu.memory_space<vmem>>, vector<1x128xf32>
    %2 = vector.broadcast %1 : vector<1x128xf32> to vector<128x128xf32>
    %3 = arith.mulf %0, %2 : vector<128x128xf32>
    %c0_3 = arith.constant 0 : index
    %c0_4 = arith.constant 0 : index
    %4 = vector.load %arg3[%c0_3, %c0_4] : memref<1x128xf32, #tpu.memory_space<vmem>>, vector<1x128xf32>
    %5 = vector.broadcast %4 : vector<1x128xf32> to vector<128x128xf32>
    %6 = arith.addf %3, %5 : vector<128x128xf32>
    %cst = arith.constant 0.000000e+00 : f32
    %7 = vector.broadcast %cst : f32 to vector<128x128xf32>
    %8 = arith.maximumf %6, %7 : vector<128x128xf32>
    %9 = arith.truncf %8 : vector<128x128xf32> to vector<128x128xbf16>
    %c0_5 = arith.constant 0 : index
    %c0_6 = arith.constant 0 : index
    %10 = vector.load %arg4[%c0_5, %c0_6] : memref<128x128xbf16, #tpu.memory_space<vmem>>, vector<128x128xbf16>
    tpu.vector_store %arg4[%c0_5, %c0_6], %9 {strides = array<i32>} : memref<128x128xbf16, #tpu.memory_space<vmem>>, vector<128x128xbf16>,
    return
  }
  func.func @transform_0(%arg0: i32) -> (i32, i32) {
    %c0_i32 = arith.constant 0 : i32
    %c0_i32_0 = arith.constant 0 : i32
    return %arg0, %c0_i32 : i32, i32
  }
  func.func @transform_1(%arg0: i32) -> (i32, i32) {
    %c0_i32 = arith.constant 0 : i32
    %c0_i32_0 = arith.constant 0 : i32
    %c0_i32_1 = arith.constant 0 : i32
    return %c0_i32, %c0_i32_0 : i32, i32
  }
  func.func @transform_2(%arg0: i32) -> (i32, i32) {
    %c0_i32 = arith.constant 0 : i32
    %c0_i32_0 = arith.constant 0 : i32
    %c0_i32_1 = arith.constant 0 : i32
    return %c0_i32, %c0_i32_0 : i32, i32
  }
  func.func @transform_3(%arg0: i32) -> (i32, i32) {
    %c0_i32 = arith.constant 0 : i32
    %c0_i32_0 = arith.constant 0 : i32
    return %arg0, %c0_i32 : i32, i32
  }
}

module attributes {stable_mosaic.version = 11 : i64} {
  func.func @_bn_apply_relu_kernel(%arg0: i32, %arg1: memref<256x128xf32, #tpu.memory_space<vmem>>, %arg2: memref<1x128xf32, #tpu.memory_space<vmem>>, %arg3: memref<1x128xf32, #tpu.memory_space<vmem>>, %arg4: memref<256x128xbf16, #tpu.memory_space<vmem>>) attributes {dimension_semantics = [#tpu.dimension_semantics<parallel>], iteration_bounds = array<i64: 2>, scalar_prefetch = 0 : i64, scratch_operands = 0 : i64, tpu.core_type = #tpu.core_type<tc>, window_params = [{transform_indices = @transform_0, window_bounds = array<i64: 256, 128>}, {pipeline_mode = #tpu.pipeline_mode<synchronous>, transform_indices = @transform_1, window_bounds = array<i64: 1, 128>}, {pipeline_mode = #tpu.pipeline_mode<synchronous>, transform_indices = @transform_2, window_bounds = array<i64: 1, 128>}, {transform_indices = @transform_3, window_bounds = array<i64: 256, 128>}]} {
    %c0 = arith.constant 0 : index
    %c0_0 = arith.constant 0 : index
    %0 = vector.load %arg1[%c0, %c0_0] : memref<256x128xf32, #tpu.memory_space<vmem>>, vector<256x128xf32>
    %c0_1 = arith.constant 0 : index
    %c0_2 = arith.constant 0 : index
    %1 = vector.load %arg2[%c0_1, %c0_2] : memref<1x128xf32, #tpu.memory_space<vmem>>, vector<1x128xf32>
    %2 = vector.broadcast %1 : vector<1x128xf32> to vector<256x128xf32>
    %3 = arith.mulf %0, %2 : vector<256x128xf32>
    %c0_3 = arith.constant 0 : index
    %c0_4 = arith.constant 0 : index
    %4 = vector.load %arg3[%c0_3, %c0_4] : memref<1x128xf32, #tpu.memory_space<vmem>>, vector<1x128xf32>
    %5 = vector.broadcast %4 : vector<1x128xf32> to vector<256x128xf32>
    %6 = arith.addf %3, %5 : vector<256x128xf32>
    %cst = arith.constant 0.000000e+00 : f32
    %7 = vector.broadcast %cst : f32 to vector<256x128xf32>
    %8 = arith.maximumf %6, %7 : vector<256x128xf32>
    %9 = arith.truncf %8 : vector<256x128xf32> to vector<256x128xbf16>
    %c0_5 = arith.constant 0 : index
    %c0_6 = arith.constant 0 : index
    %10 = vector.load %arg4[%c0_5, %c0_6] : memref<256x128xbf16, #tpu.memory_space<vmem>>, vector<256x128xbf16>
    tpu.vector_store %arg4[%c0_5, %c0_6], %9 {strides = array<i32>} : memref<256x128xbf16, #tpu.memory_space<vmem>>, vector<256x128xbf16>,
    return
  }
  func.func @transform_0(%arg0: i32) -> (i32, i32) {
    %c0_i32 = arith.constant 0 : i32
    %c0_i32_0 = arith.constant 0 : i32
    return %arg0, %c0_i32 : i32, i32
  }
  func.func @transform_1(%arg0: i32) -> (i32, i32) {
    %c0_i32 = arith.constant 0 : i32
    %c0_i32_0 = arith.constant 0 : i32
    %c0_i32_1 = arith.constant 0 : i32
    return %c0_i32, %c0_i32_0 : i32, i32
  }
  func.func @transform_2(%arg0: i32) -> (i32, i32) {
    %c0_i32 = arith.constant 0 : i32
    %c0_i32_0 = arith.constant 0 : i32
    %c0_i32_1 = arith.constant 0 : i32
    return %c0_i32, %c0_i32_0 : i32, i32
  }
  func.func @transform_3(%arg0: i32) -> (i32, i32) {
    %c0_i32 = arith.constant 0 : i32
    %c0_i32_0 = arith.constant 0 : i32
    return %arg0, %c0_i32 : i32, i32
  }
}

module attributes {stable_mosaic.version = 11 : i64} {
  func.func @_matmul_bias_stats_kernel(%arg0: i32, %arg1: memref<256x1152xbf16, #tpu.memory_space<vmem>>, %arg2: memref<1152x128xbf16, #tpu.memory_space<vmem>>, %arg3: memref<1x128xf32, #tpu.memory_space<vmem>>, %arg4: memref<256x128xf32, #tpu.memory_space<vmem>>, %arg5: memref<1x8x128xf32, #tpu.memory_space<vmem>>, %arg6: memref<1x8x128xf32, #tpu.memory_space<vmem>>) attributes {dimension_semantics = [#tpu.dimension_semantics<parallel>], iteration_bounds = array<i64: 2>, scalar_prefetch = 0 : i64, scratch_operands = 0 : i64, tpu.core_type = #tpu.core_type<tc>, window_params = [{transform_indices = @transform_0, window_bounds = array<i64: 256, 1152>}, {pipeline_mode = #tpu.pipeline_mode<synchronous>, transform_indices = @transform_1, window_bounds = array<i64: 1152, 128>}, {pipeline_mode = #tpu.pipeline_mode<synchronous>, transform_indices = @transform_2, window_bounds = array<i64: 1, 128>}, {transform_indices = @transform_3, window_bounds = array<i64: 256, 128>}, {transform_indices = @transform_4, window_bounds = array<i64: 1, 8, 128>}, {transform_indices = @transform_5, window_bounds = array<i64: 1, 8, 128>}]} {
    %c0 = arith.constant 0 : index
    %c0_0 = arith.constant 0 : index
    %0 = vector.load %arg1[%c0, %c0_0] : memref<256x1152xbf16, #tpu.memory_space<vmem>>, vector<256x1152xbf16>
    %c0_1 = arith.constant 0 : index
    %c0_2 = arith.constant 0 : index
    %1 = vector.load %arg2[%c0_1, %c0_2] : memref<1152x128xbf16, #tpu.memory_space<vmem>>, vector<1152x128xbf16>
    %cst = arith.constant dense<0.000000e+00> : vector<256x128xf32>
    %2 = tpu.matmul %0, %1, %cst {dimension_numbers = #tpu.dot_dimension_numbers<[1], [0], [0], [1], [0, 0, 1, 1], [], []>} : vector<256x1152xbf16>, vector<1152x128xbf16>, vector<256x128xf32> -> vector<256x128xf32>
    %c0_3 = arith.constant 0 : index
    %c0_4 = arith.constant 0 : index
    %3 = vector.load %arg3[%c0_3, %c0_4] : memref<1x128xf32, #tpu.memory_space<vmem>>, vector<1x128xf32>
    %4 = vector.broadcast %3 : vector<1x128xf32> to vector<256x128xf32>
    %5 = arith.addf %2, %4 : vector<256x128xf32>
    %c0_5 = arith.constant 0 : index
    %c0_6 = arith.constant 0 : index
    %6 = vector.load %arg4[%c0_5, %c0_6] : memref<256x128xf32, #tpu.memory_space<vmem>>, vector<256x128xf32>
    tpu.vector_store %arg4[%c0_5, %c0_6], %5 {strides = array<i32>} : memref<256x128xf32, #tpu.memory_space<vmem>>, vector<256x128xf32>,
    %cst_7 = arith.constant dense<0.000000e+00> : vector<128xf32>
    %7 = vector.multi_reduction <add>, %5, %cst_7 [0] : vector<256x128xf32> to vector<128xf32>
    %8 = vector.shape_cast %7 : vector<128xf32> to vector<1x128xf32>
    %9 = arith.mulf %5, %5 : vector<256x128xf32>
    %cst_8 = arith.constant dense<0.000000e+00> : vector<128xf32>
    %10 = vector.multi_reduction <add>, %9, %cst_8 [0] : vector<256x128xf32> to vector<128xf32>
    %11 = vector.shape_cast %10 : vector<128xf32> to vector<1x128xf32>
    %12 = vector.shape_cast %8 : vector<1x128xf32> to vector<1x1x128xf32>
    %13 = vector.shape_cast %12 : vector<1x1x128xf32> to vector<1x1x128xf32>
    %14 = vector.broadcast %13 : vector<1x1x128xf32> to vector<1x8x128xf32>
    %c0_9 = arith.constant 0 : index
    %c0_10 = arith.constant 0 : index
    %c0_11 = arith.constant 0 : index
    %15 = vector.load %arg5[%c0_9, %c0_10, %c0_11] : memref<1x8x128xf32, #tpu.memory_space<vmem>>, vector<1x8x128xf32>
    tpu.vector_store %arg5[%c0_9, %c0_10, %c0_11], %14 {strides = array<i32>} : memref<1x8x128xf32, #tpu.memory_space<vmem>>, vector<1x8x128xf32>,
    %16 = vector.shape_cast %11 : vector<1x128xf32> to vector<1x1x128xf32>
    %17 = vector.shape_cast %16 : vector<1x1x128xf32> to vector<1x1x128xf32>
    %18 = vector.broadcast %17 : vector<1x1x128xf32> to vector<1x8x128xf32>
    %c0_12 = arith.constant 0 : index
    %c0_13 = arith.constant 0 : index
    %c0_14 = arith.constant 0 : index
    %19 = vector.load %arg6[%c0_12, %c0_13, %c0_14] : memref<1x8x128xf32, #tpu.memory_space<vmem>>, vector<1x8x128xf32>
    tpu.vector_store %arg6[%c0_12, %c0_13, %c0_14], %18 {strides = array<i32>} : memref<1x8x128xf32, #tpu.memory_space<vmem>>, vector<1x8x128xf32>,
    return
  }
  func.func @transform_0(%arg0: i32) -> (i32, i32) {
    %c0_i32 = arith.constant 0 : i32
    %c0_i32_0 = arith.constant 0 : i32
    return %arg0, %c0_i32 : i32, i32
  }
  func.func @transform_1(%arg0: i32) -> (i32, i32) {
    %c0_i32 = arith.constant 0 : i32
    %c0_i32_0 = arith.constant 0 : i32
    %c0_i32_1 = arith.constant 0 : i32
    return %c0_i32, %c0_i32_0 : i32, i32
  }
  func.func @transform_2(%arg0: i32) -> (i32, i32) {
    %c0_i32 = arith.constant 0 : i32
    %c0_i32_0 = arith.constant 0 : i32
    %c0_i32_1 = arith.constant 0 : i32
    return %c0_i32, %c0_i32_0 : i32, i32
  }
  func.func @transform_3(%arg0: i32) -> (i32, i32) {
    %c0_i32 = arith.constant 0 : i32
    %c0_i32_0 = arith.constant 0 : i32
    return %arg0, %c0_i32 : i32, i32
  }
  func.func @transform_4(%arg0: i32) -> (i32, i32, i32) {
    %c0_i32 = arith.constant 0 : i32
    %c0_i32_0 = arith.constant 0 : i32
    %c0_i32_1 = arith.constant 0 : i32
    return %arg0, %c0_i32, %c0_i32_0 : i32, i32, i32
  }
  func.func @transform_5(%arg0: i32) -> (i32, i32, i32) {
    %c0_i32 = arith.constant 0 : i32
    %c0_i32_0 = arith.constant 0 : i32
    %c0_i32_1 = arith.constant 0 : i32
    return %arg0, %c0_i32, %c0_i32_0 : i32, i32, i32
  }
}

</mosaic_0001>

<llo_original>
// kernel: tile.18
$region0: #{tile.18}
  #allocation2 [shape = 's32[1]{0}', space=sflag, size = 0x4, scoped, tag = 'scoped memory for tile.18']
  %s0 = inlined_call_operand.hbm [shape: f32[4], index: 0, kind: input, shape index: {}]
  %s1 = inlined_call_operand.vmem [shape: f32[4,4], index: 1, kind: output, shape index: {}]
  $region1: #{tile.18} parent=0
    #allocation0 [shape = 'u8[512]{0}', space=vmem, size = 0x400, scoped, tag = 'operand span for operand 0']
    #allocation1 [shape = 's32[1]{0}', space=sflag, size = 0x4, scoped, tag = 'scoped memory for tile.18']
    %2 = vsyncpa [#allocation1], 0
    // Predicated region
    $region2: #{tile.18} parent=1 // pred_check
      _
    $region3: #{tile.18} parent=1 // pred_check_branch
      %4 = sbr.rel (0) target = $region5
    $region4: #{tile.18} parent=1 // pred_region
      %s6 = ssub.s32 16, 16
      %7 = vsyncadd [#allocation1], %s6
      %s9 = sshll.u32 [#allocation0], 4
      %s10 = int_to_ptr.vmem [resolvable:$true] %s9
      %12 = dma.hbm_to_vmem [thread:$0]  %s0, 16, %s10, [#allocation1]
    $region5: #{tile.18} parent=1 // pred_fallthru
      _
    // Predicated region
    $region6: #{tile.18} parent=1 // pred_check
      _
    $region7: #{tile.18} parent=1 // pred_check_branch
      %14 = sbr.rel (0) target = $region9
    $region8: #{tile.18} parent=1 // pred_region
      %15 = dma.done [#allocation1], 16
    $region9: #{tile.18} parent=1 // pred_fallthru
      _
    %v16 = vld [vmem:[#allocation0] ss:$0 sm:$0xff]
    %17 = vst [vmem:[%s1] sm:$0xf] %v16
    %18 = vsyncpa [#allocation1], 1

// kernel: tile.19
$region0: #{tile.19}
  %s0 = inlined_call_operand.vmem [shape: f32[4,4], index: 0, kind: input, shape index: {}]
  %s1 = inlined_call_operand.vmem [shape: f32[16], index: 1, kind: output, shape index: {}]
  $region1: #{tile.19} parent=0
    #allocation0 [shape = 'u8[4096]{0}', space=vmem, size = 0x1000, scoped, tag = 'scoped mem for output reshape']
    #allocation1 [shape = 'u8[4096]{0}', space=vmem, size = 0x1000, scoped, tag = 'scoped mem for input reshape']
    %s3 = sshllo.u32 0, 4
    %v4 = vld [vmem:[%s0] sm:%s3]
    %5 = vst [vmem:[#allocation1] sm:%s3] %v4
    %v6 = vld [vmem:[#allocation1] sm:$0x1]
    %vm7 = vcmask 31744
    %8 = vst.msk [vmem:[#allocation0] sm:$0x1] %vm7, %v6
    %s9 = scalar_lea.vmem [#allocation1], 3
    %v10 = vld [vmem:[%s9] sm:$0x1]
    %11 = vrot.lane.b32.xlu0 %v10, 12
    %v12 = vpop.permute.xlu0 %11
    %vm13 = vcmask 130144
    %14 = vst.msk [vmem:[#allocation0] sm:$0x1] %vm13, %v12
    %s15 = scalar_lea.vmem [#allocation1], 2
    %v16 = vld [vmem:[%s15] sm:$0x1]
    %17 = vrot.lane.b32.xlu0 %v16, 8
    %v18 = vpop.permute.xlu0 %17
    %vm19 = vcmask 97344
    %20 = vst.msk [vmem:[#allocation0] sm:$0x1] %vm19, %v18
    %s21 = scalar_lea.vmem [#allocation1], 1
    %v22 = vld [vmem:[%s21] sm:$0x1]
    %23 = vrot.lane.b32.xlu0 %v22, 4
    %v24 = vpop.permute.xlu0 %23
    %vm25 = vcmask 64544
    %26 = vst.msk [vmem:[#allocation0] sm:$0x1] %vm25, %v24
    %s28 = sshllo.u32 0, 1
    %v30 = vld [vmem:[#allocation0] sm:%s28]
    %s31 = sshllo.u32 0, 1
    %32 = vst [vmem:[%s1] sm:%s31] %v30

// kernel: tile.28
$region0: #{tile.28}
  #allocation0 [shape = 's32[1]{0}', space=sflag, size = 0x4, scoped, tag = 'scoped memory for tile.28']
  %s0 = inlined_call_operand.vmem [shape: f32[4], index: 0, kind: input, shape index: {}]
  %s1 = inlined_call_operand.vmem [shape: f32[4,4], index: 1, kind: output, shape index: {}]
  // Predicated region
  $region2: #{tile.28} parent=0 // pred_check
    _
  $region3: #{tile.28} parent=0 // pred_check_branch
    %3 = sbr.rel (0) target = $region5
  $region4: #{tile.28} parent=0 // pred_region
    _
  $region5: #{tile.28} parent=0 // pred_fallthru
    _
  %v4 = vld [vmem:[%s0] ss:$0 sm:$0xff]
  %5 = vst [vmem:[%s1] sm:$0xf] %v4

// kernel: up_layer_forward.7
$region0: #{up_layer_forward.7}
  #allocation0 [shape = 'u32[]', space=smem, size = 0x4, offset = 0x4, fixed_abs, tag = 'smem constant byte address 0x4 - core index']
  #allocation1 [shape = 'u32[144,128]{1,0:T(1,128)}', space=vmem, size = 0x12000, scoped, tag = 'internal scratch']
  %s0 = inlined_call_operand.vmem [shape: f32[128,128], index: 0, kind: input, shape index: {}]
  %s1 = inlined_call_operand.vmem [shape: f32[1,128], index: 1, kind: input, shape index: {}]
  %s2 = inlined_call_operand.vmem [shape: f32[1,128], index: 2, kind: input, shape index: {}]
  %s3 = inlined_call_operand.vmem [shape: bf16[128,128], index: 3, kind: output, shape index: {}]
  %s4 = sld [smem:[#allocation0]]
  $region22: #{up_layer_forward.7} parent=0
    _
  %s6 = ssub.s32 1, %s4
  %s7 = scalar_select 0, %s6, %s4
  // Predicated region
  $region2: #{up_layer_forward.7} parent=0 // pred_check
    _
  $region3: #{up_layer_forward.7} parent=0 // pred_check_branch
    %9 = sbr.rel (0) target = $region5
  $region4: #{up_layer_forward.7} parent=0 // pred_region
    _
  $region5: #{up_layer_forward.7} parent=0 // pred_fallthru
    _
  // Predicated region
  $region6: #{up_layer_forward.7} parent=0 // pred_check
    _
  $region7: #{up_layer_forward.7} parent=0 // pred_check_branch
    %11 = sbr.rel (0) target = $region9
  $region8: #{up_layer_forward.7} parent=0 // pred_region
    _
  $region9: #{up_layer_forward.7} parent=0 // pred_fallthru
    _
  // Predicated region
  $region10: #{up_layer_forward.7} parent=0 // pred_check
    _
  $region11: #{up_layer_forward.7} parent=0 // pred_check_branch
    %13 = sbr.rel (0) target = $region13
  $region12: #{up_layer_forward.7} parent=0 // pred_region
    _
  $region13: #{up_layer_forward.7} parent=0 // pred_fallthru
    _
  %v14 = vld [vmem:[%s0] sm:$0xff]
  %v15 = vld [vmem:[%s0 + $0x8] sm:$0xff]
  %v16 = vld [vmem:[%s0 + $0x10] sm:$0xff]
  %v17 = vld [vmem:[%s0 + $0x18] sm:$0xff]
  %v18 = vld [vmem:[%s0 + $0x20] sm:$0xff]
  %v19 = vld [vmem:[%s0 + $0x28] sm:$0xff]
  %v20 = vld [vmem:[%s0 + $0x30] sm:$0xff]
  %v21 = vld [vmem:[%s0 + $0x38] sm:$0xff]
  %v22 = vld [vmem:[%s0 + $0x40] sm:$0xff]
  %v23 = vld [vmem:[%s0 + $0x48] sm:$0xff]
  %v24 = vld [vmem:[%s0 + $0x50] sm:$0xff]
  %v25 = vld [vmem:[%s0 + $0x58] sm:$0xff]
  %v26 = vld [vmem:[%s0 + $0x60] sm:$0xff]
  %v27 = vld [vmem:[%s0 + $0x68] sm:$0xff]
  %v28 = vld [vmem:[%s0 + $0x70] sm:$0xff]
  %v29 = vld [vmem:[%s0 + $0x78] sm:$0xff]
  %v30 = vld [vmem:[%s1] sm:$0x1]
  %v32 = vlaneseq
  %v33 = vshrl.u32 %v32, 7
  %v34 = vsub.s32 0, %v33
  %v35 = vrot.slane %v30, %v34
  %v37 = vmul.f32 %v14, %v35
  %v38 = vmul.f32 %v15, %v35
  %v39 = vmul.f32 %v16, %v35
  %v40 = vmul.f32 %v17, %v35
  %v41 = vmul.f32 %v18, %v35
  %v42 = vmul.f32 %v19, %v35
  %v43 = vmul.f32 %v20, %v35
  %v44 = vmul.f32 %v21, %v35
  %v45 = vmul.f32 %v22, %v35
  %v46 = vmul.f32 %v23, %v35
  %v47 = vmul.f32 %v24, %v35
  %v48 = vmul.f32 %v25, %v35
  %v49 = vmul.f32 %v26, %v35
  %v50 = vmul.f32 %v27, %v35
  %v51 = vmul.f32 %v28, %v35
  %v52 = vmul.f32 %v29, %v35
  %v53 = vld [vmem:[%s2] sm:$0x1]
  %v55 = vlaneseq
  %v56 = vshrl.u32 %v55, 7
  %v57 = vsub.s32 0, %v56
  %v58 = vrot.slane %v53, %v57
  %v60 = vadd.f32 %v37, %v58
  %v61 = vadd.f32 %v38, %v58
  %v62 = vadd.f32 %v39, %v58
  %v63 = vadd.f32 %v40, %v58
  %v64 = vadd.f32 %v41, %v58
  %v65 = vadd.f32 %v42, %v58
  %v66 = vadd.f32 %v43, %v58
  %v67 = vadd.f32 %v44, %v58
  %v68 = vadd.f32 %v45, %v58
  %v69 = vadd.f32 %v46, %v58
  %v70 = vadd.f32 %v47, %v58
  %v71 = vadd.f32 %v48, %v58
  %v72 = vadd.f32 %v49, %v58
  %v73 = vadd.f32 %v50, %v58
  %v74 = vadd.f32 %v51, %v58
  %v75 = vadd.f32 %v52, %v58
  %v76 = vmax.f32 %v60, 0.0
  %v77 = vmax.f32 %v61, 0.0
  %v78 = vmax.f32 %v62, 0.0
  %v79 = vmax.f32 %v63, 0.0
  %v80 = vmax.f32 %v64, 0.0
  %v81 = vmax.f32 %v65, 0.0
  %v82 = vmax.f32 %v66, 0.0
  %v83 = vmax.f32 %v67, 0.0
  %v84 = vmax.f32 %v68, 0.0
  %v85 = vmax.f32 %v69, 0.0
  %v86 = vmax.f32 %v70, 0.0
  %v87 = vmax.f32 %v71, 0.0
  %v88 = vmax.f32 %v72, 0.0
  %v89 = vmax.f32 %v73, 0.0
  %v90 = vmax.f32 %v74, 0.0
  %v91 = vmax.f32 %v75, 0.0
  %v92 = vpack.c.bf16 %v77, %v76
  %v93 = vpack.c.bf16 %v79, %v78
  %v94 = vpack.c.bf16 %v81, %v80
  %v95 = vpack.c.bf16 %v83, %v82
  %v96 = vpack.c.bf16 %v85, %v84
  %v97 = vpack.c.bf16 %v87, %v86
  %v98 = vpack.c.bf16 %v89, %v88
  %v99 = vpack.c.bf16 %v91, %v90
  %v108 = vunpack.c.l.b16 %v92
  %v109 = vunpack.c.h.b16 %v92
  %v110 = vunpack.c.l.b16 %v93
  %v111 = vunpack.c.h.b16 %v93
  %v112 = vunpack.c.l.b16 %v94
  %v113 = vunpack.c.h.b16 %v94
  %v114 = vunpack.c.l.b16 %v95
  %v115 = vunpack.c.h.b16 %v95
  %v116 = vunpack.c.l.b16 %v96
  %v117 = vunpack.c.h.b16 %v96
  %v118 = vunpack.c.l.b16 %v97
  %v119 = vunpack.c.h.b16 %v97
  %v120 = vunpack.c.l.b16 %v98
  %v121 = vunpack.c.h.b16 %v98
  %v122 = vunpack.c.l.b16 %v99
  %v123 = vunpack.c.h.b16 %v99
  %v124 = vpack.c.b16 %v108, %v108
  %v125 = vpack.c.b16 %v109, %v109
  %v126 = vpack.c.b16 %v110, %v110
  %v127 = vpack.c.b16 %v111, %v111
  %v128 = vpack.c.b16 %v112, %v112
  %v129 = vpack.c.b16 %v113, %v113
  %v130 = vpack.c.b16 %v114, %v114
  %v131 = vpack.c.b16 %v115, %v115
  %v132 = vpack.c.b16 %v116, %v116
  %v133 = vpack.c.b16 %v117, %v117
  %v134 = vpack.c.b16 %v118, %v118
  %v135 = vpack.c.b16 %v119, %v119
  %v136 = vpack.c.b16 %v120, %v120
  %v137 = vpack.c.b16 %v121, %v121
  %v138 = vpack.c.b16 %v122, %v122
  %v139 = vpack.c.b16 %v123, %v123
  %156 = vst [vmem:[%s3] sm:$0xf] %v124
  %157 = vst [vmem:[%s3 + $0x4] sm:$0xf] %v125
  %158 = vst [vmem:[%s3 + $0x8] sm:$0xf] %v126
  %159 = vst [vmem:[%s3 + $0xc] sm:$0xf] %v127
  %160 = vst [vmem:[%s3 + $0x10] sm:$0xf] %v128
  %161 = vst [vmem:[%s3 + $0x14] sm:$0xf] %v129
  %162 = vst [vmem:[%s3 + $0x18] sm:$0xf] %v130
  %163 = vst [vmem:[%s3 + $0x1c] sm:$0xf] %v131
  %164 = vst [vmem:[%s3 + $0x20] sm:$0xf] %v132
  %165 = vst [vmem:[%s3 + $0x24] sm:$0xf] %v133
  %166 = vst [vmem:[%s3 + $0x28] sm:$0xf] %v134
  %167 = vst [vmem:[%s3 + $0x2c] sm:$0xf] %v135
  %168 = vst [vmem:[%s3 + $0x30] sm:$0xf] %v136
  %169 = vst [vmem:[%s3 + $0x34] sm:$0xf] %v137
  %170 = vst [vmem:[%s3 + $0x38] sm:$0xf] %v138
  %171 = vst [vmem:[%s3 + $0x3c] sm:$0xf] %v139
  // Predicated region
  $region14: #{up_layer_forward.7} parent=0 // pred_check
    _
  $region15: #{up_layer_forward.7} parent=0 // pred_check_branch
    %173 = sbr.rel (0) target = $region17
  $region16: #{up_layer_forward.7} parent=0 // pred_region
    _
  $region17: #{up_layer_forward.7} parent=0 // pred_fallthru
    _
  // Predicated region
  $region18: #{up_layer_forward.7} parent=0 // pred_check
    _
  $region19: #{up_layer_forward.7} parent=0 // pred_check_branch
    %175 = sbr.rel (0) target = $region21
  $region20: #{up_layer_forward.7} parent=0 // pred_region
    _
  $region21: #{up_layer_forward.7} parent=0 // pred_fallthru
    _

// kernel: up_layer_forward.6
$region0: #{up_layer_forward.6}
  #allocation0 [shape = 'u32[]', space=smem, size = 0x4, offset = 0x4, fixed_abs, tag = 'smem constant byte address 0x4 - core index']
  #allocation1 [shape = 'u32[144,128]{1,0:T(1,128)}', space=vmem, size = 0x12000, scoped, tag = 'internal scratch']
  %s0 = inlined_call_operand.vmem [shape: bf16[128,128], index: 0, kind: input, shape index: {}]
  %s1 = inlined_call_operand.vmem [shape: bf16[128,128], index: 1, kind: input, shape index: {}]
  %s2 = inlined_call_operand.vmem [shape: f32[1,128], index: 2, kind: input, shape index: {}]
  %s3 = inlined_call_operand.vmem [shape: f32[128,128], index: 3, kind: output, shape index: {0}]
  %s4 = inlined_call_operand.vmem [shape: f32[1,8,128], index: 4, kind: output, shape index: {1}]
  %s5 = inlined_call_operand.vmem [shape: f32[1,8,128], index: 5, kind: output, shape index: {2}]
  %6 = xla_tuple %s3, %s4, %s5
  %s7 = sld [smem:[#allocation0]]
  $region38: #{up_layer_forward.6} parent=0
    _
  %s9 = ssub.s32 1, %s7
  %s10 = scalar_select 0, %s9, %s7
  // Predicated region
  $region2: #{up_layer_forward.6} parent=0 // pred_check
    _
  $region3: #{up_layer_forward.6} parent=0 // pred_check_branch
    %12 = sbr.rel (0) target = $region5
  $region4: #{up_layer_forward.6} parent=0 // pred_region
    _
  $region5: #{up_layer_forward.6} parent=0 // pred_fallthru
    _
  // Predicated region
  $region6: #{up_layer_forward.6} parent=0 // pred_check
    _
  $region7: #{up_layer_forward.6} parent=0 // pred_check_branch
    %14 = sbr.rel (0) target = $region9
  $region8: #{up_layer_forward.6} parent=0 // pred_region
    _
  $region9: #{up_layer_forward.6} parent=0 // pred_fallthru
    _
  // Predicated region
  $region10: #{up_layer_forward.6} parent=0 // pred_check
    _
  $region11: #{up_layer_forward.6} parent=0 // pred_check_branch
    %16 = sbr.rel (0) target = $region13
  $region12: #{up_layer_forward.6} parent=0 // pred_region
    _
  $region13: #{up_layer_forward.6} parent=0 // pred_fallthru
    _
  %v18 = vld [vmem:[%s0] sm:$0xf]
  %v19 = vld [vmem:[%s0 + $0x4] sm:$0xf]
  %v20 = vld [vmem:[%s0 + $0x8] sm:$0xf]
  %v21 = vld [vmem:[%s0 + $0xc] sm:$0xf]
  %v22 = vld [vmem:[%s0 + $0x10] sm:$0xf]
  %v23 = vld [vmem:[%s0 + $0x14] sm:$0xf]
  %v24 = vld [vmem:[%s0 + $0x18] sm:$0xf]
  %v25 = vld [vmem:[%s0 + $0x1c] sm:$0xf]
  %v26 = vld [vmem:[%s0 + $0x20] sm:$0xf]
  %v27 = vld [vmem:[%s0 + $0x24] sm:$0xf]
  %v28 = vld [vmem:[%s0 + $0x28] sm:$0xf]
  %v29 = vld [vmem:[%s0 + $0x2c] sm:$0xf]
  %v30 = vld [vmem:[%s0 + $0x30] sm:$0xf]
  %v31 = vld [vmem:[%s0 + $0x34] sm:$0xf]
  %v32 = vld [vmem:[%s0 + $0x38] sm:$0xf]
  %v33 = vld [vmem:[%s0 + $0x3c] sm:$0xf]
  %v34 = vld [vmem:[%s1] sm:$0xf]
  %v35 = vld [vmem:[%s1 + $0x4] sm:$0xf]
  %v36 = vld [vmem:[%s1 + $0x8] sm:$0xf]
  %v37 = vld [vmem:[%s1 + $0xc] sm:$0xf]
  %v38 = vld [vmem:[%s1 + $0x10] sm:$0xf]
  %v39 = vld [vmem:[%s1 + $0x14] sm:$0xf]
  %v40 = vld [vmem:[%s1 + $0x18] sm:$0xf]
  %v41 = vld [vmem:[%s1 + $0x1c] sm:$0xf]
  %v42 = vld [vmem:[%s1 + $0x20] sm:$0xf]
  %v43 = vld [vmem:[%s1 + $0x24] sm:$0xf]
  %v44 = vld [vmem:[%s1 + $0x28] sm:$0xf]
  %v45 = vld [vmem:[%s1 + $0x2c] sm:$0xf]
  %v46 = vld [vmem:[%s1 + $0x30] sm:$0xf]
  %v47 = vld [vmem:[%s1 + $0x34] sm:$0xf]
  %v48 = vld [vmem:[%s1 + $0x38] sm:$0xf]
  %v49 = vld [vmem:[%s1 + $0x3c] sm:$0xf]
  %v50 = vld [vmem:[%s2] sm:$0x1]
  %v52 = vlaneseq
  %v53 = vshrl.u32 %v52, 7
  %v54 = vsub.s32 0, %v53
  %v55 = vrot.slane %v50, %v54
  %v73 = vunpack.c.l.b16 %v18
  %v74 = vunpack.c.l.b16 %v19
  %v75 = vunpack.c.l.b16 %v20
  %v76 = vunpack.c.l.b16 %v21
  %v77 = vunpack.c.l.b16 %v22
  %v78 = vunpack.c.l.b16 %v23
  %v79 = vunpack.c.l.b16 %v24
  %v80 = vunpack.c.l.b16 %v25
  %v81 = vunpack.c.l.b16 %v26
  %v82 = vunpack.c.l.b16 %v27
  %v83 = vunpack.c.l.b16 %v28
  %v84 = vunpack.c.l.b16 %v29
  %v85 = vunpack.c.l.b16 %v30
  %v86 = vunpack.c.l.b16 %v31
  %v87 = vunpack.c.l.b16 %v32
  %v88 = vunpack.c.l.b16 %v33
  %v89 = vpack.c.b16 %v74, %v73
  %v90 = vpack.c.b16 %v76, %v75
  %v91 = vpack.c.b16 %v78, %v77
  %v92 = vpack.c.b16 %v80, %v79
  %v93 = vpack.c.b16 %v82, %v81
  %v94 = vpack.c.b16 %v84, %v83
  %v95 = vpack.c.b16 %v86, %v85
  %v96 = vpack.c.b16 %v88, %v87
  %v121 = vunpack.c.l.b16 %v34
  %v122 = vunpack.c.l.b16 %v35
  %v123 = vunpack.c.l.b16 %v36
  %v124 = vunpack.c.l.b16 %v37
  %v125 = vunpack.c.l.b16 %v38
  %v126 = vunpack.c.l.b16 %v39
  %v127 = vunpack.c.l.b16 %v40
  %v128 = vunpack.c.l.b16 %v41
  %v129 = vunpack.c.l.b16 %v42
  %v130 = vunpack.c.l.b16 %v43
  %v131 = vunpack.c.l.b16 %v44
  %v132 = vunpack.c.l.b16 %v45
  %v133 = vunpack.c.l.b16 %v46
  %v134 = vunpack.c.l.b16 %v47
  %v135 = vunpack.c.l.b16 %v48
  %v136 = vunpack.c.l.b16 %v49
  %v137 = vpack.c.b16 %v122, %v121
  %v138 = vpack.c.b16 %v124, %v123
  %v139 = vpack.c.b16 %v126, %v125
  %v140 = vpack.c.b16 %v128, %v127
  %v141 = vpack.c.b16 %v130, %v129
  %v142 = vpack.c.b16 %v132, %v131
  %v143 = vpack.c.b16 %v134, %v133
  %v144 = vpack.c.b16 %v136, %v135
  %153 = vmatprep.subr.bf16.mxu0 0
  %154 = vmatpush1.bf16.msra.mxu0 %v137
  %155 = vmatprep.subr.bf16.mxu0 0
  %156 = vmatpush1.bf16.msra.mxu0 %v138
  %157 = vmatprep.subr.bf16.mxu0 0
  %158 = vmatpush1.bf16.msra.mxu0 %v139
  %159 = vmatprep.subr.bf16.mxu0 0
  %160 = vmatpush1.bf16.msra.mxu0 %v140
  %161 = vmatprep.subr.bf16.mxu0 0
  %162 = vmatpush1.bf16.msra.mxu0 %v141
  %163 = vmatprep.subr.bf16.mxu0 0
  %164 = vmatpush1.bf16.msra.mxu0 %v142
  %165 = vmatprep.subr.bf16.mxu0 0
  %166 = vmatpush1.bf16.msra.mxu0 %v143
  %167 = vmatprep.subr.bf16.mxu0 0
  %168 = vmatpush1.bf16.msra.mxu0 %v144
  %169 = vmatprep.subr.bf16.mxu0 0
  %170 = vmatpush1.bf16.msra.mxu0 0
  %171 = vmatprep.subr.bf16.mxu0 0
  %172 = vmatpush1.bf16.msra.mxu0 0
  %173 = vmatprep.subr.bf16.mxu0 0
  %174 = vmatpush1.bf16.msra.mxu0 0
  %175 = vmatprep.subr.bf16.mxu0 0
  %176 = vmatpush1.bf16.msra.mxu0 0
  %177 = vmatprep.subr.bf16.mxu0 0
  %178 = vmatpush1.bf16.msra.mxu0 0
  %179 = vmatprep.subr.bf16.mxu0 0
  %180 = vmatpush1.bf16.msra.mxu0 0
  %181 = vmatprep.subr.bf16.mxu0 0
  %182 = vmatpush1.bf16.msra.mxu0 0
  %183 = vmatprep.subr.bf16.mxu0 0
  %184 = vmatpush1.bf16.msra.mxu0 0
  %185 = vmatprep.mubr.bf16.mxu0 0
  %186 = vmatmul.mubr.bf16.gmra.mrb[0].mxu0 %v89
  %v187 = vpop.f32.mrb[0].mxu0
  %v188 = vadd.f32 %v55, %v187
  %v189 = vpop.f32.mrb[0].mxu0
  %v190 = vpop.f32.mrb[0].mxu0
  %v191 = vadd.f32 %v55, %v190
  %v192 = vpop.f32.mrb[0].mxu0
  %193 = vmatprep.mubr.bf16.mxu0 0
  %194 = vmatmul.mubr.bf16.gmra.mrb[0].mxu0 %v90
  %v195 = vpop.f32.mrb[0].mxu0
  %v196 = vadd.f32 %v55, %v195
  %v197 = vpop.f32.mrb[0].mxu0
  %v198 = vpop.f32.mrb[0].mxu0
  %v199 = vadd.f32 %v55, %v198
  %v200 = vpop.f32.mrb[0].mxu0
  %201 = vmatprep.mubr.bf16.mxu0 0
  %202 = vmatmul.mubr.bf16.gmra.mrb[0].mxu0 %v91
  %v203 = vpop.f32.mrb[0].mxu0
  %v204 = vadd.f32 %v55, %v203
  %v205 = vpop.f32.mrb[0].mxu0
  %v206 = vpop.f32.mrb[0].mxu0
  %v207 = vadd.f32 %v55, %v206
  %v208 = vpop.f32.mrb[0].mxu0
  %209 = vmatprep.mubr.bf16.mxu0 0
  %210 = vmatmul.mubr.bf16.gmra.mrb[0].mxu0 %v92
  %v211 = vpop.f32.mrb[0].mxu0
  %v212 = vadd.f32 %v55, %v211
  %v213 = vpop.f32.mrb[0].mxu0
  %v214 = vpop.f32.mrb[0].mxu0
  %v215 = vadd.f32 %v55, %v214
  %v216 = vpop.f32.mrb[0].mxu0
  %217 = vmatprep.mubr.bf16.mxu0 0
  %218 = vmatmul.mubr.bf16.gmra.mrb[0].mxu0 %v93
  %v219 = vpop.f32.mrb[0].mxu0
  %v220 = vadd.f32 %v55, %v219
  %v221 = vpop.f32.mrb[0].mxu0
  %v222 = vpop.f32.mrb[0].mxu0
  %v223 = vadd.f32 %v55, %v222
  %v224 = vpop.f32.mrb[0].mxu0
  %225 = vmatprep.mubr.bf16.mxu0 0
  %226 = vmatmul.mubr.bf16.gmra.mrb[0].mxu0 %v94
  %v227 = vpop.f32.mrb[0].mxu0
  %v228 = vadd.f32 %v55, %v227
  %v229 = vpop.f32.mrb[0].mxu0
  %v230 = vpop.f32.mrb[0].mxu0
  %v231 = vadd.f32 %v55, %v230
  %v232 = vpop.f32.mrb[0].mxu0
  %233 = vmatprep.mubr.bf16.mxu0 0
  %234 = vmatmul.mubr.bf16.gmra.mrb[0].mxu0 %v95
  %v235 = vpop.f32.mrb[0].mxu0
  %v236 = vadd.f32 %v55, %v235
  %v237 = vpop.f32.mrb[0].mxu0
  %v238 = vpop.f32.mrb[0].mxu0
  %v239 = vadd.f32 %v55, %v238
  %v240 = vpop.f32.mrb[0].mxu0
  %241 = vmatprep.mubr.bf16.mxu0 0
  %242 = vmatmul.mubr.bf16.gmra.mrb[0].mxu0 %v96
  %v243 = vpop.f32.mrb[0].mxu0
  %v244 = vadd.f32 %v55, %v243
  %v245 = vpop.f32.mrb[0].mxu0
  %v246 = vpop.f32.mrb[0].mxu0
  %v247 = vadd.f32 %v55, %v246
  %v248 = vpop.f32.mrb[0].mxu0
  %249 = vdwg.mxu0
  %250 = vst [vmem:[%s3] sm:$0xff] %v188
  %251 = vst [vmem:[%s3 + $0x8] sm:$0xff] %v191
  %252 = vst [vmem:[%s3 + $0x10] sm:$0xff] %v196
  %253 = vst [vmem:[%s3 + $0x18] sm:$0xff] %v199
  %254 = vst [vmem:[%s3 + $0x20] sm:$0xff] %v204
  %255 = vst [vmem:[%s3 + $0x28] sm:$0xff] %v207
  %256 = vst [vmem:[%s3 + $0x30] sm:$0xff] %v212
  %257 = vst [vmem:[%s3 + $0x38] sm:$0xff] %v215
  %258 = vst [vmem:[%s3 + $0x40] sm:$0xff] %v220
  %259 = vst [vmem:[%s3 + $0x48] sm:$0xff] %v223
  %260 = vst [vmem:[%s3 + $0x50] sm:$0xff] %v228
  %261 = vst [vmem:[%s3 + $0x58] sm:$0xff] %v231
  %262 = vst [vmem:[%s3 + $0x60] sm:$0xff] %v236
  %263 = vst [vmem:[%s3 + $0x68] sm:$0xff] %v239
  %264 = vst [vmem:[%s3 + $0x70] sm:$0xff] %v244
  %265 = vst [vmem:[%s3 + $0x78] sm:$0xff] %v247
  %v266 = vadd.f32 %v188, %v191
  %v267 = vadd.f32 %v266, %v196
  %v268 = vadd.f32 %v267, %v199
  %v269 = vadd.f32 %v268, %v204
  %v270 = vadd.f32 %v269, %v207
  %v271 = vadd.f32 %v270, %v212
  %v272 = vadd.f32 %v271, %v215
  %v273 = vadd.f32 %v272, %v220
  %v274 = vadd.f32 %v273, %v223
  %v275 = vadd.f32 %v274, %v228
  %v276 = vadd.f32 %v275, %v231
  %v277 = vadd.f32 %v276, %v236
  %v278 = vadd.f32 %v277, %v239
  %v279 = vadd.f32 %v278, %v244
  %v280 = vadd.f32 %v279, %v247
  %v281 = vrot.slane %v280, 4
  %v282 = vadd.f32 %v280, %v281
  %v283 = vrot.slane %v282, 2
  %v284 = vadd.f32 %v282, %v283
  %v285 = vrot.slane %v284, 1
  %v286 = vadd.f32 %v284, %v285
  %v287 = vmul.f32 %v188, %v188
  %v288 = vmul.f32 %v191, %v191
  %v289 = vmul.f32 %v196, %v196
  %v290 = vmul.f32 %v199, %v199
  %v291 = vmul.f32 %v204, %v204
  %v292 = vmul.f32 %v207, %v207
  %v293 = vmul.f32 %v212, %v212
  %v294 = vmul.f32 %v215, %v215
  %v295 = vmul.f32 %v220, %v220
  %v296 = vmul.f32 %v223, %v223
  %v297 = vmul.f32 %v228, %v228
  %v298 = vmul.f32 %v231, %v231
  %v299 = vmul.f32 %v236, %v236
  %v300 = vmul.f32 %v239, %v239
  %v301 = vmul.f32 %v244, %v244
  %v302 = vmul.f32 %v247, %v247
  %v303 = vadd.f32 %v287, %v288
  %v304 = vadd.f32 %v303, %v289
  %v305 = vadd.f32 %v304, %v290
  %v306 = vadd.f32 %v305, %v291
  %v307 = vadd.f32 %v306, %v292
  %v308 = vadd.f32 %v307, %v293
  %v309 = vadd.f32 %v308, %v294
  %v310 = vadd.f32 %v309, %v295
  %v311 = vadd.f32 %v310, %v296
  %v312 = vadd.f32 %v311, %v297
  %v313 = vadd.f32 %v312, %v298
  %v314 = vadd.f32 %v313, %v299
  %v315 = vadd.f32 %v314, %v300
  %v316 = vadd.f32 %v315, %v301
  %v317 = vadd.f32 %v316, %v302
  %v318 = vrot.slane %v317, 4
  %v319 = vadd.f32 %v317, %v318
  %v320 = vrot.slane %v319, 2
  %v321 = vadd.f32 %v319, %v320
  %v322 = vrot.slane %v321, 1
  %v323 = vadd.f32 %v321, %v322
  %324 = vst [vmem:[%s4] sm:$0xff] %v286
  %325 = vst [vmem:[%s5] sm:$0xff] %v323
  // Predicated region
  $region14: #{up_layer_forward.6} parent=0 // pred_check
    _
  $region15: #{up_layer_forward.6} parent=0 // pred_check_branch
    %327 = sbr.rel (0) target = $region17
  $region16: #{up_layer_forward.6} parent=0 // pred_region
    _
  $region17: #{up_layer_forward.6} parent=0 // pred_fallthru
    _
  // Predicated region
  $region18: #{up_layer_forward.6} parent=0 // pred_check
    _
  $region19: #{up_layer_forward.6} parent=0 // pred_check_branch
    %329 = sbr.rel (0) target = $region21
  $region20: #{up_layer_forward.6} parent=0 // pred_region
    _
  $region21: #{up_layer_forward.6} parent=0 // pred_fallthru
    _
  // Predicated region
  $region22: #{up_layer_forward.6} parent=0 // pred_check
    _
  $region23: #{up_layer_forward.6} parent=0 // pred_check_branch
    %331 = sbr.rel (0) target = $region25
  $region24: #{up_layer_forward.6} parent=0 // pred_region
    _
  $region25: #{up_layer_forward.6} parent=0 // pred_fallthru
    _
  // Predicated region
  $region26: #{up_layer_forward.6} parent=0 // pred_check
    _
  $region27: #{up_layer_forward.6} parent=0 // pred_check_branch
    %333 = sbr.rel (0) target = $region29
  $region28: #{up_layer_forward.6} parent=0 // pred_region
    _
  $region29: #{up_layer_forward.6} parent=0 // pred_fallthru
    _
  // Predicated region
  $region30: #{up_layer_forward.6} parent=0 // pred_check
    _
  $region31: #{up_layer_forward.6} parent=0 // pred_check_branch
    %335 = sbr.rel (0) target = $region33
  $region32: #{up_layer_forward.6} parent=0 // pred_region
    _
  $region33: #{up_layer_forward.6} parent=0 // pred_fallthru
    _
  // Predicated region
  $region34: #{up_layer_forward.6} parent=0 // pred_check
    _
  $region35: #{up_layer_forward.6} parent=0 // pred_check_branch
    %337 = sbr.rel (0) target = $region37
  $region36: #{up_layer_forward.6} parent=0 // pred_region
    _
  $region37: #{up_layer_forward.6} parent=0 // pred_fallthru
    _

// kernel: up_layer_forward.9
$region0: #{up_layer_forward.9}
  #allocation0 [shape = 'u32[]', space=smem, size = 0x4, offset = 0x4, fixed_abs, tag = 'smem constant byte address 0x4 - core index']
  #allocation1 [shape = 'u32[144,128]{1,0:T(1,128)}', space=vmem, size = 0x12000, scoped, tag = 'internal scratch']
  %s0 = inlined_call_operand.vmem [shape: f32[512,128], index: 0, kind: input, shape index: {}]
  %s1 = inlined_call_operand.vmem [shape: f32[1,128], index: 1, kind: input, shape index: {}]
  %s2 = inlined_call_operand.vmem [shape: f32[1,128], index: 2, kind: input, shape index: {}]
  %s3 = inlined_call_operand.vmem [shape: bf16[512,128], index: 3, kind: output, shape index: {}]
  %s4 = sld [smem:[#allocation0]]
  $region45: #{up_layer_forward.9} parent=0
    _
  %s6 = ssub.s32 1, %s4
  %s7 = scalar_select 0, %s6, %s4
  loop: start=0, step=1, limit=4
  $region2: #{up_layer_forward.9} parent=0 // loop_pre_header
    _
  $region3: #{up_layer_forward.9} parent=0 // loop_header
    %s9 = sphi 0, %s13
    %p10 = scmp.ge.s32.totalorder %s9, 4
    %s19 = sphi 0, %s21
    %s22 = sphi 0, %s19
    %s23 = sphi 0, %s22
    %s39 = sphi 0, %s23
    %s43 = sphi 0, %s43
    %s45 = sphi 0, %s43
    %s46 = sphi 0, %s45
    %s60 = sphi 0, %s46
    %s64 = sphi 0, %s64
    %s66 = sphi 0, %s64
    %s67 = sphi 0, %s66
    %s81 = sphi 0, %s67
    %s87 = sphi 0, %s89
    %s90 = sphi 0, %s87
    %s91 = sphi 0, %s90
    %s107 = sphi 0, %s91
  $region4: #{up_layer_forward.9} parent=0 // loop_header_branch
    %12 = sbr.rel (%p10) target = $region8
  $region5: #{up_layer_forward.9} parent=0 // loop_body
    %s14 = ssub.s32 %s9, 1
    %s15 = ssub.s32 %s9, 2
    %s16 = sadd.s32 %s9, 1
    %s17 = ssub.s32 %s9, %s16
    %p18 = scmp.eq.s32.totalorder %s17, 0
    %s20 = sadd.s32 %s19, 1
    %s21 = scalar_select %p18, %s19, %s20
    %p24 = pneg %p18
    %p25 = scmp.eq.s32.totalorder %s9, 1
    %p26 = por %p24, %p25
    %p27 = scmp.ne.s32.totalorder %s19, %s22
    %p28 = scmp.eq.s32.totalorder %s9, 0
    %p29 = por %p27, %p28
    %p30 = scmp.ne.s32.totalorder %s19, %s22
    %p31 = scmp.eq.s32.totalorder %s14, 1
    %p32 = por %p30, %p31
    %p33 = scmp.ne.s32.totalorder %s22, %s23
    %p34 = scmp.eq.s32.totalorder %s14, 0
    %p35 = por %p33, %p34
    %p36 = scmp.ne.s32.totalorder %s22, %s23
    %p37 = scmp.eq.s32.totalorder %s15, 1
    %p38 = por %p36, %p37
    %p40 = scmp.ne.s32.totalorder %s23, %s39
    %p41 = scmp.eq.s32.totalorder %s15, 0
    %p42 = por %p40, %p41
    %s44 = sadd.s32 %s43, 1
    %p47 = scmp.eq.s32.totalorder %s9, 1
    %p48 = scmp.ne.s32.totalorder %s43, %s45
    %p49 = scmp.eq.s32.totalorder %s9, 0
    %p50 = por %p48, %p49
    %p51 = scmp.ne.s32.totalorder %s43, %s45
    %p52 = scmp.eq.s32.totalorder %s14, 1
    %p53 = por %p51, %p52
    %p54 = scmp.ne.s32.totalorder %s45, %s46
    %p55 = scmp.eq.s32.totalorder %s14, 0
    %p56 = por %p54, %p55
    %p57 = scmp.ne.s32.totalorder %s45, %s46
    %p58 = scmp.eq.s32.totalorder %s15, 1
    %p59 = por %p57, %p58
    %p61 = scmp.ne.s32.totalorder %s46, %s60
    %p62 = scmp.eq.s32.totalorder %s15, 0
    %p63 = por %p61, %p62
    %s65 = sadd.s32 %s64, 1
    %p68 = scmp.eq.s32.totalorder %s9, 1
    %p69 = scmp.ne.s32.totalorder %s64, %s66
    %p70 = scmp.eq.s32.totalorder %s9, 0
    %p71 = por %p69, %p70
    %p72 = scmp.ne.s32.totalorder %s64, %s66
    %p73 = scmp.eq.s32.totalorder %s14, 1
    %p74 = por %p72, %p73
    %p75 = scmp.ne.s32.totalorder %s66, %s67
    %p76 = scmp.eq.s32.totalorder %s14, 0
    %p77 = por %p75, %p76
    %p78 = scmp.ne.s32.totalorder %s66, %s67
    %p79 = scmp.eq.s32.totalorder %s15, 1
    %p80 = por %p78, %p79
    %p82 = scmp.ne.s32.totalorder %s67, %s81
    %p83 = scmp.eq.s32.totalorder %s15, 0
    %p84 = por %p82, %p83
    %s85 = ssub.s32 %s9, %s16
    %p86 = scmp.eq.s32.totalorder %s85, 0
    %s88 = sadd.s32 %s87, 1
    %s89 = scalar_select %p86, %s87, %s88
    %p92 = pneg %p86
    %p93 = scmp.eq.s32.totalorder %s9, 1
    %p94 = por %p92, %p93
    %p95 = scmp.ne.s32.totalorder %s87, %s90
    %p96 = scmp.eq.s32.totalorder %s9, 0
    %p97 = por %p95, %p96
    %p98 = scmp.ne.s32.totalorder %s87, %s90
    %p99 = scmp.eq.s32.totalorder %s14, 1
    %p100 = por %p98, %p99
    %p101 = scmp.ne.s32.totalorder %s90, %s91
    %p102 = scmp.eq.s32.totalorder %s14, 0
    %p103 = por %p101, %p102
    %p104 = scmp.ne.s32.totalorder %s90, %s91
    %p105 = scmp.eq.s32.totalorder %s15, 1
    %p106 = por %p104, %p105
    %p108 = scmp.ne.s32.totalorder %s91, %s107
    %p109 = scmp.eq.s32.totalorder %s15, 0
    %p110 = por %p108, %p109
    %p111 = scmp.le.s32.totalorder 1, %s9
    %p112 = scmp.lt.s32.totalorder %s9, 3
    %p113 = pnand %p111, %p112
    %p114 = pneg %p113
    // Predicated region
    $region9: #{up_layer_forward.9} parent=5 // pred_check
      _
    $region10: #{up_layer_forward.9} parent=5 // pred_check_branch
      %116 = sbr.rel (%p113) target = $region12
    $region11: #{up_layer_forward.9} parent=5 // pred_region
      %s117 = ssub.s32 %s9, 1
      // Predicated region
      $region13: #{up_layer_forward.9} parent=11 // pred_check
        %p118 = pneg %p56
      $region14: #{up_layer_forward.9} parent=11 // pred_check_branch
        %120 = sbr.rel (%p118) target = $region16
      $region15: #{up_layer_forward.9} parent=11 // pred_region
        _
      $region16: #{up_layer_forward.9} parent=11 // pred_fallthru
        _
      // Predicated region
      $region17: #{up_layer_forward.9} parent=11 // pred_check
        %p121 = pneg %p77
      $region18: #{up_layer_forward.9} parent=11 // pred_check_branch
        %123 = sbr.rel (%p121) target = $region20
      $region19: #{up_layer_forward.9} parent=11 // pred_region
        _
      $region20: #{up_layer_forward.9} parent=11 // pred_fallthru
        _
    $region12: #{up_layer_forward.9} parent=5 // pred_fallthru
      _
    %p124 = scmp.lt.s32.totalorder %s9, 2
    // Predicated region
    $region21: #{up_layer_forward.9} parent=5 // pred_check
      %p125 = pneg %p124
    $region22: #{up_layer_forward.9} parent=5 // pred_check_branch
      %127 = sbr.rel (%p125) target = $region24
    $region23: #{up_layer_forward.9} parent=5 // pred_region
      // Predicated region
      $region25: #{up_layer_forward.9} parent=23 // pred_check
        %p128 = pneg %p29
      $region26: #{up_layer_forward.9} parent=23 // pred_check_branch
        %130 = sbr.rel (%p128) target = $region28
      $region27: #{up_layer_forward.9} parent=23 // pred_region
        %s131 = smul.u32 32, %s9
        %p132 = scmp.lt.s32.totalorder %s131, 63
        %s133 = scalar_select %p132, %s131, 63
        %s134 = smul.addr %s133, 8
        %s135 = scalar_lea.vmem %s0, %s134
        %s136 = smul.u32 32, %s9
      $region28: #{up_layer_forward.9} parent=23 // pred_fallthru
        _
    $region24: #{up_layer_forward.9} parent=5 // pred_fallthru
      _
    %p137 = scmp.le.s32.totalorder 1, %s9
    %p138 = scmp.lt.s32.totalorder %s9, 3
    %p139 = pnand %p137, %p138
    %p140 = pneg %p139
    // Predicated region
    $region29: #{up_layer_forward.9} parent=5 // pred_check
      _
    $region30: #{up_layer_forward.9} parent=5 // pred_check_branch
      %142 = sbr.rel (%p139) target = $region32
    $region31: #{up_layer_forward.9} parent=5 // pred_region
      %s143 = ssub.s32 %s9, 1
      %s144 = smul.u32 32, %s14
      %p145 = scmp.lt.s32.totalorder %s144, 63
      %s146 = scalar_select %p145, %s144, 63
      %s147 = smul.addr %s146, 8
      %s148 = scalar_lea.vmem %s0, %s147
      %p149 = pneg %p35
      %p150 = pneg %p32
      %p151 = pneg %p56
      %p152 = pneg %p53
      %p153 = pneg %p77
      %p154 = pneg %p74
      %p155 = pneg %p103
      %p156 = pneg %p100
      %s157 = smul.u32 32, %s14
      %p158 = scmp.lt.s32.totalorder %s157, 63
      %s159 = scalar_select %p158, %s157, 63
      %s160 = smul.addr %s159, 4
      %s161 = scalar_lea.vmem %s3, %s160
      %s162 = smul.u32 32, %s14
      %p163 = scmp.lt.s32.totalorder %s162, 63
      %s164 = scalar_select %p163, %s162, 63
      %s165 = smul.addr %s164, 8
      %s166 = scalar_lea.vmem %s0, %s165
      %s167 = smul.u32 32, %s14
      %s168 = smul.u32 32, %s14
      %p169 = scmp.lt.s32.totalorder %s168, 63
      %s170 = scalar_select %p169, %s168, 63
      %s171 = smul.addr %s170, 4
      %s172 = scalar_lea.vmem %s3, %s171
      %s173 = smul.u32 32, %s14
      %v174 = vld [vmem:[%s166] sm:$0xff]
      %v175 = vld [vmem:[%s166 + $0x8] sm:$0xff]
      %v176 = vld [vmem:[%s166 + $0x10] sm:$0xff]
      %v177 = vld [vmem:[%s166 + $0x18] sm:$0xff]
      %v178 = vld [vmem:[%s166 + $0x20] sm:$0xff]
      %v179 = vld [vmem:[%s166 + $0x28] sm:$0xff]
      %v180 = vld [vmem:[%s166 + $0x30] sm:$0xff]
      %v181 = vld [vmem:[%s166 + $0x38] sm:$0xff]
      %v182 = vld [vmem:[%s166 + $0x40] sm:$0xff]
      %v183 = vld [vmem:[%s166 + $0x48] sm:$0xff]
      %v184 = vld [vmem:[%s166 + $0x50] sm:$0xff]
      %v185 = vld [vmem:[%s166 + $0x58] sm:$0xff]
      %v186 = vld [vmem:[%s166 + $0x60] sm:$0xff]
      %v187 = vld [vmem:[%s166 + $0x68] sm:$0xff]
      %v188 = vld [vmem:[%s166 + $0x70] sm:$0xff]
      %v189 = vld [vmem:[%s166 + $0x78] sm:$0xff]
      %v190 = vld [vmem:[%s166 + $0x80] sm:$0xff]
      %v191 = vld [vmem:[%s166 + $0x88] sm:$0xff]
      %v192 = vld [vmem:[%s166 + $0x90] sm:$0xff]
      %v193 = vld [vmem:[%s166 + $0x98] sm:$0xff]
      %v194 = vld [vmem:[%s166 + $0xa0] sm:$0xff]
      %v195 = vld [vmem:[%s166 + $0xa8] sm:$0xff]
      %v196 = vld [vmem:[%s166 + $0xb0] sm:$0xff]
      %v197 = vld [vmem:[%s166 + $0xb8] sm:$0xff]
      %v198 = vld [vmem:[%s166 + $0xc0] sm:$0xff]
      %v199 = vld [vmem:[%s166 + $0xc8] sm:$0xff]
      %v200 = vld [vmem:[%s166 + $0xd0] sm:$0xff]
      %v201 = vld [vmem:[%s166 + $0xd8] sm:$0xff]
      %v202 = vld [vmem:[%s166 + $0xe0] sm:$0xff]
      %v203 = vld [vmem:[%s166 + $0xe8] sm:$0xff]
      %v204 = vld [vmem:[%s166 + $0xf0] sm:$0xff]
      %v205 = vld [vmem:[%s166 + $0xf8] sm:$0xff]
      %v206 = vld [vmem:[%s1] sm:$0x1]
      %v208 = vlaneseq
      %v209 = vshrl.u32 %v208, 7
      %v210 = vsub.s32 0, %v209
      %v211 = vrot.slane %v206, %v210
      %v213 = vmul.f32 %v174, %v211
      %v214 = vmul.f32 %v175, %v211
      %v215 = vmul.f32 %v176, %v211
      %v216 = vmul.f32 %v177, %v211
      %v217 = vmul.f32 %v178, %v211
      %v218 = vmul.f32 %v179, %v211
      %v219 = vmul.f32 %v180, %v211
      %v220 = vmul.f32 %v181, %v211
      %v221 = vmul.f32 %v182, %v211
      %v222 = vmul.f32 %v183, %v211
      %v223 = vmul.f32 %v184, %v211
      %v224 = vmul.f32 %v185, %v211
      %v225 = vmul.f32 %v186, %v211
      %v226 = vmul.f32 %v187, %v211
      %v227 = vmul.f32 %v188, %v211
      %v228 = vmul.f32 %v189, %v211
      %v229 = vmul.f32 %v190, %v211
      %v230 = vmul.f32 %v191, %v211
      %v231 = vmul.f32 %v192, %v211
      %v232 = vmul.f32 %v193, %v211
      %v233 = vmul.f32 %v194, %v211
      %v234 = vmul.f32 %v195, %v211
      %v235 = vmul.f32 %v196, %v211
      %v236 = vmul.f32 %v197, %v211
      %v237 = vmul.f32 %v198, %v211
      %v238 = vmul.f32 %v199, %v211
      %v239 = vmul.f32 %v200, %v211
      %v240 = vmul.f32 %v201, %v211
      %v241 = vmul.f32 %v202, %v211
      %v242 = vmul.f32 %v203, %v211
      %v243 = vmul.f32 %v204, %v211
      %v244 = vmul.f32 %v205, %v211
      %v245 = vld [vmem:[%s2] sm:$0x1]
      %v247 = vlaneseq
      %v248 = vshrl.u32 %v247, 7
      %v249 = vsub.s32 0, %v248
      %v250 = vrot.slane %v245, %v249
      %v252 = vadd.f32 %v213, %v250
      %v253 = vadd.f32 %v214, %v250
      %v254 = vadd.f32 %v215, %v250
      %v255 = vadd.f32 %v216, %v250
      %v256 = vadd.f32 %v217, %v250
      %v257 = vadd.f32 %v218, %v250
      %v258 = vadd.f32 %v219, %v250
      %v259 = vadd.f32 %v220, %v250
      %v260 = vadd.f32 %v221, %v250
      %v261 = vadd.f32 %v222, %v250
      %v262 = vadd.f32 %v223, %v250
      %v263 = vadd.f32 %v224, %v250
      %v264 = vadd.f32 %v225, %v250
      %v265 = vadd.f32 %v226, %v250
      %v266 = vadd.f32 %v227, %v250
      %v267 = vadd.f32 %v228, %v250
      %v268 = vadd.f32 %v229, %v250
      %v269 = vadd.f32 %v230, %v250
      %v270 = vadd.f32 %v231, %v250
      %v271 = vadd.f32 %v232, %v250
      %v272 = vadd.f32 %v233, %v250
      %v273 = vadd.f32 %v234, %v250
      %v274 = vadd.f32 %v235, %v250
      %v275 = vadd.f32 %v236, %v250
      %v276 = vadd.f32 %v237, %v250
      %v277 = vadd.f32 %v238, %v250
      %v278 = vadd.f32 %v239, %v250
      %v279 = vadd.f32 %v240, %v250
      %v280 = vadd.f32 %v241, %v250
      %v281 = vadd.f32 %v242, %v250
      %v282 = vadd.f32 %v243, %v250
      %v283 = vadd.f32 %v244, %v250
      %v284 = vmax.f32 %v252, 0.0
      %v285 = vmax.f32 %v253, 0.0
      %v286 = vmax.f32 %v254, 0.0
      %v287 = vmax.f32 %v255, 0.0
      %v288 = vmax.f32 %v256, 0.0
      %v289 = vmax.f32 %v257, 0.0
      %v290 = vmax.f32 %v258, 0.0
      %v291 = vmax.f32 %v259, 0.0
      %v292 = vmax.f32 %v260, 0.0
      %v293 = vmax.f32 %v261, 0.0
      %v294 = vmax.f32 %v262, 0.0
      %v295 = vmax.f32 %v263, 0.0
      %v296 = vmax.f32 %v264, 0.0
      %v297 = vmax.f32 %v265, 0.0
      %v298 = vmax.f32 %v266, 0.0
      %v299 = vmax.f32 %v267, 0.0
      %v300 = vmax.f32 %v268, 0.0
      %v301 = vmax.f32 %v269, 0.0
      %v302 = vmax.f32 %v270, 0.0
      %v303 = vmax.f32 %v271, 0.0
      %v304 = vmax.f32 %v272, 0.0
      %v305 = vmax.f32 %v273, 0.0
      %v306 = vmax.f32 %v274, 0.0
      %v307 = vmax.f32 %v275, 0.0
      %v308 = vmax.f32 %v276, 0.0
      %v309 = vmax.f32 %v277, 0.0
      %v310 = vmax.f32 %v278, 0.0
      %v311 = vmax.f32 %v279, 0.0
      %v312 = vmax.f32 %v280, 0.0
      %v313 = vmax.f32 %v281, 0.0
      %v314 = vmax.f32 %v282, 0.0
      %v315 = vmax.f32 %v283, 0.0
      %v316 = vpack.c.bf16 %v285, %v284
      %v317 = vpack.c.bf16 %v287, %v286
      %v318 = vpack.c.bf16 %v289, %v288
      %v319 = vpack.c.bf16 %v291, %v290
      %v320 = vpack.c.bf16 %v293, %v292
      %v321 = vpack.c.bf16 %v295, %v294
      %v322 = vpack.c.bf16 %v297, %v296
      %v323 = vpack.c.bf16 %v299, %v298
      %v324 = vpack.c.bf16 %v301, %v300
      %v325 = vpack.c.bf16 %v303, %v302
      %v326 = vpack.c.bf16 %v305, %v304
      %v327 = vpack.c.bf16 %v307, %v306
      %v328 = vpack.c.bf16 %v309, %v308
      %v329 = vpack.c.bf16 %v311, %v310
      %v330 = vpack.c.bf16 %v313, %v312
      %v331 = vpack.c.bf16 %v315, %v314
      %v348 = vunpack.c.l.b16 %v316
      %v349 = vunpack.c.h.b16 %v316
      %v350 = vunpack.c.l.b16 %v317
      %v351 = vunpack.c.h.b16 %v317
      %v352 = vunpack.c.l.b16 %v318
      %v353 = vunpack.c.h.b16 %v318
      %v354 = vunpack.c.l.b16 %v319
      %v355 = vunpack.c.h.b16 %v319
      %v356 = vunpack.c.l.b16 %v320
      %v357 = vunpack.c.h.b16 %v320
      %v358 = vunpack.c.l.b16 %v321
      %v359 = vunpack.c.h.b16 %v321
      %v360 = vunpack.c.l.b16 %v322
      %v361 = vunpack.c.h.b16 %v322
      %v362 = vunpack.c.l.b16 %v323
      %v363 = vunpack.c.h.b16 %v323
      %v364 = vunpack.c.l.b16 %v324
      %v365 = vunpack.c.h.b16 %v324
      %v366 = vunpack.c.l.b16 %v325
      %v367 = vunpack.c.h.b16 %v325
      %v368 = vunpack.c.l.b16 %v326
      %v369 = vunpack.c.h.b16 %v326
      %v370 = vunpack.c.l.b16 %v327
      %v371 = vunpack.c.h.b16 %v327
      %v372 = vunpack.c.l.b16 %v328
      %v373 = vunpack.c.h.b16 %v328
      %v374 = vunpack.c.l.b16 %v329
      %v375 = vunpack.c.h.b16 %v329
      %v376 = vunpack.c.l.b16 %v330
      %v377 = vunpack.c.h.b16 %v330
      %v378 = vunpack.c.l.b16 %v331
      %v379 = vunpack.c.h.b16 %v331
      %v380 = vpack.c.b16 %v348, %v348
      %v381 = vpack.c.b16 %v349, %v349
      %v382 = vpack.c.b16 %v350, %v350
      %v383 = vpack.c.b16 %v351, %v351
      %v384 = vpack.c.b16 %v352, %v352
      %v385 = vpack.c.b16 %v353, %v353
      %v386 = vpack.c.b16 %v354, %v354
      %v387 = vpack.c.b16 %v355, %v355
      %v388 = vpack.c.b16 %v356, %v356
      %v389 = vpack.c.b16 %v357, %v357
      %v390 = vpack.c.b16 %v358, %v358
      %v391 = vpack.c.b16 %v359, %v359
      %v392 = vpack.c.b16 %v360, %v360
      %v393 = vpack.c.b16 %v361, %v361
      %v394 = vpack.c.b16 %v362, %v362
      %v395 = vpack.c.b16 %v363, %v363
      %v396 = vpack.c.b16 %v364, %v364
      %v397 = vpack.c.b16 %v365, %v365
      %v398 = vpack.c.b16 %v366, %v366
      %v399 = vpack.c.b16 %v367, %v367
      %v400 = vpack.c.b16 %v368, %v368
      %v401 = vpack.c.b16 %v369, %v369
      %v402 = vpack.c.b16 %v370, %v370
      %v403 = vpack.c.b16 %v371, %v371
      %v404 = vpack.c.b16 %v372, %v372
      %v405 = vpack.c.b16 %v373, %v373
      %v406 = vpack.c.b16 %v374, %v374
      %v407 = vpack.c.b16 %v375, %v375
      %v408 = vpack.c.b16 %v376, %v376
      %v409 = vpack.c.b16 %v377, %v377
      %v410 = vpack.c.b16 %v378, %v378
      %v411 = vpack.c.b16 %v379, %v379
      %444 = vst [vmem:[%s172] sm:$0xf] %v380
      %445 = vst [vmem:[%s172 + $0x4] sm:$0xf] %v381
      %446 = vst [vmem:[%s172 + $0x8] sm:$0xf] %v382
      %447 = vst [vmem:[%s172 + $0xc] sm:$0xf] %v383
      %448 = vst [vmem:[%s172 + $0x10] sm:$0xf] %v384
      %449 = vst [vmem:[%s172 + $0x14] sm:$0xf] %v385
      %450 = vst [vmem:[%s172 + $0x18] sm:$0xf] %v386
      %451 = vst [vmem:[%s172 + $0x1c] sm:$0xf] %v387
      %452 = vst [vmem:[%s172 + $0x20] sm:$0xf] %v388
      %453 = vst [vmem:[%s172 + $0x24] sm:$0xf] %v389
      %454 = vst [vmem:[%s172 + $0x28] sm:$0xf] %v390
      %455 = vst [vmem:[%s172 + $0x2c] sm:$0xf] %v391
      %456 = vst [vmem:[%s172 + $0x30] sm:$0xf] %v392
      %457 = vst [vmem:[%s172 + $0x34] sm:$0xf] %v393
      %458 = vst [vmem:[%s172 + $0x38] sm:$0xf] %v394
      %459 = vst [vmem:[%s172 + $0x3c] sm:$0xf] %v395
      %460 = vst [vmem:[%s172 + $0x40] sm:$0xf] %v396
      %461 = vst [vmem:[%s172 + $0x44] sm:$0xf] %v397
      %462 = vst [vmem:[%s172 + $0x48] sm:$0xf] %v398
      %463 = vst [vmem:[%s172 + $0x4c] sm:$0xf] %v399
      %464 = vst [vmem:[%s172 + $0x50] sm:$0xf] %v400
      %465 = vst [vmem:[%s172 + $0x54] sm:$0xf] %v401
      %466 = vst [vmem:[%s172 + $0x58] sm:$0xf] %v402
      %467 = vst [vmem:[%s172 + $0x5c] sm:$0xf] %v403
      %468 = vst [vmem:[%s172 + $0x60] sm:$0xf] %v404
      %469 = vst [vmem:[%s172 + $0x64] sm:$0xf] %v405
      %470 = vst [vmem:[%s172 + $0x68] sm:$0xf] %v406
      %471 = vst [vmem:[%s172 + $0x6c] sm:$0xf] %v407
      %472 = vst [vmem:[%s172 + $0x70] sm:$0xf] %v408
      %473 = vst [vmem:[%s172 + $0x74] sm:$0xf] %v409
      %474 = vst [vmem:[%s172 + $0x78] sm:$0xf] %v410
      %475 = vst [vmem:[%s172 + $0x7c] sm:$0xf] %v411
      %s476 = smul.u32 32, %s14
      %p477 = scmp.lt.s32.totalorder %s476, 63
      %s478 = scalar_select %p477, %s476, 63
      %s479 = smul.addr %s478, 4
      %s480 = scalar_lea.vmem %s3, %s479
      // Predicated region
      $region33: #{up_layer_forward.9} parent=31 // pred_check
        %p481 = pneg %p100
      $region34: #{up_layer_forward.9} parent=31 // pred_check_branch
        %483 = sbr.rel (%p481) target = $region36
      $region35: #{up_layer_forward.9} parent=31 // pred_region
        %s484 = smul.u32 32, %s14
      $region36: #{up_layer_forward.9} parent=31 // pred_fallthru
        _
    $region32: #{up_layer_forward.9} parent=5 // pred_fallthru
      _
    %p485 = scmp.le.s32.totalorder 2, %s9
    // Predicated region
    $region37: #{up_layer_forward.9} parent=5 // pred_check
      %p486 = pneg %p485
    $region38: #{up_layer_forward.9} parent=5 // pred_check_branch
      %488 = sbr.rel (%p486) target = $region40
    $region39: #{up_layer_forward.9} parent=5 // pred_region
      %s489 = ssub.s32 %s9, 2
      // Predicated region
      $region41: #{up_layer_forward.9} parent=39 // pred_check
        %p490 = pneg %p106
      $region42: #{up_layer_forward.9} parent=39 // pred_check_branch
        %492 = sbr.rel (%p490) target = $region44
      $region43: #{up_layer_forward.9} parent=39 // pred_region
        %s493 = smul.u32 32, %s15
        %p494 = scmp.lt.s32.totalorder %s493, 63
        %s495 = scalar_select %p494, %s493, 63
        %s496 = smul.addr %s495, 4
        %s497 = scalar_lea.vmem %s3, %s496
      $region44: #{up_layer_forward.9} parent=39 // pred_fallthru
        _
    $region40: #{up_layer_forward.9} parent=5 // pred_fallthru
      _
  $region6: #{up_layer_forward.9} parent=0 // loop_footer
    %s13 = sadd.s32 1, %s9
  $region7: #{up_layer_forward.9} parent=0 // loop_footer_branch
    %8 = sbr.rel target = $region3
  $region8: #{up_layer_forward.9} parent=0 // loop_exit
    _

// kernel: up_layer_forward.8
$region0: #{up_layer_forward.8}
  #allocation0 [shape = 'u32[]', space=smem, size = 0x4, offset = 0x4, fixed_abs, tag = 'smem constant byte address 0x4 - core index']
  #allocation1 [shape = 'u32[144,128]{1,0:T(1,128)}', space=vmem, size = 0x12000, scoped, tag = 'internal scratch']
  %s0 = inlined_call_operand.vmem [shape: bf16[512,1152], index: 0, kind: input, shape index: {}]
  %s1 = inlined_call_operand.vmem [shape: bf16[1152,128], index: 1, kind: input, shape index: {}]
  %s2 = inlined_call_operand.vmem [shape: f32[1,128], index: 2, kind: input, shape index: {}]
  %s3 = inlined_call_operand.vmem [shape: f32[512,128], index: 3, kind: output, shape index: {0}]
  %s4 = inlined_call_operand.vmem [shape: f32[2,8,128], index: 4, kind: output, shape index: {1}]
  %s5 = inlined_call_operand.vmem [shape: f32[2,8,128], index: 5, kind: output, shape index: {2}]
  %6 = xla_tuple %s3, %s4, %s5
  %s7 = sld [smem:[#allocation0]]
  $region61: #{up_layer_forward.8} parent=0
    _
  %s9 = ssub.s32 1, %s7
  %s10 = scalar_select 0, %s9, %s7
  loop: start=0, step=1, limit=4
  $region2: #{up_layer_forward.8} parent=0 // loop_pre_header
    _
  $region3: #{up_layer_forward.8} parent=0 // loop_header
    %s12 = sphi 0, %s16
    %p13 = scmp.ge.s32.totalorder %s12, 4
    %s22 = sphi 0, %s24
    %s25 = sphi 0, %s22
    %s26 = sphi 0, %s25
    %s42 = sphi 0, %s26
    %s46 = sphi 0, %s46
    %s48 = sphi 0, %s46
    %s49 = sphi 0, %s48
    %s63 = sphi 0, %s49
    %s67 = sphi 0, %s67
    %s69 = sphi 0, %s67
    %s70 = sphi 0, %s69
    %s84 = sphi 0, %s70
    %s90 = sphi 0, %s92
    %s93 = sphi 0, %s90
    %s94 = sphi 0, %s93
    %s110 = sphi 0, %s94
    %s116 = sphi 0, %s118
    %s119 = sphi 0, %s116
    %s120 = sphi 0, %s119
    %s136 = sphi 0, %s120
    %s142 = sphi 0, %s144
    %s145 = sphi 0, %s142
    %s146 = sphi 0, %s145
    %s162 = sphi 0, %s146
  $region4: #{up_layer_forward.8} parent=0 // loop_header_branch
    %15 = sbr.rel (%p13) target = $region8
  $region5: #{up_layer_forward.8} parent=0 // loop_body
    %s17 = ssub.s32 %s12, 1
    %s18 = ssub.s32 %s12, 2
    %s19 = sadd.s32 %s12, 1
    %s20 = ssub.s32 %s12, %s19
    %p21 = scmp.eq.s32.totalorder %s20, 0
    %s23 = sadd.s32 %s22, 1
    %s24 = scalar_select %p21, %s22, %s23
    %p27 = pneg %p21
    %p28 = scmp.eq.s32.totalorder %s12, 1
    %p29 = por %p27, %p28
    %p30 = scmp.ne.s32.totalorder %s22, %s25
    %p31 = scmp.eq.s32.totalorder %s12, 0
    %p32 = por %p30, %p31
    %p33 = scmp.ne.s32.totalorder %s22, %s25
    %p34 = scmp.eq.s32.totalorder %s17, 1
    %p35 = por %p33, %p34
    %p36 = scmp.ne.s32.totalorder %s25, %s26
    %p37 = scmp.eq.s32.totalorder %s17, 0
    %p38 = por %p36, %p37
    %p39 = scmp.ne.s32.totalorder %s25, %s26
    %p40 = scmp.eq.s32.totalorder %s18, 1
    %p41 = por %p39, %p40
    %p43 = scmp.ne.s32.totalorder %s26, %s42
    %p44 = scmp.eq.s32.totalorder %s18, 0
    %p45 = por %p43, %p44
    %s47 = sadd.s32 %s46, 1
    %p50 = scmp.eq.s32.totalorder %s12, 1
    %p51 = scmp.ne.s32.totalorder %s46, %s48
    %p52 = scmp.eq.s32.totalorder %s12, 0
    %p53 = por %p51, %p52
    %p54 = scmp.ne.s32.totalorder %s46, %s48
    %p55 = scmp.eq.s32.totalorder %s17, 1
    %p56 = por %p54, %p55
    %p57 = scmp.ne.s32.totalorder %s48, %s49
    %p58 = scmp.eq.s32.totalorder %s17, 0
    %p59 = por %p57, %p58
    %p60 = scmp.ne.s32.totalorder %s48, %s49
    %p61 = scmp.eq.s32.totalorder %s18, 1
    %p62 = por %p60, %p61
    %p64 = scmp.ne.s32.totalorder %s49, %s63
    %p65 = scmp.eq.s32.totalorder %s18, 0
    %p66 = por %p64, %p65
    %s68 = sadd.s32 %s67, 1
    %p71 = scmp.eq.s32.totalorder %s12, 1
    %p72 = scmp.ne.s32.totalorder %s67, %s69
    %p73 = scmp.eq.s32.totalorder %s12, 0
    %p74 = por %p72, %p73
    %p75 = scmp.ne.s32.totalorder %s67, %s69
    %p76 = scmp.eq.s32.totalorder %s17, 1
    %p77 = por %p75, %p76
    %p78 = scmp.ne.s32.totalorder %s69, %s70
    %p79 = scmp.eq.s32.totalorder %s17, 0
    %p80 = por %p78, %p79
    %p81 = scmp.ne.s32.totalorder %s69, %s70
    %p82 = scmp.eq.s32.totalorder %s18, 1
    %p83 = por %p81, %p82
    %p85 = scmp.ne.s32.totalorder %s70, %s84
    %p86 = scmp.eq.s32.totalorder %s18, 0
    %p87 = por %p85, %p86
    %s88 = ssub.s32 %s12, %s19
    %p89 = scmp.eq.s32.totalorder %s88, 0
    %s91 = sadd.s32 %s90, 1
    %s92 = scalar_select %p89, %s90, %s91
    %p95 = pneg %p89
    %p96 = scmp.eq.s32.totalorder %s12, 1
    %p97 = por %p95, %p96
    %p98 = scmp.ne.s32.totalorder %s90, %s93
    %p99 = scmp.eq.s32.totalorder %s12, 0
    %p100 = por %p98, %p99
    %p101 = scmp.ne.s32.totalorder %s90, %s93
    %p102 = scmp.eq.s32.totalorder %s17, 1
    %p103 = por %p101, %p102
    %p104 = scmp.ne.s32.totalorder %s93, %s94
    %p105 = scmp.eq.s32.totalorder %s17, 0
    %p106 = por %p104, %p105
    %p107 = scmp.ne.s32.totalorder %s93, %s94
    %p108 = scmp.eq.s32.totalorder %s18, 1
    %p109 = por %p107, %p108
    %p111 = scmp.ne.s32.totalorder %s94, %s110
    %p112 = scmp.eq.s32.totalorder %s18, 0
    %p113 = por %p111, %p112
    %s114 = ssub.s32 %s12, %s19
    %p115 = scmp.eq.s32.totalorder %s114, 0
    %s117 = sadd.s32 %s116, 1
    %s118 = scalar_select %p115, %s116, %s117
    %p121 = pneg %p115
    %p122 = scmp.eq.s32.totalorder %s12, 1
    %p123 = por %p121, %p122
    %p124 = scmp.ne.s32.totalorder %s116, %s119
    %p125 = scmp.eq.s32.totalorder %s12, 0
    %p126 = por %p124, %p125
    %p127 = scmp.ne.s32.totalorder %s116, %s119
    %p128 = scmp.eq.s32.totalorder %s17, 1
    %p129 = por %p127, %p128
    %p130 = scmp.ne.s32.totalorder %s119, %s120
    %p131 = scmp.eq.s32.totalorder %s17, 0
    %p132 = por %p130, %p131
    %p133 = scmp.ne.s32.totalorder %s119, %s120
    %p134 = scmp.eq.s32.totalorder %s18, 1
    %p135 = por %p133, %p134
    %p137 = scmp.ne.s32.totalorder %s120, %s136
    %p138 = scmp.eq.s32.totalorder %s18, 0
    %p139 = por %p137, %p138
    %s140 = ssub.s32 %s12, %s19
    %p141 = scmp.eq.s32.totalorder %s140, 0
    %s143 = sadd.s32 %s142, 1
    %s144 = scalar_select %p141, %s142, %s143
    %p147 = pneg %p141
    %p148 = scmp.eq.s32.totalorder %s12, 1
    %p149 = por %p147, %p148
    %p150 = scmp.ne.s32.totalorder %s142, %s145
    %p151 = scmp.eq.s32.totalorder %s12, 0
    %p152 = por %p150, %p151
    %p153 = scmp.ne.s32.totalorder %s142, %s145
    %p154 = scmp.eq.s32.totalorder %s17, 1
    %p155 = por %p153, %p154
    %p156 = scmp.ne.s32.totalorder %s145, %s146
    %p157 = scmp.eq.s32.totalorder %s17, 0
    %p158 = por %p156, %p157
    %p159 = scmp.ne.s32.totalorder %s145, %s146
    %p160 = scmp.eq.s32.totalorder %s18, 1
    %p161 = por %p159, %p160
    %p163 = scmp.ne.s32.totalorder %s146, %s162
    %p164 = scmp.eq.s32.totalorder %s18, 0
    %p165 = por %p163, %p164
    %p166 = scmp.le.s32.totalorder 1, %s12
    %p167 = scmp.lt.s32.totalorder %s12, 3
    %p168 = pnand %p166, %p167
    %p169 = pneg %p168
    // Predicated region
    $region9: #{up_layer_forward.8} parent=5 // pred_check
      _
    $region10: #{up_layer_forward.8} parent=5 // pred_check_branch
      %171 = sbr.rel (%p168) target = $region12
    $region11: #{up_layer_forward.8} parent=5 // pred_region
      %s172 = ssub.s32 %s12, 1
      // Predicated region
      $region13: #{up_layer_forward.8} parent=11 // pred_check
        %p173 = pneg %p59
      $region14: #{up_layer_forward.8} parent=11 // pred_check_branch
        %175 = sbr.rel (%p173) target = $region16
      $region15: #{up_layer_forward.8} parent=11 // pred_region
        _
      $region16: #{up_layer_forward.8} parent=11 // pred_fallthru
        _
      // Predicated region
      $region17: #{up_layer_forward.8} parent=11 // pred_check
        %p176 = pneg %p80
      $region18: #{up_layer_forward.8} parent=11 // pred_check_branch
        %178 = sbr.rel (%p176) target = $region20
      $region19: #{up_layer_forward.8} parent=11 // pred_region
        _
      $region20: #{up_layer_forward.8} parent=11 // pred_fallthru
        _
    $region12: #{up_layer_forward.8} parent=5 // pred_fallthru
      _
    %p179 = scmp.lt.s32.totalorder %s12, 2
    // Predicated region
    $region21: #{up_layer_forward.8} parent=5 // pred_check
      %p180 = pneg %p179
    $region22: #{up_layer_forward.8} parent=5 // pred_check_branch
      %182 = sbr.rel (%p180) target = $region24
    $region23: #{up_layer_forward.8} parent=5 // pred_region
      // Predicated region
      $region25: #{up_layer_forward.8} parent=23 // pred_check
        %p183 = pneg %p32
      $region26: #{up_layer_forward.8} parent=23 // pred_check_branch
        %185 = sbr.rel (%p183) target = $region28
      $region27: #{up_layer_forward.8} parent=23 // pred_region
        %s186 = smul.u32 32, %s12
        %p187 = scmp.lt.s32.totalorder %s186, 63
        %s188 = scalar_select %p187, %s186, 63
        %s189 = smul.addr %s188, 9
        %s190 = smul.addr %s189, 4
        %s191 = scalar_lea.vmem %s0, %s190
        %s192 = smul.u32 32, %s12
      $region28: #{up_layer_forward.8} parent=23 // pred_fallthru
        _
    $region24: #{up_layer_forward.8} parent=5 // pred_fallthru
      _
    %p193 = scmp.le.s32.totalorder 1, %s12
    %p194 = scmp.lt.s32.totalorder %s12, 3
    %p195 = pnand %p193, %p194
    %p196 = pneg %p195
    // Predicated region
    $region29: #{up_layer_forward.8} parent=5 // pred_check
      _
    $region30: #{up_layer_forward.8} parent=5 // pred_check_branch
      %198 = sbr.rel (%p195) target = $region32
    $region31: #{up_layer_forward.8} parent=5 // pred_region
      %s199 = ssub.s32 %s12, 1
      %s200 = smul.u32 32, %s17
      %p201 = scmp.lt.s32.totalorder %s200, 63
      %s202 = scalar_select %p201, %s200, 63
      %s203 = smul.addr %s202, 9
      %s204 = smul.addr %s203, 4
      %s205 = scalar_lea.vmem %s0, %s204
      %p206 = pneg %p38
      %p207 = pneg %p35
      %p208 = pneg %p59
      %p209 = pneg %p56
      %p210 = pneg %p80
      %p211 = pneg %p77
      %p212 = pneg %p106
      %p213 = pneg %p103
      %s214 = smul.u32 32, %s17
      %p215 = scmp.lt.s32.totalorder %s214, 63
      %s216 = scalar_select %p215, %s214, 63
      %s217 = smul.addr %s216, 8
      %s218 = scalar_lea.vmem %s3, %s217
      %p219 = pneg %p132
      %p220 = pneg %p129
      %p221 = scmp.lt.s32.totalorder %s17, 1
      %s222 = scalar_select %p221, %s17, 1
      %s223 = smul.addr %s222, 8
      %s224 = scalar_lea.vmem %s4, %s223
      %p225 = pneg %p158
      %p226 = pneg %p155
      %p227 = scmp.lt.s32.totalorder %s17, 1
      %s228 = scalar_select %p227, %s17, 1
      %s229 = smul.addr %s228, 8
      %s230 = scalar_lea.vmem %s5, %s229
      %s231 = smul.u32 32, %s17
      %p232 = scmp.lt.s32.totalorder %s231, 63
      %s233 = scalar_select %p232, %s231, 63
      %s234 = smul.addr %s233, 9
      %s235 = smul.addr %s234, 4
      %s236 = scalar_lea.vmem %s0, %s235
      %s237 = smul.u32 32, %s17
      %s238 = smul.u32 32, %s17
      %p239 = scmp.lt.s32.totalorder %s238, 63
      %s240 = scalar_select %p239, %s238, 63
      %s241 = smul.addr %s240, 8
      %s242 = scalar_lea.vmem %s3, %s241
      %s243 = smul.u32 32, %s17
      %p244 = scmp.lt.s32.totalorder %s17, 1
      %s245 = scalar_select %p244, %s17, 1
      %s246 = smul.addr %s245, 8
      %s247 = scalar_lea.vmem %s4, %s246
      %p248 = scmp.lt.s32.totalorder %s17, 1
      %s249 = scalar_select %p248, %s17, 1
      %s250 = smul.addr %s249, 8
      %s251 = scalar_lea.vmem %s5, %s250
      %v253 = vld [vmem:[%s236] sm:$0xff]
      %v254 = vld [vmem:[%s236 + $0x8] sm:$0xff]
      %v255 = vld [vmem:[%s236 + $0x10] sm:$0xff]
      %v256 = vld [vmem:[%s236 + $0x18] sm:$0xff]
      %v257 = vld [vmem:[%s236 + $0x20] sm:$0xf]
      %v258 = vld [vmem:[%s236 + $0x24] sm:$0xff]
      %v259 = vld [vmem:[%s236 + $0x2c] sm:$0xff]
      %v260 = vld [vmem:[%s236 + $0x34] sm:$0xff]
      %v261 = vld [vmem:[%s236 + $0x3c] sm:$0xff]
      %v262 = vld [vmem:[%s236 + $0x44] sm:$0xf]
      %v263 = vld [vmem:[%s236 + $0x48] sm:$0xff]
      %v264 = vld [vmem:[%s236 + $0x50] sm:$0xff]
      %v265 = vld [vmem:[%s236 + $0x58] sm:$0xff]
      %v266 = vld [vmem:[%s236 + $0x60] sm:$0xff]
      %v267 = vld [vmem:[%s236 + $0x68] sm:$0xf]
      %v268 = vld [vmem:[%s236 + $0x6c] sm:$0xff]
      %v269 = vld [vmem:[%s236 + $0x74] sm:$0xff]
      %v270 = vld [vmem:[%s236 + $0x7c] sm:$0xff]
      %v271 = vld [vmem:[%s236 + $0x84] sm:$0xff]
      %v272 = vld [vmem:[%s236 + $0x8c] sm:$0xf]
      %v273 = vld [vmem:[%s236 + $0x90] sm:$0xff]
      %v274 = vld [vmem:[%s236 + $0x98] sm:$0xff]
      %v275 = vld [vmem:[%s236 + $0xa0] sm:$0xff]
      %v276 = vld [vmem:[%s236 + $0xa8] sm:$0xff]
      %v277 = vld [vmem:[%s236 + $0xb0] sm:$0xf]
      %v278 = vld [vmem:[%s236 + $0xb4] sm:$0xff]
      %v279 = vld [vmem:[%s236 + $0xbc] sm:$0xff]
      %v280 = vld [vmem:[%s236 + $0xc4] sm:$0xff]
      %v281 = vld [vmem:[%s236 + $0xcc] sm:$0xff]
      %v282 = vld [vmem:[%s236 + $0xd4] sm:$0xf]
      %v283 = vld [vmem:[%s236 + $0xd8] sm:$0xff]
      %v284 = vld [vmem:[%s236 + $0xe0] sm:$0xff]
      %v285 = vld [vmem:[%s236 + $0xe8] sm:$0xff]
      %v286 = vld [vmem:[%s236 + $0xf0] sm:$0xff]
      %v287 = vld [vmem:[%s236 + $0xf8] sm:$0xf]
      %v288 = vld [vmem:[%s236 + $0xfc] sm:$0xff]
      %v289 = vld [vmem:[%s236 + $0x104] sm:$0xff]
      %v290 = vld [vmem:[%s236 + $0x10c] sm:$0xff]
      %v291 = vld [vmem:[%s236 + $0x114] sm:$0xff]
      %v292 = vld [vmem:[%s236 + $0x11c] sm:$0xf]
      %v293 = vld [vmem:[%s236 + $0x120] sm:$0xff]
      %v294 = vld [vmem:[%s236 + $0x128] sm:$0xff]
      %v295 = vld [vmem:[%s236 + $0x130] sm:$0xff]
      %v296 = vld [vmem:[%s236 + $0x138] sm:$0xff]
      %v297 = vld [vmem:[%s236 + $0x140] sm:$0xf]
      %v298 = vld [vmem:[%s236 + $0x144] sm:$0xff]
      %v299 = vld [vmem:[%s236 + $0x14c] sm:$0xff]
      %v300 = vld [vmem:[%s236 + $0x154] sm:$0xff]
      %v301 = vld [vmem:[%s236 + $0x15c] sm:$0xff]
      %v302 = vld [vmem:[%s236 + $0x164] sm:$0xf]
      %v303 = vld [vmem:[%s236 + $0x168] sm:$0xff]
      %v304 = vld [vmem:[%s236 + $0x170] sm:$0xff]
      %v305 = vld [vmem:[%s236 + $0x178] sm:$0xff]
      %v306 = vld [vmem:[%s236 + $0x180] sm:$0xff]
      %v307 = vld [vmem:[%s236 + $0x188] sm:$0xf]
      %v308 = vld [vmem:[%s236 + $0x18c] sm:$0xff]
      %v309 = vld [vmem:[%s236 + $0x194] sm:$0xff]
      %v310 = vld [vmem:[%s236 + $0x19c] sm:$0xff]
      %v311 = vld [vmem:[%s236 + $0x1a4] sm:$0xff]
      %v312 = vld [vmem:[%s236 + $0x1ac] sm:$0xf]
      %v313 = vld [vmem:[%s236 + $0x1b0] sm:$0xff]
      %v314 = vld [vmem:[%s236 + $0x1b8] sm:$0xff]
      %v315 = vld [vmem:[%s236 + $0x1c0] sm:$0xff]
      %v316 = vld [vmem:[%s236 + $0x1c8] sm:$0xff]
      %v317 = vld [vmem:[%s236 + $0x1d0] sm:$0xf]
      %v318 = vld [vmem:[%s236 + $0x1d4] sm:$0xff]
      %v319 = vld [vmem:[%s236 + $0x1dc] sm:$0xff]
      %v320 = vld [vmem:[%s236 + $0x1e4] sm:$0xff]
      %v321 = vld [vmem:[%s236 + $0x1ec] sm:$0xff]
      %v322 = vld [vmem:[%s236 + $0x1f4] sm:$0xf]
      %v323 = vld [vmem:[%s236 + $0x1f8] sm:$0xff]
      %v324 = vld [vmem:[%s236 + $0x200] sm:$0xff]
      %v325 = vld [vmem:[%s236 + $0x208] sm:$0xff]
      %v326 = vld [vmem:[%s236 + $0x210] sm:$0xff]
      %v327 = vld [vmem:[%s236 + $0x218] sm:$0xf]
      %v328 = vld [vmem:[%s236 + $0x21c] sm:$0xff]
      %v329 = vld [vmem:[%s236 + $0x224] sm:$0xff]
      %v330 = vld [vmem:[%s236 + $0x22c] sm:$0xff]
      %v331 = vld [vmem:[%s236 + $0x234] sm:$0xff]
      %v332 = vld [vmem:[%s236 + $0x23c] sm:$0xf]
      %v333 = vld [vmem:[%s236 + $0x240] sm:$0xff]
      %v334 = vld [vmem:[%s236 + $0x248] sm:$0xff]
      %v335 = vld [vmem:[%s236 + $0x250] sm:$0xff]
      %v336 = vld [vmem:[%s236 + $0x258] sm:$0xff]
      %v337 = vld [vmem:[%s236 + $0x260] sm:$0xf]
      %v338 = vld [vmem:[%s236 + $0x264] sm:$0xff]
      %v339 = vld [vmem:[%s236 + $0x26c] sm:$0xff]
      %v340 = vld [vmem:[%s236 + $0x274] sm:$0xff]
      %v341 = vld [vmem:[%s236 + $0x27c] sm:$0xff]
      %v342 = vld [vmem:[%s236 + $0x284] sm:$0xf]
      %v343 = vld [vmem:[%s236 + $0x288] sm:$0xff]
      %v344 = vld [vmem:[%s236 + $0x290] sm:$0xff]
      %v345 = vld [vmem:[%s236 + $0x298] sm:$0xff]
      %v346 = vld [vmem:[%s236 + $0x2a0] sm:$0xff]
      %v347 = vld [vmem:[%s236 + $0x2a8] sm:$0xf]
      %v348 = vld [vmem:[%s236 + $0x2ac] sm:$0xff]
      %v349 = vld [vmem:[%s236 + $0x2b4] sm:$0xff]
      %v350 = vld [vmem:[%s236 + $0x2bc] sm:$0xff]
      %v351 = vld [vmem:[%s236 + $0x2c4] sm:$0xff]
      %v352 = vld [vmem:[%s236 + $0x2cc] sm:$0xf]
      %v353 = vld [vmem:[%s236 + $0x2d0] sm:$0xff]
      %v354 = vld [vmem:[%s236 + $0x2d8] sm:$0xff]
      %v355 = vld [vmem:[%s236 + $0x2e0] sm:$0xff]
      %v356 = vld [vmem:[%s236 + $0x2e8] sm:$0xff]
      %v357 = vld [vmem:[%s236 + $0x2f0] sm:$0xf]
      %v358 = vld [vmem:[%s236 + $0x2f4] sm:$0xff]
      %v359 = vld [vmem:[%s236 + $0x2fc] sm:$0xff]
      %v360 = vld [vmem:[%s236 + $0x304] sm:$0xff]
      %v361 = vld [vmem:[%s236 + $0x30c] sm:$0xff]
      %v362 = vld [vmem:[%s236 + $0x314] sm:$0xf]
      %v363 = vld [vmem:[%s236 + $0x318] sm:$0xff]
      %v364 = vld [vmem:[%s236 + $0x320] sm:$0xff]
      %v365 = vld [vmem:[%s236 + $0x328] sm:$0xff]
      %v366 = vld [vmem:[%s236 + $0x330] sm:$0xff]
      %v367 = vld [vmem:[%s236 + $0x338] sm:$0xf]
      %v368 = vld [vmem:[%s236 + $0x33c] sm:$0xff]
      %v369 = vld [vmem:[%s236 + $0x344] sm:$0xff]
      %v370 = vld [vmem:[%s236 + $0x34c] sm:$0xff]
      %v371 = vld [vmem:[%s236 + $0x354] sm:$0xff]
      %v372 = vld [vmem:[%s236 + $0x35c] sm:$0xf]
      %v373 = vld [vmem:[%s236 + $0x360] sm:$0xff]
      %v374 = vld [vmem:[%s236 + $0x368] sm:$0xff]
      %v375 = vld [vmem:[%s236 + $0x370] sm:$0xff]
      %v376 = vld [vmem:[%s236 + $0x378] sm:$0xff]
      %v377 = vld [vmem:[%s236 + $0x380] sm:$0xf]
      %v378 = vld [vmem:[%s236 + $0x384] sm:$0xff]
      %v379 = vld [vmem:[%s236 + $0x38c] sm:$0xff]
      %v380 = vld [vmem:[%s236 + $0x394] sm:$0xff]
      %v381 = vld [vmem:[%s236 + $0x39c] sm:$0xff]
      %v382 = vld [vmem:[%s236 + $0x3a4] sm:$0xf]
      %v383 = vld [vmem:[%s236 + $0x3a8] sm:$0xff]
      %v384 = vld [vmem:[%s236 + $0x3b0] sm:$0xff]
      %v385 = vld [vmem:[%s236 + $0x3b8] sm:$0xff]
      %v386 = vld [vmem:[%s236 + $0x3c0] sm:$0xff]
      %v387 = vld [vmem:[%s236 + $0x3c8] sm:$0xf]
      %v388 = vld [vmem:[%s236 + $0x3cc] sm:$0xff]
      %v389 = vld [vmem:[%s236 + $0x3d4] sm:$0xff]
      %v390 = vld [vmem:[%s236 + $0x3dc] sm:$0xff]
      %v391 = vld [vmem:[%s236 + $0x3e4] sm:$0xff]
      %v392 = vld [vmem:[%s236 + $0x3ec] sm:$0xf]
      %v393 = vld [vmem:[%s236 + $0x3f0] sm:$0xff]
      %v394 = vld [vmem:[%s236 + $0x3f8] sm:$0xff]
      %v395 = vld [vmem:[%s236 + $0x400] sm:$0xff]
      %v396 = vld [vmem:[%s236 + $0x408] sm:$0xff]
      %v397 = vld [vmem:[%s236 + $0x410] sm:$0xf]
      %v398 = vld [vmem:[%s236 + $0x414] sm:$0xff]
      %v399 = vld [vmem:[%s236 + $0x41c] sm:$0xff]
      %v400 = vld [vmem:[%s236 + $0x424] sm:$0xff]
      %v401 = vld [vmem:[%s236 + $0x42c] sm:$0xff]
      %v402 = vld [vmem:[%s236 + $0x434] sm:$0xf]
      %v403 = vld [vmem:[%s236 + $0x438] sm:$0xff]
      %v404 = vld [vmem:[%s236 + $0x440] sm:$0xff]
      %v405 = vld [vmem:[%s236 + $0x448] sm:$0xff]
      %v406 = vld [vmem:[%s236 + $0x450] sm:$0xff]
      %v407 = vld [vmem:[%s236 + $0x458] sm:$0xf]
      %v408 = vld [vmem:[%s236 + $0x45c] sm:$0xff]
      %v409 = vld [vmem:[%s236 + $0x464] sm:$0xff]
      %v410 = vld [vmem:[%s236 + $0x46c] sm:$0xff]
      %v411 = vld [vmem:[%s236 + $0x474] sm:$0xff]
      %v412 = vld [vmem:[%s236 + $0x47c] sm:$0xf]
      %v413 = vld [vmem:[%s1] sm:$0xf]
      %v414 = vld [vmem:[%s1 + $0x4] sm:$0xf]
      %v415 = vld [vmem:[%s1 + $0x8] sm:$0xf]
      %v416 = vld [vmem:[%s1 + $0xc] sm:$0xf]
      %v417 = vld [vmem:[%s1 + $0x10] sm:$0xf]
      %v418 = vld [vmem:[%s1 + $0x14] sm:$0xf]
      %v419 = vld [vmem:[%s1 + $0x18] sm:$0xf]
      %v420 = vld [vmem:[%s1 + $0x1c] sm:$0xf]
      %v421 = vld [vmem:[%s1 + $0x20] sm:$0xf]
      %v422 = vld [vmem:[%s1 + $0x24] sm:$0xf]
      %v423 = vld [vmem:[%s1 + $0x28] sm:$0xf]
      %v424 = vld [vmem:[%s1 + $0x2c] sm:$0xf]
      %v425 = vld [vmem:[%s1 + $0x30] sm:$0xf]
      %v426 = vld [vmem:[%s1 + $0x34] sm:$0xf]
      %v427 = vld [vmem:[%s1 + $0x38] sm:$0xf]
      %v428 = vld [vmem:[%s1 + $0x3c] sm:$0xf]
      %v429 = vld [vmem:[%s1 + $0x40] sm:$0xf]
      %v430 = vld [vmem:[%s1 + $0x44] sm:$0xf]
      %v431 = vld [vmem:[%s1 + $0x48] sm:$0xf]
      %v432 = vld [vmem:[%s1 + $0x4c] sm:$0xf]
      %v433 = vld [vmem:[%s1 + $0x50] sm:$0xf]
      %v434 = vld [vmem:[%s1 + $0x54] sm:$0xf]
      %v435 = vld [vmem:[%s1 + $0x58] sm:$0xf]
      %v436 = vld [vmem:[%s1 + $0x5c] sm:$0xf]
      %v437 = vld [vmem:[%s1 + $0x60] sm:$0xf]
      %v438 = vld [vmem:[%s1 + $0x64] sm:$0xf]
      %v439 = vld [vmem:[%s1 + $0x68] sm:$0xf]
      %v440 = vld [vmem:[%s1 + $0x6c] sm:$0xf]
      %v441 = vld [vmem:[%s1 + $0x70] sm:$0xf]
      %v442 = vld [vmem:[%s1 + $0x74] sm:$0xf]
      %v443 = vld [vmem:[%s1 + $0x78] sm:$0xf]
      %v444 = vld [vmem:[%s1 + $0x7c] sm:$0xf]
      %v445 = vld [vmem:[%s1 + $0x80] sm:$0xf]
      %v446 = vld [vmem:[%s1 + $0x84] sm:$0xf]
      %v447 = vld [vmem:[%s1 + $0x88] sm:$0xf]
      %v448 = vld [vmem:[%s1 + $0x8c] sm:$0xf]
      %v449 = vld [vmem:[%s1 + $0x90] sm:$0xf]
      %v450 = vld [vmem:[%s1 + $0x94] sm:$0xf]
      %v451 = vld [vmem:[%s1 + $0x98] sm:$0xf]
      %v452 = vld [vmem:[%s1 + $0x9c] sm:$0xf]
      %v453 = vld [vmem:[%s1 + $0xa0] sm:$0xf]
      %v454 = vld [vmem:[%s1 + $0xa4] sm:$0xf]
      %v455 = vld [vmem:[%s1 + $0xa8] sm:$0xf]
      %v456 = vld [vmem:[%s1 + $0xac] sm:$0xf]
      %v457 = vld [vmem:[%s1 + $0xb0] sm:$0xf]
      %v458 = vld [vmem:[%s1 + $0xb4] sm:$0xf]
      %v459 = vld [vmem:[%s1 + $0xb8] sm:$0xf]
      %v460 = vld [vmem:[%s1 + $0xbc] sm:$0xf]
      %v461 = vld [vmem:[%s1 + $0xc0] sm:$0xf]
      %v462 = vld [vmem:[%s1 + $0xc4] sm:$0xf]
      %v463 = vld [vmem:[%s1 + $0xc8] sm:$0xf]
      %v464 = vld [vmem:[%s1 + $0xcc] sm:$0xf]
      %v465 = vld [vmem:[%s1 + $0xd0] sm:$0xf]
      %v466 = vld [vmem:[%s1 + $0xd4] sm:$0xf]
      %v467 = vld [vmem:[%s1 + $0xd8] sm:$0xf]
      %v468 = vld [vmem:[%s1 + $0xdc] sm:$0xf]
      %v469 = vld [vmem:[%s1 + $0xe0] sm:$0xf]
      %v470 = vld [vmem:[%s1 + $0xe4] sm:$0xf]
      %v471 = vld [vmem:[%s1 + $0xe8] sm:$0xf]
      %v472 = vld [vmem:[%s1 + $0xec] sm:$0xf]
      %v473 = vld [vmem:[%s1 + $0xf0] sm:$0xf]
      %v474 = vld [vmem:[%s1 + $0xf4] sm:$0xf]
      %v475 = vld [vmem:[%s1 + $0xf8] sm:$0xf]
      %v476 = vld [vmem:[%s1 + $0xfc] sm:$0xf]
      %v477 = vld [vmem:[%s1 + $0x100] sm:$0xf]
      %v478 = vld [vmem:[%s1 + $0x104] sm:$0xf]
      %v479 = vld [vmem:[%s1 + $0x108] sm:$0xf]
      %v480 = vld [vmem:[%s1 + $0x10c] sm:$0xf]
      %v481 = vld [vmem:[%s1 + $0x110] sm:$0xf]
      %v482 = vld [vmem:[%s1 + $0x114] sm:$0xf]
      %v483 = vld [vmem:[%s1 + $0x118] sm:$0xf]
      %v484 = vld [vmem:[%s1 + $0x11c] sm:$0xf]
      %v485 = vld [vmem:[%s1 + $0x120] sm:$0xf]
      %v486 = vld [vmem:[%s1 + $0x124] sm:$0xf]
      %v487 = vld [vmem:[%s1 + $0x128] sm:$0xf]
      %v488 = vld [vmem:[%s1 + $0x12c] sm:$0xf]
      %v489 = vld [vmem:[%s1 + $0x130] sm:$0xf]
      %v490 = vld [vmem:[%s1 + $0x134] sm:$0xf]
      %v491 = vld [vmem:[%s1 + $0x138] sm:$0xf]
      %v492 = vld [vmem:[%s1 + $0x13c] sm:$0xf]
      %v493 = vld [vmem:[%s1 + $0x140] sm:$0xf]
      %v494 = vld [vmem:[%s1 + $0x144] sm:$0xf]
      %v495 = vld [vmem:[%s1 + $0x148] sm:$0xf]
      %v496 = vld [vmem:[%s1 + $0x14c] sm:$0xf]
      %v497 = vld [vmem:[%s1 + $0x150] sm:$0xf]
      %v498 = vld [vmem:[%s1 + $0x154] sm:$0xf]
      %v499 = vld [vmem:[%s1 + $0x158] sm:$0xf]
      %v500 = vld [vmem:[%s1 + $0x15c] sm:$0xf]
      %v501 = vld [vmem:[%s1 + $0x160] sm:$0xf]
      %v502 = vld [vmem:[%s1 + $0x164] sm:$0xf]
      %v503 = vld [vmem:[%s1 + $0x168] sm:$0xf]
      %v504 = vld [vmem:[%s1 + $0x16c] sm:$0xf]
      %v505 = vld [vmem:[%s1 + $0x170] sm:$0xf]
      %v506 = vld [vmem:[%s1 + $0x174] sm:$0xf]
      %v507 = vld [vmem:[%s1 + $0x178] sm:$0xf]
      %v508 = vld [vmem:[%s1 + $0x17c] sm:$0xf]
      %v509 = vld [vmem:[%s1 + $0x180] sm:$0xf]
      %v510 = vld [vmem:[%s1 + $0x184] sm:$0xf]
      %v511 = vld [vmem:[%s1 + $0x188] sm:$0xf]
      %v512 = vld [vmem:[%s1 + $0x18c] sm:$0xf]
      %v513 = vld [vmem:[%s1 + $0x190] sm:$0xf]
      %v514 = vld [vmem:[%s1 + $0x194] sm:$0xf]
      %v515 = vld [vmem:[%s1 + $0x198] sm:$0xf]
      %v516 = vld [vmem:[%s1 + $0x19c] sm:$0xf]
      %v517 = vld [vmem:[%s1 + $0x1a0] sm:$0xf]
      %v518 = vld [vmem:[%s1 + $0x1a4] sm:$0xf]
      %v519 = vld [vmem:[%s1 + $0x1a8] sm:$0xf]
      %v520 = vld [vmem:[%s1 + $0x1ac] sm:$0xf]
      %v521 = vld [vmem:[%s1 + $0x1b0] sm:$0xf]
      %v522 = vld [vmem:[%s1 + $0x1b4] sm:$0xf]
      %v523 = vld [vmem:[%s1 + $0x1b8] sm:$0xf]
      %v524 = vld [vmem:[%s1 + $0x1bc] sm:$0xf]
      %v525 = vld [vmem:[%s1 + $0x1c0] sm:$0xf]
      %v526 = vld [vmem:[%s1 + $0x1c4] sm:$0xf]
      %v527 = vld [vmem:[%s1 + $0x1c8] sm:$0xf]
      %v528 = vld [vmem:[%s1 + $0x1cc] sm:$0xf]
      %v529 = vld [vmem:[%s1 + $0x1d0] sm:$0xf]
      %v530 = vld [vmem:[%s1 + $0x1d4] sm:$0xf]
      %v531 = vld [vmem:[%s1 + $0x1d8] sm:$0xf]
      %v532 = vld [vmem:[%s1 + $0x1dc] sm:$0xf]
      %v533 = vld [vmem:[%s1 + $0x1e0] sm:$0xf]
      %v534 = vld [vmem:[%s1 + $0x1e4] sm:$0xf]
      %v535 = vld [vmem:[%s1 + $0x1e8] sm:$0xf]
      %v536 = vld [vmem:[%s1 + $0x1ec] sm:$0xf]
      %v537 = vld [vmem:[%s1 + $0x1f0] sm:$0xf]
      %v538 = vld [vmem:[%s1 + $0x1f4] sm:$0xf]
      %v539 = vld [vmem:[%s1 + $0x1f8] sm:$0xf]
      %v540 = vld [vmem:[%s1 + $0x1fc] sm:$0xf]
      %v541 = vld [vmem:[%s1 + $0x200] sm:$0xf]
      %v542 = vld [vmem:[%s1 + $0x204] sm:$0xf]
      %v543 = vld [vmem:[%s1 + $0x208] sm:$0xf]
      %v544 = vld [vmem:[%s1 + $0x20c] sm:$0xf]
      %v545 = vld [vmem:[%s1 + $0x210] sm:$0xf]
      %v546 = vld [vmem:[%s1 + $0x214] sm:$0xf]
      %v547 = vld [vmem:[%s1 + $0x218] sm:$0xf]
      %v548 = vld [vmem:[%s1 + $0x21c] sm:$0xf]
      %v549 = vld [vmem:[%s1 + $0x220] sm:$0xf]
      %v550 = vld [vmem:[%s1 + $0x224] sm:$0xf]
      %v551 = vld [vmem:[%s1 + $0x228] sm:$0xf]
      %v552 = vld [vmem:[%s1 + $0x22c] sm:$0xf]
      %v553 = vld [vmem:[%s1 + $0x230] sm:$0xf]
      %v554 = vld [vmem:[%s1 + $0x234] sm:$0xf]
      %v555 = vld [vmem:[%s1 + $0x238] sm:$0xf]
      %v556 = vld [vmem:[%s1 + $0x23c] sm:$0xf]
      %v557 = vld [vmem:[%s2] sm:$0x1]
      %v559 = vlaneseq
      %v560 = vshrl.u32 %v559, 7
      %v561 = vsub.s32 0, %v560
      %v562 = vrot.slane %v557, %v561
      %v724 = vunpack.c.l.b16 %v253
      %v725 = vunpack.c.h.b16 %v253
      %v726 = vunpack.c.l.b16 %v254
      %v727 = vunpack.c.h.b16 %v254
      %v728 = vunpack.c.l.b16 %v255
      %v729 = vunpack.c.h.b16 %v255
      %v730 = vunpack.c.l.b16 %v256
      %v731 = vunpack.c.h.b16 %v256
      %v732 = vunpack.c.l.b16 %v257
      %v733 = vunpack.c.l.b16 %v258
      %v734 = vunpack.c.h.b16 %v258
      %v735 = vunpack.c.l.b16 %v259
      %v736 = vunpack.c.h.b16 %v259
      %v737 = vunpack.c.l.b16 %v260
      %v738 = vunpack.c.h.b16 %v260
      %v739 = vunpack.c.l.b16 %v261
      %v740 = vunpack.c.h.b16 %v261
      %v741 = vunpack.c.l.b16 %v262
      %v742 = vunpack.c.l.b16 %v263
      %v743 = vunpack.c.h.b16 %v263
      %v744 = vunpack.c.l.b16 %v264
      %v745 = vunpack.c.h.b16 %v264
      %v746 = vunpack.c.l.b16 %v265
      %v747 = vunpack.c.h.b16 %v265
      %v748 = vunpack.c.l.b16 %v266
      %v749 = vunpack.c.h.b16 %v266
      %v750 = vunpack.c.l.b16 %v267
      %v751 = vunpack.c.l.b16 %v268
      %v752 = vunpack.c.h.b16 %v268
      %v753 = vunpack.c.l.b16 %v269
      %v754 = vunpack.c.h.b16 %v269
      %v755 = vunpack.c.l.b16 %v270
      %v756 = vunpack.c.h.b16 %v270
      %v757 = vunpack.c.l.b16 %v271
      %v758 = vunpack.c.h.b16 %v271
      %v759 = vunpack.c.l.b16 %v272
      %v760 = vunpack.c.l.b16 %v273
      %v761 = vunpack.c.h.b16 %v273
      %v762 = vunpack.c.l.b16 %v274
      %v763 = vunpack.c.h.b16 %v274
      %v764 = vunpack.c.l.b16 %v275
      %v765 = vunpack.c.h.b16 %v275
      %v766 = vunpack.c.l.b16 %v276
      %v767 = vunpack.c.h.b16 %v276
      %v768 = vunpack.c.l.b16 %v277
      %v769 = vunpack.c.l.b16 %v278
      %v770 = vunpack.c.h.b16 %v278
      %v771 = vunpack.c.l.b16 %v279
      %v772 = vunpack.c.h.b16 %v279
      %v773 = vunpack.c.l.b16 %v280
      %v774 = vunpack.c.h.b16 %v280
      %v775 = vunpack.c.l.b16 %v281
      %v776 = vunpack.c.h.b16 %v281
      %v777 = vunpack.c.l.b16 %v282
      %v778 = vunpack.c.l.b16 %v283
      %v779 = vunpack.c.h.b16 %v283
      %v780 = vunpack.c.l.b16 %v284
      %v781 = vunpack.c.h.b16 %v284
      %v782 = vunpack.c.l.b16 %v285
      %v783 = vunpack.c.h.b16 %v285
      %v784 = vunpack.c.l.b16 %v286
      %v785 = vunpack.c.h.b16 %v286
      %v786 = vunpack.c.l.b16 %v287
      %v787 = vunpack.c.l.b16 %v288
      %v788 = vunpack.c.h.b16 %v288
      %v789 = vunpack.c.l.b16 %v289
      %v790 = vunpack.c.h.b16 %v289
      %v791 = vunpack.c.l.b16 %v290
      %v792 = vunpack.c.h.b16 %v290
      %v793 = vunpack.c.l.b16 %v291
      %v794 = vunpack.c.h.b16 %v291
      %v795 = vunpack.c.l.b16 %v292
      %v796 = vunpack.c.l.b16 %v293
      %v797 = vunpack.c.h.b16 %v293
      %v798 = vunpack.c.l.b16 %v294
      %v799 = vunpack.c.h.b16 %v294
      %v800 = vunpack.c.l.b16 %v295
      %v801 = vunpack.c.h.b16 %v295
      %v802 = vunpack.c.l.b16 %v296
      %v803 = vunpack.c.h.b16 %v296
      %v804 = vunpack.c.l.b16 %v297
      %v805 = vunpack.c.l.b16 %v298
      %v806 = vunpack.c.h.b16 %v298
      %v807 = vunpack.c.l.b16 %v299
      %v808 = vunpack.c.h.b16 %v299
      %v809 = vunpack.c.l.b16 %v300
      %v810 = vunpack.c.h.b16 %v300
      %v811 = vunpack.c.l.b16 %v301
      %v812 = vunpack.c.h.b16 %v301
      %v813 = vunpack.c.l.b16 %v302
      %v814 = vunpack.c.l.b16 %v303
      %v815 = vunpack.c.h.b16 %v303
      %v816 = vunpack.c.l.b16 %v304
      %v817 = vunpack.c.h.b16 %v304
      %v818 = vunpack.c.l.b16 %v305
      %v819 = vunpack.c.h.b16 %v305
      %v820 = vunpack.c.l.b16 %v306
      %v821 = vunpack.c.h.b16 %v306
      %v822 = vunpack.c.l.b16 %v307
      %v823 = vunpack.c.l.b16 %v308
      %v824 = vunpack.c.h.b16 %v308
      %v825 = vunpack.c.l.b16 %v309
      %v826 = vunpack.c.h.b16 %v309
      %v827 = vunpack.c.l.b16 %v310
      %v828 = vunpack.c.h.b16 %v310
      %v829 = vunpack.c.l.b16 %v311
      %v830 = vunpack.c.h.b16 %v311
      %v831 = vunpack.c.l.b16 %v312
      %v832 = vunpack.c.l.b16 %v313
      %v833 = vunpack.c.h.b16 %v313
      %v834 = vunpack.c.l.b16 %v314
      %v835 = vunpack.c.h.b16 %v314
      %v836 = vunpack.c.l.b16 %v315
      %v837 = vunpack.c.h.b16 %v315
      %v838 = vunpack.c.l.b16 %v316
      %v839 = vunpack.c.h.b16 %v316
      %v840 = vunpack.c.l.b16 %v317
      %v841 = vunpack.c.l.b16 %v318
      %v842 = vunpack.c.h.b16 %v318
      %v843 = vunpack.c.l.b16 %v319
      %v844 = vunpack.c.h.b16 %v319
      %v845 = vunpack.c.l.b16 %v320
      %v846 = vunpack.c.h.b16 %v320
      %v847 = vunpack.c.l.b16 %v321
      %v848 = vunpack.c.h.b16 %v321
      %v849 = vunpack.c.l.b16 %v322
      %v850 = vunpack.c.l.b16 %v323
      %v851 = vunpack.c.h.b16 %v323
      %v852 = vunpack.c.l.b16 %v324
      %v853 = vunpack.c.h.b16 %v324
      %v854 = vunpack.c.l.b16 %v325
      %v855 = vunpack.c.h.b16 %v325
      %v856 = vunpack.c.l.b16 %v326
      %v857 = vunpack.c.h.b16 %v326
      %v858 = vunpack.c.l.b16 %v327
      %v859 = vunpack.c.l.b16 %v328
      %v860 = vunpack.c.h.b16 %v328
      %v861 = vunpack.c.l.b16 %v329
      %v862 = vunpack.c.h.b16 %v329
      %v863 = vunpack.c.l.b16 %v330
      %v864 = vunpack.c.h.b16 %v330
      %v865 = vunpack.c.l.b16 %v331
      %v866 = vunpack.c.h.b16 %v331
      %v867 = vunpack.c.l.b16 %v332
      %v868 = vunpack.c.l.b16 %v333
      %v869 = vunpack.c.h.b16 %v333
      %v870 = vunpack.c.l.b16 %v334
      %v871 = vunpack.c.h.b16 %v334
      %v872 = vunpack.c.l.b16 %v335
      %v873 = vunpack.c.h.b16 %v335
      %v874 = vunpack.c.l.b16 %v336
      %v875 = vunpack.c.h.b16 %v336
      %v876 = vunpack.c.l.b16 %v337
      %v877 = vunpack.c.l.b16 %v338
      %v878 = vunpack.c.h.b16 %v338
      %v879 = vunpack.c.l.b16 %v339
      %v880 = vunpack.c.h.b16 %v339
      %v881 = vunpack.c.l.b16 %v340
      %v882 = vunpack.c.h.b16 %v340
      %v883 = vunpack.c.l.b16 %v341
      %v884 = vunpack.c.h.b16 %v341
      %v885 = vunpack.c.l.b16 %v342
      %v886 = vunpack.c.l.b16 %v343
      %v887 = vunpack.c.h.b16 %v343
      %v888 = vunpack.c.l.b16 %v344
      %v889 = vunpack.c.h.b16 %v344
      %v890 = vunpack.c.l.b16 %v345
      %v891 = vunpack.c.h.b16 %v345
      %v892 = vunpack.c.l.b16 %v346
      %v893 = vunpack.c.h.b16 %v346
      %v894 = vunpack.c.l.b16 %v347
      %v895 = vunpack.c.l.b16 %v348
      %v896 = vunpack.c.h.b16 %v348
      %v897 = vunpack.c.l.b16 %v349
      %v898 = vunpack.c.h.b16 %v349
      %v899 = vunpack.c.l.b16 %v350
      %v900 = vunpack.c.h.b16 %v350
      %v901 = vunpack.c.l.b16 %v351
      %v902 = vunpack.c.h.b16 %v351
      %v903 = vunpack.c.l.b16 %v352
      %v904 = vunpack.c.l.b16 %v353
      %v905 = vunpack.c.h.b16 %v353
      %v906 = vunpack.c.l.b16 %v354
      %v907 = vunpack.c.h.b16 %v354
      %v908 = vunpack.c.l.b16 %v355
      %v909 = vunpack.c.h.b16 %v355
      %v910 = vunpack.c.l.b16 %v356
      %v911 = vunpack.c.h.b16 %v356
      %v912 = vunpack.c.l.b16 %v357
      %v913 = vunpack.c.l.b16 %v358
      %v914 = vunpack.c.h.b16 %v358
      %v915 = vunpack.c.l.b16 %v359
      %v916 = vunpack.c.h.b16 %v359
      %v917 = vunpack.c.l.b16 %v360
      %v918 = vunpack.c.h.b16 %v360
      %v919 = vunpack.c.l.b16 %v361
      %v920 = vunpack.c.h.b16 %v361
      %v921 = vunpack.c.l.b16 %v362
      %v922 = vunpack.c.l.b16 %v363
      %v923 = vunpack.c.h.b16 %v363
      %v924 = vunpack.c.l.b16 %v364
      %v925 = vunpack.c.h.b16 %v364
      %v926 = vunpack.c.l.b16 %v365
      %v927 = vunpack.c.h.b16 %v365
      %v928 = vunpack.c.l.b16 %v366
      %v929 = vunpack.c.h.b16 %v366
      %v930 = vunpack.c.l.b16 %v367
      %v931 = vunpack.c.l.b16 %v368
      %v932 = vunpack.c.h.b16 %v368
      %v933 = vunpack.c.l.b16 %v369
      %v934 = vunpack.c.h.b16 %v369
      %v935 = vunpack.c.l.b16 %v370
      %v936 = vunpack.c.h.b16 %v370
      %v937 = vunpack.c.l.b16 %v371
      %v938 = vunpack.c.h.b16 %v371
      %v939 = vunpack.c.l.b16 %v372
      %v940 = vunpack.c.l.b16 %v373
      %v941 = vunpack.c.h.b16 %v373
      %v942 = vunpack.c.l.b16 %v374
      %v943 = vunpack.c.h.b16 %v374
      %v944 = vunpack.c.l.b16 %v375
      %v945 = vunpack.c.h.b16 %v375
      %v946 = vunpack.c.l.b16 %v376
      %v947 = vunpack.c.h.b16 %v376
      %v948 = vunpack.c.l.b16 %v377
      %v949 = vunpack.c.l.b16 %v378
      %v950 = vunpack.c.h.b16 %v378
      %v951 = vunpack.c.l.b16 %v379
      %v952 = vunpack.c.h.b16 %v379
      %v953 = vunpack.c.l.b16 %v380
      %v954 = vunpack.c.h.b16 %v380
      %v955 = vunpack.c.l.b16 %v381
      %v956 = vunpack.c.h.b16 %v381
      %v957 = vunpack.c.l.b16 %v382
      %v958 = vunpack.c.l.b16 %v383
      %v959 = vunpack.c.h.b16 %v383
      %v960 = vunpack.c.l.b16 %v384
      %v961 = vunpack.c.h.b16 %v384
      %v962 = vunpack.c.l.b16 %v385
      %v963 = vunpack.c.h.b16 %v385
      %v964 = vunpack.c.l.b16 %v386
      %v965 = vunpack.c.h.b16 %v386
      %v966 = vunpack.c.l.b16 %v387
      %v967 = vunpack.c.l.b16 %v388
      %v968 = vunpack.c.h.b16 %v388
      %v969 = vunpack.c.l.b16 %v389
      %v970 = vunpack.c.h.b16 %v389
      %v971 = vunpack.c.l.b16 %v390
      %v972 = vunpack.c.h.b16 %v390
      %v973 = vunpack.c.l.b16 %v391
      %v974 = vunpack.c.h.b16 %v391
      %v975 = vunpack.c.l.b16 %v392
      %v976 = vunpack.c.l.b16 %v393
      %v977 = vunpack.c.h.b16 %v393
      %v978 = vunpack.c.l.b16 %v394
      %v979 = vunpack.c.h.b16 %v394
      %v980 = vunpack.c.l.b16 %v395
      %v981 = vunpack.c.h.b16 %v395
      %v982 = vunpack.c.l.b16 %v396
      %v983 = vunpack.c.h.b16 %v396
      %v984 = vunpack.c.l.b16 %v397
      %v985 = vunpack.c.l.b16 %v398
      %v986 = vunpack.c.h.b16 %v398
      %v987 = vunpack.c.l.b16 %v399
      %v988 = vunpack.c.h.b16 %v399
      %v989 = vunpack.c.l.b16 %v400
      %v990 = vunpack.c.h.b16 %v400
      %v991 = vunpack.c.l.b16 %v401
      %v992 = vunpack.c.h.b16 %v401
      %v993 = vunpack.c.l.b16 %v402
      %v994 = vunpack.c.l.b16 %v403
      %v995 = vunpack.c.h.b16 %v403
      %v996 = vunpack.c.l.b16 %v404
      %v997 = vunpack.c.h.b16 %v404
      %v998 = vunpack.c.l.b16 %v405
      %v999 = vunpack.c.h.b16 %v405
      %v1000 = vunpack.c.l.b16 %v406
      %v1001 = vunpack.c.h.b16 %v406
      %v1002 = vunpack.c.l.b16 %v407
      %v1003 = vunpack.c.l.b16 %v408
      %v1004 = vunpack.c.h.b16 %v408
      %v1005 = vunpack.c.l.b16 %v409
      %v1006 = vunpack.c.h.b16 %v409
      %v1007 = vunpack.c.l.b16 %v410
      %v1008 = vunpack.c.h.b16 %v410
      %v1009 = vunpack.c.l.b16 %v411
      %v1010 = vunpack.c.h.b16 %v411
      %v1011 = vunpack.c.l.b16 %v412
      %v1012 = vpack.c.b16 %v733, %v724
      %v1013 = vpack.c.b16 %v734, %v725
      %v1014 = vpack.c.b16 %v735, %v726
      %v1015 = vpack.c.b16 %v736, %v727
      %v1016 = vpack.c.b16 %v737, %v728
      %v1017 = vpack.c.b16 %v738, %v729
      %v1018 = vpack.c.b16 %v739, %v730
      %v1019 = vpack.c.b16 %v740, %v731
      %v1020 = vpack.c.b16 %v741, %v732
      %v1021 = vpack.c.b16 %v751, %v742
      %v1022 = vpack.c.b16 %v752, %v743
      %v1023 = vpack.c.b16 %v753, %v744
      %v1024 = vpack.c.b16 %v754, %v745
      %v1025 = vpack.c.b16 %v755, %v746
      %v1026 = vpack.c.b16 %v756, %v747
      %v1027 = vpack.c.b16 %v757, %v748
      %v1028 = vpack.c.b16 %v758, %v749
      %v1029 = vpack.c.b16 %v759, %v750
      %v1030 = vpack.c.b16 %v769, %v760
      %v1031 = vpack.c.b16 %v770, %v761
      %v1032 = vpack.c.b16 %v771, %v762
      %v1033 = vpack.c.b16 %v772, %v763
      %v1034 = vpack.c.b16 %v773, %v764
      %v1035 = vpack.c.b16 %v774, %v765
      %v1036 = vpack.c.b16 %v775, %v766
      %v1037 = vpack.c.b16 %v776, %v767
      %v1038 = vpack.c.b16 %v777, %v768
      %v1039 = vpack.c.b16 %v787, %v778
      %v1040 = vpack.c.b16 %v788, %v779
      %v1041 = vpack.c.b16 %v789, %v780
      %v1042 = vpack.c.b16 %v790, %v781
      %v1043 = vpack.c.b16 %v791, %v782
      %v1044 = vpack.c.b16 %v792, %v783
      %v1045 = vpack.c.b16 %v793, %v784
      %v1046 = vpack.c.b16 %v794, %v785
      %v1047 = vpack.c.b16 %v795, %v786
      %v1048 = vpack.c.b16 %v805, %v796
      %v1049 = vpack.c.b16 %v806, %v797
      %v1050 = vpack.c.b16 %v807, %v798
      %v1051 = vpack.c.b16 %v808, %v799
      %v1052 = vpack.c.b16 %v809, %v800
      %v1053 = vpack.c.b16 %v810, %v801
      %v1054 = vpack.c.b16 %v811, %v802
      %v1055 = vpack.c.b16 %v812, %v803
      %v1056 = vpack.c.b16 %v813, %v804
      %v1057 = vpack.c.b16 %v823, %v814
      %v1058 = vpack.c.b16 %v824, %v815
      %v1059 = vpack.c.b16 %v825, %v816
      %v1060 = vpack.c.b16 %v826, %v817
      %v1061 = vpack.c.b16 %v827, %v818
      %v1062 = vpack.c.b16 %v828, %v819
      %v1063 = vpack.c.b16 %v829, %v820
      %v1064 = vpack.c.b16 %v830, %v821
      %v1065 = vpack.c.b16 %v831, %v822
      %v1066 = vpack.c.b16 %v841, %v832
      %v1067 = vpack.c.b16 %v842, %v833
      %v1068 = vpack.c.b16 %v843, %v834
      %v1069 = vpack.c.b16 %v844, %v835
      %v1070 = vpack.c.b16 %v845, %v836
      %v1071 = vpack.c.b16 %v846, %v837
      %v1072 = vpack.c.b16 %v847, %v838
      %v1073 = vpack.c.b16 %v848, %v839
      %v1074 = vpack.c.b16 %v849, %v840
      %v1075 = vpack.c.b16 %v859, %v850
      %v1076 = vpack.c.b16 %v860, %v851
      %v1077 = vpack.c.b16 %v861, %v852
      %v1078 = vpack.c.b16 %v862, %v853
      %v1079 = vpack.c.b16 %v863, %v854
      %v1080 = vpack.c.b16 %v864, %v855
      %v1081 = vpack.c.b16 %v865, %v856
      %v1082 = vpack.c.b16 %v866, %v857
      %v1083 = vpack.c.b16 %v867, %v858
      %v1084 = vpack.c.b16 %v877, %v868
      %v1085 = vpack.c.b16 %v878, %v869
      %v1086 = vpack.c.b16 %v879, %v870
      %v1087 = vpack.c.b16 %v880, %v871
      %v1088 = vpack.c.b16 %v881, %v872
      %v1089 = vpack.c.b16 %v882, %v873
      %v1090 = vpack.c.b16 %v883, %v874
      %v1091 = vpack.c.b16 %v884, %v875
      %v1092 = vpack.c.b16 %v885, %v876
      %v1093 = vpack.c.b16 %v895, %v886
      %v1094 = vpack.c.b16 %v896, %v887
      %v1095 = vpack.c.b16 %v897, %v888
      %v1096 = vpack.c.b16 %v898, %v889
      %v1097 = vpack.c.b16 %v899, %v890
      %v1098 = vpack.c.b16 %v900, %v891
      %v1099 = vpack.c.b16 %v901, %v892
      %v1100 = vpack.c.b16 %v902, %v893
      %v1101 = vpack.c.b16 %v903, %v894
      %v1102 = vpack.c.b16 %v913, %v904
      %v1103 = vpack.c.b16 %v914, %v905
      %v1104 = vpack.c.b16 %v915, %v906
      %v1105 = vpack.c.b16 %v916, %v907
      %v1106 = vpack.c.b16 %v917, %v908
      %v1107 = vpack.c.b16 %v918, %v909
      %v1108 = vpack.c.b16 %v919, %v910
      %v1109 = vpack.c.b16 %v920, %v911
      %v1110 = vpack.c.b16 %v921, %v912
      %v1111 = vpack.c.b16 %v931, %v922
      %v1112 = vpack.c.b16 %v932, %v923
      %v1113 = vpack.c.b16 %v933, %v924
      %v1114 = vpack.c.b16 %v934, %v925
      %v1115 = vpack.c.b16 %v935, %v926
      %v1116 = vpack.c.b16 %v936, %v927
      %v1117 = vpack.c.b16 %v937, %v928
      %v1118 = vpack.c.b16 %v938, %v929
      %v1119 = vpack.c.b16 %v939, %v930
      %v1120 = vpack.c.b16 %v949, %v940
      %v1121 = vpack.c.b16 %v950, %v941
      %v1122 = vpack.c.b16 %v951, %v942
      %v1123 = vpack.c.b16 %v952, %v943
      %v1124 = vpack.c.b16 %v953, %v944
      %v1125 = vpack.c.b16 %v954, %v945
      %v1126 = vpack.c.b16 %v955, %v946
      %v1127 = vpack.c.b16 %v956, %v947
      %v1128 = vpack.c.b16 %v957, %v948
      %v1129 = vpack.c.b16 %v967, %v958
      %v1130 = vpack.c.b16 %v968, %v959
      %v1131 = vpack.c.b16 %v969, %v960
      %v1132 = vpack.c.b16 %v970, %v961
      %v1133 = vpack.c.b16 %v971, %v962
      %v1134 = vpack.c.b16 %v972, %v963
      %v1135 = vpack.c.b16 %v973, %v964
      %v1136 = vpack.c.b16 %v974, %v965
      %v1137 = vpack.c.b16 %v975, %v966
      %v1138 = vpack.c.b16 %v985, %v976
      %v1139 = vpack.c.b16 %v986, %v977
      %v1140 = vpack.c.b16 %v987, %v978
      %v1141 = vpack.c.b16 %v988, %v979
      %v1142 = vpack.c.b16 %v989, %v980
      %v1143 = vpack.c.b16 %v990, %v981
      %v1144 = vpack.c.b16 %v991, %v982
      %v1145 = vpack.c.b16 %v992, %v983
      %v1146 = vpack.c.b16 %v993, %v984
      %v1147 = vpack.c.b16 %v1003, %v994
      %v1148 = vpack.c.b16 %v1004, %v995
      %v1149 = vpack.c.b16 %v1005, %v996
      %v1150 = vpack.c.b16 %v1006, %v997
      %v1151 = vpack.c.b16 %v1007, %v998
      %v1152 = vpack.c.b16 %v1008, %v999
      %v1153 = vpack.c.b16 %v1009, %v1000
      %v1154 = vpack.c.b16 %v1010, %v1001
      %v1155 = vpack.c.b16 %v1011, %v1002
      %v1444 = vunpack.c.l.b16 %v413
      %v1445 = vunpack.c.l.b16 %v414
      %v1446 = vunpack.c.l.b16 %v415
      %v1447 = vunpack.c.l.b16 %v416
      %v1448 = vunpack.c.l.b16 %v417
      %v1449 = vunpack.c.l.b16 %v418
      %v1450 = vunpack.c.l.b16 %v419
      %v1451 = vunpack.c.l.b16 %v420
      %v1452 = vunpack.c.l.b16 %v421
      %v1453 = vunpack.c.l.b16 %v422
      %v1454 = vunpack.c.l.b16 %v423
      %v1455 = vunpack.c.l.b16 %v424
      %v1456 = vunpack.c.l.b16 %v425
      %v1457 = vunpack.c.l.b16 %v426
      %v1458 = vunpack.c.l.b16 %v427
      %v1459 = vunpack.c.l.b16 %v428
      %v1460 = vunpack.c.l.b16 %v429
      %v1461 = vunpack.c.l.b16 %v430
      %v1462 = vunpack.c.l.b16 %v431
      %v1463 = vunpack.c.l.b16 %v432
      %v1464 = vunpack.c.l.b16 %v433
      %v1465 = vunpack.c.l.b16 %v434
      %v1466 = vunpack.c.l.b16 %v435
      %v1467 = vunpack.c.l.b16 %v436
      %v1468 = vunpack.c.l.b16 %v437
      %v1469 = vunpack.c.l.b16 %v438
      %v1470 = vunpack.c.l.b16 %v439
      %v1471 = vunpack.c.l.b16 %v440
      %v1472 = vunpack.c.l.b16 %v441
      %v1473 = vunpack.c.l.b16 %v442
      %v1474 = vunpack.c.l.b16 %v443
      %v1475 = vunpack.c.l.b16 %v444
      %v1476 = vunpack.c.l.b16 %v445
      %v1477 = vunpack.c.l.b16 %v446
      %v1478 = vunpack.c.l.b16 %v447
      %v1479 = vunpack.c.l.b16 %v448
      %v1480 = vunpack.c.l.b16 %v449
      %v1481 = vunpack.c.l.b16 %v450
      %v1482 = vunpack.c.l.b16 %v451
      %v1483 = vunpack.c.l.b16 %v452
      %v1484 = vunpack.c.l.b16 %v453
      %v1485 = vunpack.c.l.b16 %v454
      %v1486 = vunpack.c.l.b16 %v455
      %v1487 = vunpack.c.l.b16 %v456
      %v1488 = vunpack.c.l.b16 %v457
      %v1489 = vunpack.c.l.b16 %v458
      %v1490 = vunpack.c.l.b16 %v459
      %v1491 = vunpack.c.l.b16 %v460
      %v1492 = vunpack.c.l.b16 %v461
      %v1493 = vunpack.c.l.b16 %v462
      %v1494 = vunpack.c.l.b16 %v463
      %v1495 = vunpack.c.l.b16 %v464
      %v1496 = vunpack.c.l.b16 %v465
      %v1497 = vunpack.c.l.b16 %v466
      %v1498 = vunpack.c.l.b16 %v467
      %v1499 = vunpack.c.l.b16 %v468
      %v1500 = vunpack.c.l.b16 %v469
      %v1501 = vunpack.c.l.b16 %v470
      %v1502 = vunpack.c.l.b16 %v471
      %v1503 = vunpack.c.l.b16 %v472
      %v1504 = vunpack.c.l.b16 %v473
      %v1505 = vunpack.c.l.b16 %v474
      %v1506 = vunpack.c.l.b16 %v475
      %v1507 = vunpack.c.l.b16 %v476
      %v1508 = vunpack.c.l.b16 %v477
      %v1509 = vunpack.c.l.b16 %v478
      %v1510 = vunpack.c.l.b16 %v479
      %v1511 = vunpack.c.l.b16 %v480
      %v1512 = vunpack.c.l.b16 %v481
      %v1513 = vunpack.c.l.b16 %v482
      %v1514 = vunpack.c.l.b16 %v483
      %v1515 = vunpack.c.l.b16 %v484
      %v1516 = vunpack.c.l.b16 %v485
      %v1517 = vunpack.c.l.b16 %v486
      %v1518 = vunpack.c.l.b16 %v487
      %v1519 = vunpack.c.l.b16 %v488
      %v1520 = vunpack.c.l.b16 %v489
      %v1521 = vunpack.c.l.b16 %v490
      %v1522 = vunpack.c.l.b16 %v491
      %v1523 = vunpack.c.l.b16 %v492
      %v1524 = vunpack.c.l.b16 %v493
      %v1525 = vunpack.c.l.b16 %v494
      %v1526 = vunpack.c.l.b16 %v495
      %v1527 = vunpack.c.l.b16 %v496
      %v1528 = vunpack.c.l.b16 %v497
      %v1529 = vunpack.c.l.b16 %v498
      %v1530 = vunpack.c.l.b16 %v499
      %v1531 = vunpack.c.l.b16 %v500
      %v1532 = vunpack.c.l.b16 %v501
      %v1533 = vunpack.c.l.b16 %v502
      %v1534 = vunpack.c.l.b16 %v503
      %v1535 = vunpack.c.l.b16 %v504
      %v1536 = vunpack.c.l.b16 %v505
      %v1537 = vunpack.c.l.b16 %v506
      %v1538 = vunpack.c.l.b16 %v507
      %v1539 = vunpack.c.l.b16 %v508
      %v1540 = vunpack.c.l.b16 %v509
      %v1541 = vunpack.c.l.b16 %v510
      %v1542 = vunpack.c.l.b16 %v511
      %v1543 = vunpack.c.l.b16 %v512
      %v1544 = vunpack.c.l.b16 %v513
      %v1545 = vunpack.c.l.b16 %v514
      %v1546 = vunpack.c.l.b16 %v515
      %v1547 = vunpack.c.l.b16 %v516
      %v1548 = vunpack.c.l.b16 %v517
      %v1549 = vunpack.c.l.b16 %v518
      %v1550 = vunpack.c.l.b16 %v519
      %v1551 = vunpack.c.l.b16 %v520
      %v1552 = vunpack.c.l.b16 %v521
      %v1553 = vunpack.c.l.b16 %v522
      %v1554 = vunpack.c.l.b16 %v523
      %v1555 = vunpack.c.l.b16 %v524
      %v1556 = vunpack.c.l.b16 %v525
      %v1557 = vunpack.c.l.b16 %v526
      %v1558 = vunpack.c.l.b16 %v527
      %v1559 = vunpack.c.l.b16 %v528
      %v1560 = vunpack.c.l.b16 %v529
      %v1561 = vunpack.c.l.b16 %v530
      %v1562 = vunpack.c.l.b16 %v531
      %v1563 = vunpack.c.l.b16 %v532
      %v1564 = vunpack.c.l.b16 %v533
      %v1565 = vunpack.c.l.b16 %v534
      %v1566 = vunpack.c.l.b16 %v535
      %v1567 = vunpack.c.l.b16 %v536
      %v1568 = vunpack.c.l.b16 %v537
      %v1569 = vunpack.c.l.b16 %v538
      %v1570 = vunpack.c.l.b16 %v539
      %v1571 = vunpack.c.l.b16 %v540
      %v1572 = vunpack.c.l.b16 %v541
      %v1573 = vunpack.c.l.b16 %v542
      %v1574 = vunpack.c.l.b16 %v543
      %v1575 = vunpack.c.l.b16 %v544
      %v1576 = vunpack.c.l.b16 %v545
      %v1577 = vunpack.c.l.b16 %v546
      %v1578 = vunpack.c.l.b16 %v547
      %v1579 = vunpack.c.l.b16 %v548
      %v1580 = vunpack.c.l.b16 %v549
      %v1581 = vunpack.c.l.b16 %v550
      %v1582 = vunpack.c.l.b16 %v551
      %v1583 = vunpack.c.l.b16 %v552
      %v1584 = vunpack.c.l.b16 %v553
      %v1585 = vunpack.c.l.b16 %v554
      %v1586 = vunpack.c.l.b16 %v555
      %v1587 = vunpack.c.l.b16 %v556
      %v1588 = vpack.c.b16 %v1445, %v1444
      %v1589 = vpack.c.b16 %v1447, %v1446
      %v1590 = vpack.c.b16 %v1449, %v1448
      %v1591 = vpack.c.b16 %v1451, %v1450
      %v1592 = vpack.c.b16 %v1453, %v1452
      %v1593 = vpack.c.b16 %v1455, %v1454
      %v1594 = vpack.c.b16 %v1457, %v1456
      %v1595 = vpack.c.b16 %v1459, %v1458
      %v1596 = vpack.c.b16 %v1461, %v1460
      %v1597 = vpack.c.b16 %v1463, %v1462
      %v1598 = vpack.c.b16 %v1465, %v1464
      %v1599 = vpack.c.b16 %v1467, %v1466
      %v1600 = vpack.c.b16 %v1469, %v1468
      %v1601 = vpack.c.b16 %v1471, %v1470
      %v1602 = vpack.c.b16 %v1473, %v1472
      %v1603 = vpack.c.b16 %v1475, %v1474
      %v1604 = vpack.c.b16 %v1477, %v1476
      %v1605 = vpack.c.b16 %v1479, %v1478
      %v1606 = vpack.c.b16 %v1481, %v1480
      %v1607 = vpack.c.b16 %v1483, %v1482
      %v1608 = vpack.c.b16 %v1485, %v1484
      %v1609 = vpack.c.b16 %v1487, %v1486
      %v1610 = vpack.c.b16 %v1489, %v1488
      %v1611 = vpack.c.b16 %v1491, %v1490
      %v1612 = vpack.c.b16 %v1493, %v1492
      %v1613 = vpack.c.b16 %v1495, %v1494
      %v1614 = vpack.c.b16 %v1497, %v1496
      %v1615 = vpack.c.b16 %v1499, %v1498
      %v1616 = vpack.c.b16 %v1501, %v1500
      %v1617 = vpack.c.b16 %v1503, %v1502
      %v1618 = vpack.c.b16 %v1505, %v1504
      %v1619 = vpack.c.b16 %v1507, %v1506
      %v1620 = vpack.c.b16 %v1509, %v1508
      %v1621 = vpack.c.b16 %v1511, %v1510
      %v1622 = vpack.c.b16 %v1513, %v1512
      %v1623 = vpack.c.b16 %v1515, %v1514
      %v1624 = vpack.c.b16 %v1517, %v1516
      %v1625 = vpack.c.b16 %v1519, %v1518
      %v1626 = vpack.c.b16 %v1521, %v1520
      %v1627 = vpack.c.b16 %v1523, %v1522
      %v1628 = vpack.c.b16 %v1525, %v1524
      %v1629 = vpack.c.b16 %v1527, %v1526
      %v1630 = vpack.c.b16 %v1529, %v1528
      %v1631 = vpack.c.b16 %v1531, %v1530
      %v1632 = vpack.c.b16 %v1533, %v1532
      %v1633 = vpack.c.b16 %v1535, %v1534
      %v1634 = vpack.c.b16 %v1537, %v1536
      %v1635 = vpack.c.b16 %v1539, %v1538
      %v1636 = vpack.c.b16 %v1541, %v1540
      %v1637 = vpack.c.b16 %v1543, %v1542
      %v1638 = vpack.c.b16 %v1545, %v1544
      %v1639 = vpack.c.b16 %v1547, %v1546
      %v1640 = vpack.c.b16 %v1549, %v1548
      %v1641 = vpack.c.b16 %v1551, %v1550
      %v1642 = vpack.c.b16 %v1553, %v1552
      %v1643 = vpack.c.b16 %v1555, %v1554
      %v1644 = vpack.c.b16 %v1557, %v1556
      %v1645 = vpack.c.b16 %v1559, %v1558
      %v1646 = vpack.c.b16 %v1561, %v1560
      %v1647 = vpack.c.b16 %v1563, %v1562
      %v1648 = vpack.c.b16 %v1565, %v1564
      %v1649 = vpack.c.b16 %v1567, %v1566
      %v1650 = vpack.c.b16 %v1569, %v1568
      %v1651 = vpack.c.b16 %v1571, %v1570
      %v1652 = vpack.c.b16 %v1573, %v1572
      %v1653 = vpack.c.b16 %v1575, %v1574
      %v1654 = vpack.c.b16 %v1577, %v1576
      %v1655 = vpack.c.b16 %v1579, %v1578
      %v1656 = vpack.c.b16 %v1581, %v1580
      %v1657 = vpack.c.b16 %v1583, %v1582
      %v1658 = vpack.c.b16 %v1585, %v1584
      %v1659 = vpack.c.b16 %v1587, %v1586
      %1732 = vmatprep.subr.bf16.mxu0 0
      %1733 = vmatpush1.bf16.msra.mxu0 %v1588
      %1734 = vmatprep.subr.bf16.mxu0 0
      %1735 = vmatpush1.bf16.msra.mxu0 %v1589
      %1736 = vmatprep.subr.bf16.mxu0 0
      %1737 = vmatpush1.bf16.msra.mxu0 %v1590
      %1738 = vmatprep.subr.bf16.mxu0 0
      %1739 = vmatpush1.bf16.msra.mxu0 %v1591
      %1740 = vmatprep.subr.bf16.mxu0 0
      %1741 = vmatpush1.bf16.msra.mxu0 %v1592
      %1742 = vmatprep.subr.bf16.mxu0 0
      %1743 = vmatpush1.bf16.msra.mxu0 %v1593
      %1744 = vmatprep.subr.bf16.mxu0 0
      %1745 = vmatpush1.bf16.msra.mxu0 %v1594
      %1746 = vmatprep.subr.bf16.mxu0 0
      %1747 = vmatpush1.bf16.msra.mxu0 %v1595
      %1748 = vmatprep.subr.bf16.mxu0 0
      %1749 = vmatpush1.bf16.msra.mxu0 %v1596
      %1750 = vmatprep.subr.bf16.mxu0 0
      %1751 = vmatpush1.bf16.msra.mxu0 %v1597
      %1752 = vmatprep.subr.bf16.mxu0 0
      %1753 = vmatpush1.bf16.msra.mxu0 %v1598
      %1754 = vmatprep.subr.bf16.mxu0 0
      %1755 = vmatpush1.bf16.msra.mxu0 %v1599
      %1756 = vmatprep.subr.bf16.mxu0 0
      %1757 = vmatpush1.bf16.msra.mxu0 %v1600
      %1758 = vmatprep.subr.bf16.mxu0 0
      %1759 = vmatpush1.bf16.msra.mxu0 %v1601
      %1760 = vmatprep.subr.bf16.mxu0 0
      %1761 = vmatpush1.bf16.msra.mxu0 %v1602
      %1762 = vmatprep.subr.bf16.mxu0 0
      %1763 = vmatpush1.bf16.msra.mxu0 %v1603
      %1764 = vmatprep.mubr.bf16.mxu0 %v1013
      %1765 = vmatmul.mubr.bf16.gmra.mrb[0].mxu0 %v1012
      %v1766 = vpop.f32.mrb[0].mxu0
      %v1767 = vadd.f32 %v562, %v1766
      %v1768 = vpop.f32.mrb[0].mxu0
      %v1769 = vpop.f32.mrb[0].mxu0
      %v1770 = vadd.f32 %v562, %v1769
      %v1771 = vpop.f32.mrb[0].mxu0
      %1772 = vmatprep.mubr.bf16.mxu0 %v1022
      %1773 = vmatmul.mubr.bf16.gmra.mrb[0].mxu0 %v1021
      %v1774 = vpop.f32.mrb[0].mxu0
      %v1775 = vadd.f32 %v562, %v1774
      %v1776 = vpop.f32.mrb[0].mxu0
      %v1777 = vpop.f32.mrb[0].mxu0
      %v1778 = vadd.f32 %v562, %v1777
      %v1779 = vpop.f32.mrb[0].mxu0
      %1780 = vmatprep.mubr.bf16.mxu0 %v1031
      %1781 = vmatmul.mubr.bf16.gmra.mrb[0].mxu0 %v1030
      %v1782 = vpop.f32.mrb[0].mxu0
      %v1783 = vadd.f32 %v562, %v1782
      %v1784 = vpop.f32.mrb[0].mxu0
      %v1785 = vpop.f32.mrb[0].mxu0
      %v1786 = vadd.f32 %v562, %v1785
      %v1787 = vpop.f32.mrb[0].mxu0
      %1788 = vmatprep.mubr.bf16.mxu0 %v1040
      %1789 = vmatmul.mubr.bf16.gmra.mrb[0].mxu0 %v1039
      %v1790 = vpop.f32.mrb[0].mxu0
      %v1791 = vadd.f32 %v562, %v1790
      %v1792 = vpop.f32.mrb[0].mxu0
      %v1793 = vpop.f32.mrb[0].mxu0
      %v1794 = vadd.f32 %v562, %v1793
      %v1795 = vpop.f32.mrb[0].mxu0
      %1796 = vmatprep.mubr.bf16.mxu0 %v1049
      %1797 = vmatmul.mubr.bf16.gmra.mrb[0].mxu0 %v1048
      %v1798 = vpop.f32.mrb[0].mxu0
      %v1799 = vadd.f32 %v562, %v1798
      %v1800 = vpop.f32.mrb[0].mxu0
      %v1801 = vpop.f32.mrb[0].mxu0
      %v1802 = vadd.f32 %v562, %v1801
      %v1803 = vpop.f32.mrb[0].mxu0
      %1804 = vmatprep.mubr.bf16.mxu0 %v1058
      %1805 = vmatmul.mubr.bf16.gmra.mrb[0].mxu0 %v1057
      %v1806 = vpop.f32.mrb[0].mxu0
      %v1807 = vadd.f32 %v562, %v1806
      %v1808 = vpop.f32.mrb[0].mxu0
      %v1809 = vpop.f32.mrb[0].mxu0
      %v1810 = vadd.f32 %v562, %v1809
      %v1811 = vpop.f32.mrb[0].mxu0
      %1812 = vmatprep.mubr.bf16.mxu0 %v1067
      %1813 = vmatmul.mubr.bf16.gmra.mrb[0].mxu0 %v1066
      %v1814 = vpop.f32.mrb[0].mxu0
      %v1815 = vadd.f32 %v562, %v1814
      %v1816 = vpop.f32.mrb[0].mxu0
      %v1817 = vpop.f32.mrb[0].mxu0
      %v1818 = vadd.f32 %v562, %v1817
      %v1819 = vpop.f32.mrb[0].mxu0
      %1820 = vmatprep.mubr.bf16.mxu0 %v1076
      %1821 = vmatmul.mubr.bf16.gmra.mrb[0].mxu0 %v1075
      %v1822 = vpop.f32.mrb[0].mxu0
      %v1823 = vadd.f32 %v562, %v1822
      %v1824 = vpop.f32.mrb[0].mxu0
      %v1825 = vpop.f32.mrb[0].mxu0
      %v1826 = vadd.f32 %v562, %v1825
      %v1827 = vpop.f32.mrb[0].mxu0
      %1828 = vmatprep.mubr.bf16.mxu0 %v1085
      %1829 = vmatmul.mubr.bf16.gmra.mrb[0].mxu0 %v1084
      %v1830 = vpop.f32.mrb[0].mxu0
      %v1831 = vadd.f32 %v562, %v1830
      %v1832 = vpop.f32.mrb[0].mxu0
      %v1833 = vpop.f32.mrb[0].mxu0
      %v1834 = vadd.f32 %v562, %v1833
      %v1835 = vpop.f32.mrb[0].mxu0
      %1836 = vmatprep.mubr.bf16.mxu0 %v1094
      %1837 = vmatmul.mubr.bf16.gmra.mrb[0].mxu0 %v1093
      %v1838 = vpop.f32.mrb[0].mxu0
      %v1839 = vadd.f32 %v562, %v1838
      %v1840 = vpop.f32.mrb[0].mxu0
      %v1841 = vpop.f32.mrb[0].mxu0
      %v1842 = vadd.f32 %v562, %v1841
      %v1843 = vpop.f32.mrb[0].mxu0
      %1844 = vmatprep.mubr.bf16.mxu0 %v1103
      %1845 = vmatmul.mubr.bf16.gmra.mrb[0].mxu0 %v1102
      %v1846 = vpop.f32.mrb[0].mxu0
      %v1847 = vadd.f32 %v562, %v1846
      %v1848 = vpop.f32.mrb[0].mxu0
      %v1849 = vpop.f32.mrb[0].mxu0
      %v1850 = vadd.f32 %v562, %v1849
      %v1851 = vpop.f32.mrb[0].mxu0
      %1852 = vmatprep.mubr.bf16.mxu0 %v1112
      %1853 = vmatmul.mubr.bf16.gmra.mrb[0].mxu0 %v1111
      %v1854 = vpop.f32.mrb[0].mxu0
      %v1855 = vadd.f32 %v562, %v1854
      %v1856 = vpop.f32.mrb[0].mxu0
      %v1857 = vpop.f32.mrb[0].mxu0
      %v1858 = vadd.f32 %v562, %v1857
      %v1859 = vpop.f32.mrb[0].mxu0
      %1860 = vmatprep.mubr.bf16.mxu0 %v1121
      %1861 = vmatmul.mubr.bf16.gmra.mrb[0].mxu0 %v1120
      %v1862 = vpop.f32.mrb[0].mxu0
      %v1863 = vadd.f32 %v562, %v1862
      %v1864 = vpop.f32.mrb[0].mxu0
      %v1865 = vpop.f32.mrb[0].mxu0
      %v1866 = vadd.f32 %v562, %v1865
      %v1867 = vpop.f32.mrb[0].mxu0
      %1868 = vmatprep.mubr.bf16.mxu0 %v1130
      %1869 = vmatmul.mubr.bf16.gmra.mrb[0].mxu0 %v1129
      %v1870 = vpop.f32.mrb[0].mxu0
      %v1871 = vadd.f32 %v562, %v1870
      %v1872 = vpop.f32.mrb[0].mxu0
      %v1873 = vpop.f32.mrb[0].mxu0
      %v1874 = vadd.f32 %v562, %v1873
      %v1875 = vpop.f32.mrb[0].mxu0
      %1876 = vmatprep.mubr.bf16.mxu0 %v1139
      %1877 = vmatmul.mubr.bf16.gmra.mrb[0].mxu0 %v1138
      %v1878 = vpop.f32.mrb[0].mxu0
      %v1879 = vadd.f32 %v562, %v1878
      %v1880 = vpop.f32.mrb[0].mxu0
      %v1881 = vpop.f32.mrb[0].mxu0
      %v1882 = vadd.f32 %v562, %v1881
      %v1883 = vpop.f32.mrb[0].mxu0
      %1884 = vmatprep.mubr.bf16.mxu0 %v1148
      %1885 = vmatmul.mubr.bf16.gmra.mrb[0].mxu0 %v1147
      %v1886 = vpop.f32.mrb[0].mxu0
      %v1887 = vadd.f32 %v562, %v1886
      %v1888 = vpop.f32.mrb[0].mxu0
      %v1889 = vpop.f32.mrb[0].mxu0
      %v1890 = vadd.f32 %v562, %v1889
      %v1891 = vpop.f32.mrb[0].mxu0
      %1892 = vdwg.mxu0
      %1893 = vmatprep.subr.bf16.mxu0 0
      %1894 = vmatpush1.bf16.msra.mxu0 %v1604
      %1895 = vmatprep.subr.bf16.mxu0 0
      %1896 = vmatpush1.bf16.msra.mxu0 %v1605
      %1897 = vmatprep.subr.bf16.mxu0 0
      %1898 = vmatpush1.bf16.msra.mxu0 %v1606
      %1899 = vmatprep.subr.bf16.mxu0 0
      %1900 = vmatpush1.bf16.msra.mxu0 %v1607
      %1901 = vmatprep.subr.bf16.mxu0 0
      %1902 = vmatpush1.bf16.msra.mxu0 %v1608
      %1903 = vmatprep.subr.bf16.mxu0 0
      %1904 = vmatpush1.bf16.msra.mxu0 %v1609
      %1905 = vmatprep.subr.bf16.mxu0 0
      %1906 = vmatpush1.bf16.msra.mxu0 %v1610
      %1907 = vmatprep.subr.bf16.mxu0 0
      %1908 = vmatpush1.bf16.msra.mxu0 %v1611
      %1909 = vmatprep.subr.bf16.mxu0 0
      %1910 = vmatpush1.bf16.msra.mxu0 %v1612
      %1911 = vmatprep.subr.bf16.mxu0 0
      %1912 = vmatpush1.bf16.msra.mxu0 %v1613
      %1913 = vmatprep.subr.bf16.mxu0 0
      %1914 = vmatpush1.bf16.msra.mxu0 %v1614
      %1915 = vmatprep.subr.bf16.mxu0 0
      %1916 = vmatpush1.bf16.msra.mxu0 %v1615
      %1917 = vmatprep.subr.bf16.mxu0 0
      %1918 = vmatpush1.bf16.msra.mxu0 %v1616
      %1919 = vmatprep.subr.bf16.mxu0 0
      %1920 = vmatpush1.bf16.msra.mxu0 %v1617
      %1921 = vmatprep.subr.bf16.mxu0 0
      %1922 = vmatpush1.bf16.msra.mxu0 %v1618
      %1923 = vmatprep.subr.bf16.mxu0 0
      %1924 = vmatpush1.bf16.msra.mxu0 %v1619
      %1925 = vmatprep.mubr.bf16.mxu0 %v1015
      %1926 = vmatmul.mubr.bf16.gmra.mrb[0].mxu0 %v1014
      %v1927 = vpop.f32.mrb[0].mxu0
      %v1928 = vadd.f32 %v1767, %v1927
      %v1929 = vpop.f32.mrb[0].mxu0
      %v1930 = vpop.f32.mrb[0].mxu0
      %v1931 = vadd.f32 %v1770, %v1930
      %v1932 = vpop.f32.mrb[0].mxu0
      %1933 = vmatprep.mubr.bf16.mxu0 %v1024
      %1934 = vmatmul.mubr.bf16.gmra.mrb[0].mxu0 %v1023
      %v1935 = vpop.f32.mrb[0].mxu0
      %v1936 = vadd.f32 %v1775, %v1935
      %v1937 = vpop.f32.mrb[0].mxu0
      %v1938 = vpop.f32.mrb[0].mxu0
      %v1939 = vadd.f32 %v1778, %v1938
      %v1940 = vpop.f32.mrb[0].mxu0
      %1941 = vmatprep.mubr.bf16.mxu0 %v1033
      %1942 = vmatmul.mubr.bf16.gmra.mrb[0].mxu0 %v1032
      %v1943 = vpop.f32.mrb[0].mxu0
      %v1944 = vadd.f32 %v1783, %v1943
      %v1945 = vpop.f32.mrb[0].mxu0
      %v1946 = vpop.f32.mrb[0].mxu0
      %v1947 = vadd.f32 %v1786, %v1946
      %v1948 = vpop.f32.mrb[0].mxu0
      %1949 = vmatprep.mubr.bf16.mxu0 %v1042
      %1950 = vmatmul.mubr.bf16.gmra.mrb[0].mxu0 %v1041
      %v1951 = vpop.f32.mrb[0].mxu0
      %v1952 = vadd.f32 %v1791, %v1951
      %v1953 = vpop.f32.mrb[0].mxu0
      %v1954 = vpop.f32.mrb[0].mxu0
      %v1955 = vadd.f32 %v1794, %v1954
      %v1956 = vpop.f32.mrb[0].mxu0
      %1957 = vmatprep.mubr.bf16.mxu0 %v1051
      %1958 = vmatmul.mubr.bf16.gmra.mrb[0].mxu0 %v1050
      %v1959 = vpop.f32.mrb[0].mxu0
      %v1960 = vadd.f32 %v1799, %v1959
      %v1961 = vpop.f32.mrb[0].mxu0
      %v1962 = vpop.f32.mrb[0].mxu0
      %v1963 = vadd.f32 %v1802, %v1962
      %v1964 = vpop.f32.mrb[0].mxu0
      %1965 = vmatprep.mubr.bf16.mxu0 %v1060
      %1966 = vmatmul.mubr.bf16.gmra.mrb[0].mxu0 %v1059
      %v1967 = vpop.f32.mrb[0].mxu0
      %v1968 = vadd.f32 %v1807, %v1967
      %v1969 = vpop.f32.mrb[0].mxu0
      %v1970 = vpop.f32.mrb[0].mxu0
      %v1971 = vadd.f32 %v1810, %v1970
      %v1972 = vpop.f32.mrb[0].mxu0
      %1973 = vmatprep.mubr.bf16.mxu0 %v1069
      %1974 = vmatmul.mubr.bf16.gmra.mrb[0].mxu0 %v1068
      %v1975 = vpop.f32.mrb[0].mxu0
      %v1976 = vadd.f32 %v1815, %v1975
      %v1977 = vpop.f32.mrb[0].mxu0
      %v1978 = vpop.f32.mrb[0].mxu0
      %v1979 = vadd.f32 %v1818, %v1978
      %v1980 = vpop.f32.mrb[0].mxu0
      %1981 = vmatprep.mubr.bf16.mxu0 %v1078
      %1982 = vmatmul.mubr.bf16.gmra.mrb[0].mxu0 %v1077
      %v1983 = vpop.f32.mrb[0].mxu0
      %v1984 = vadd.f32 %v1823, %v1983
      %v1985 = vpop.f32.mrb[0].mxu0
      %v1986 = vpop.f32.mrb[0].mxu0
      %v1987 = vadd.f32 %v1826, %v1986
      %v1988 = vpop.f32.mrb[0].mxu0
      %1989 = vmatprep.mubr.bf16.mxu0 %v1087
      %1990 = vmatmul.mubr.bf16.gmra.mrb[0].mxu0 %v1086
      %v1991 = vpop.f32.mrb[0].mxu0
      %v1992 = vadd.f32 %v1831, %v1991
      %v1993 = vpop.f32.mrb[0].mxu0
      %v1994 = vpop.f32.mrb[0].mxu0
      %v1995 = vadd.f32 %v1834, %v1994
      %v1996 = vpop.f32.mrb[0].mxu0
      %1997 = vmatprep.mubr.bf16.mxu0 %v1096
      %1998 = vmatmul.mubr.bf16.gmra.mrb[0].mxu0 %v1095
      %v1999 = vpop.f32.mrb[0].mxu0
      %v2000 = vadd.f32 %v1839, %v1999
      %v2001 = vpop.f32.mrb[0].mxu0
      %v2002 = vpop.f32.mrb[0].mxu0
      %v2003 = vadd.f32 %v1842, %v2002
      %v2004 = vpop.f32.mrb[0].mxu0
      %2005 = vmatprep.mubr.bf16.mxu0 %v1105
      %2006 = vmatmul.mubr.bf16.gmra.mrb[0].mxu0 %v1104
      %v2007 = vpop.f32.mrb[0].mxu0
      %v2008 = vadd.f32 %v1847, %v2007
      %v2009 = vpop.f32.mrb[0].mxu0
      %v2010 = vpop.f32.mrb[0].mxu0
      %v2011 = vadd.f32 %v1850, %v2010
      %v2012 = vpop.f32.mrb[0].mxu0
      %2013 = vmatprep.mubr.bf16.mxu0 %v1114
      %2014 = vmatmul.mubr.bf16.gmra.mrb[0].mxu0 %v1113
      %v2015 = vpop.f32.mrb[0].mxu0
      %v2016 = vadd.f32 %v1855, %v2015
      %v2017 = vpop.f32.mrb[0].mxu0
      %v2018 = vpop.f32.mrb[0].mxu0
      %v2019 = vadd.f32 %v1858, %v2018
      %v2020 = vpop.f32.mrb[0].mxu0
      %2021 = vmatprep.mubr.bf16.mxu0 %v1123
      %2022 = vmatmul.mubr.bf16.gmra.mrb[0].mxu0 %v1122
      %v2023 = vpop.f32.mrb[0].mxu0
      %v2024 = vadd.f32 %v1863, %v2023
      %v2025 = vpop.f32.mrb[0].mxu0
      %v2026 = vpop.f32.mrb[0].mxu0
      %v2027 = vadd.f32 %v1866, %v2026
      %v2028 = vpop.f32.mrb[0].mxu0
      %2029 = vmatprep.mubr.bf16.mxu0 %v1132
      %2030 = vmatmul.mubr.bf16.gmra.mrb[0].mxu0 %v1131
      %v2031 = vpop.f32.mrb[0].mxu0
      %v2032 = vadd.f32 %v1871, %v2031
      %v2033 = vpop.f32.mrb[0].mxu0
      %v2034 = vpop.f32.mrb[0].mxu0
      %v2035 = vadd.f32 %v1874, %v2034
      %v2036 = vpop.f32.mrb[0].mxu0
      %2037 = vmatprep.mubr.bf16.mxu0 %v1141
      %2038 = vmatmul.mubr.bf16.gmra.mrb[0].mxu0 %v1140
      %v2039 = vpop.f32.mrb[0].mxu0
      %v2040 = vadd.f32 %v1879, %v2039
      %v2041 = vpop.f32.mrb[0].mxu0
      %v2042 = vpop.f32.mrb[0].mxu0
      %v2043 = vadd.f32 %v1882, %v2042
      %v2044 = vpop.f32.mrb[0].mxu0
      %2045 = vmatprep.mubr.bf16.mxu0 %v1150
      %2046 = vmatmul.mubr.bf16.gmra.mrb[0].mxu0 %v1149
      %v2047 = vpop.f32.mrb[0].mxu0
      %v2048 = vadd.f32 %v1887, %v2047
      %v2049 = vpop.f32.mrb[0].mxu0
      %v2050 = vpop.f32.mrb[0].mxu0
      %v2051 = vadd.f32 %v1890, %v2050
      %v2052 = vpop.f32.mrb[0].mxu0
      %2053 = vdwg.mxu0
      %2054 = vmatprep.subr.bf16.mxu0 0
      %2055 = vmatpush1.bf16.msra.mxu0 %v1620
      %2056 = vmatprep.subr.bf16.mxu0 0
      %2057 = vmatpush1.bf16.msra.mxu0 %v1621
      %2058 = vmatprep.subr.bf16.mxu0 0
      %2059 = vmatpush1.bf16.msra.mxu0 %v1622
      %2060 = vmatprep.subr.bf16.mxu0 0
      %2061 = vmatpush1.bf16.msra.mxu0 %v1623
      %2062 = vmatprep.subr.bf16.mxu0 0
      %2063 = vmatpush1.bf16.msra.mxu0 %v1624
      %2064 = vmatprep.subr.bf16.mxu0 0
      %2065 = vmatpush1.bf16.msra.mxu0 %v1625
      %2066 = vmatprep.subr.bf16.mxu0 0
      %2067 = vmatpush1.bf16.msra.mxu0 %v1626
      %2068 = vmatprep.subr.bf16.mxu0 0
      %2069 = vmatpush1.bf16.msra.mxu0 %v1627
      %2070 = vmatprep.subr.bf16.mxu0 0
      %2071 = vmatpush1.bf16.msra.mxu0 %v1628
      %2072 = vmatprep.subr.bf16.mxu0 0
      %2073 = vmatpush1.bf16.msra.mxu0 %v1629
      %2074 = vmatprep.subr.bf16.mxu0 0
      %2075 = vmatpush1.bf16.msra.mxu0 %v1630
      %2076 = vmatprep.subr.bf16.mxu0 0
      %2077 = vmatpush1.bf16.msra.mxu0 %v1631
      %2078 = vmatprep.subr.bf16.mxu0 0
      %2079 = vmatpush1.bf16.msra.mxu0 %v1632
      %2080 = vmatprep.subr.bf16.mxu0 0
      %2081 = vmatpush1.bf16.msra.mxu0 %v1633
      %2082 = vmatprep.subr.bf16.mxu0 0
      %2083 = vmatpush1.bf16.msra.mxu0 %v1634
      %2084 = vmatprep.subr.bf16.mxu0 0
      %2085 = vmatpush1.bf16.msra.mxu0 %v1635
      %2086 = vmatprep.mubr.bf16.mxu0 %v1017
      %2087 = vmatmul.mubr.bf16.gmra.mrb[0].mxu0 %v1016
      %v2088 = vpop.f32.mrb[0].mxu0
      %v2089 = vadd.f32 %v1928, %v2088
      %v2090 = vpop.f32.mrb[0].mxu0
      %v2091 = vpop.f32.mrb[0].mxu0
      %v2092 = vadd.f32 %v1931, %v2091
      %v2093 = vpop.f32.mrb[0].mxu0
      %2094 = vmatprep.mubr.bf16.mxu0 %v1026
      %2095 = vmatmul.mubr.bf16.gmra.mrb[0].mxu0 %v1025
      %v2096 = vpop.f32.mrb[0].mxu0
      %v2097 = vadd.f32 %v1936, %v2096
      %v2098 = vpop.f32.mrb[0].mxu0
      %v2099 = vpop.f32.mrb[0].mxu0
      %v2100 = vadd.f32 %v1939, %v2099
      %v2101 = vpop.f32.mrb[0].mxu0
      %2102 = vmatprep.mubr.bf16.mxu0 %v1035
      %2103 = vmatmul.mubr.bf16.gmra.mrb[0].mxu0 %v1034
      %v2104 = vpop.f32.mrb[0].mxu0
      %v2105 = vadd.f32 %v1944, %v2104
      %v2106 = vpop.f32.mrb[0].mxu0
      %v2107 = vpop.f32.mrb[0].mxu0
      %v2108 = vadd.f32 %v1947, %v2107
      %v2109 = vpop.f32.mrb[0].mxu0
      %2110 = vmatprep.mubr.bf16.mxu0 %v1044
      %2111 = vmatmul.mubr.bf16.gmra.mrb[0].mxu0 %v1043
      %v2112 = vpop.f32.mrb[0].mxu0
      %v2113 = vadd.f32 %v1952, %v2112
      %v2114 = vpop.f32.mrb[0].mxu0
      %v2115 = vpop.f32.mrb[0].mxu0
      %v2116 = vadd.f32 %v1955, %v2115
      %v2117 = vpop.f32.mrb[0].mxu0
      %2118 = vmatprep.mubr.bf16.mxu0 %v1053
      %2119 = vmatmul.mubr.bf16.gmra.mrb[0].mxu0 %v1052
      %v2120 = vpop.f32.mrb[0].mxu0
      %v2121 = vadd.f32 %v1960, %v2120
      %v2122 = vpop.f32.mrb[0].mxu0
      %v2123 = vpop.f32.mrb[0].mxu0
      %v2124 = vadd.f32 %v1963, %v2123
      %v2125 = vpop.f32.mrb[0].mxu0
      %2126 = vmatprep.mubr.bf16.mxu0 %v1062
      %2127 = vmatmul.mubr.bf16.gmra.mrb[0].mxu0 %v1061
      %v2128 = vpop.f32.mrb[0].mxu0
      %v2129 = vadd.f32 %v1968, %v2128
      %v2130 = vpop.f32.mrb[0].mxu0
      %v2131 = vpop.f32.mrb[0].mxu0
      %v2132 = vadd.f32 %v1971, %v2131
      %v2133 = vpop.f32.mrb[0].mxu0
      %2134 = vmatprep.mubr.bf16.mxu0 %v1071
      %2135 = vmatmul.mubr.bf16.gmra.mrb[0].mxu0 %v1070
      %v2136 = vpop.f32.mrb[0].mxu0
      %v2137 = vadd.f32 %v1976, %v2136
      %v2138 = vpop.f32.mrb[0].mxu0
      %v2139 = vpop.f32.mrb[0].mxu0
      %v2140 = vadd.f32 %v1979, %v2139
      %v2141 = vpop.f32.mrb[0].mxu0
      %2142 = vmatprep.mubr.bf16.mxu0 %v1080
      %2143 = vmatmul.mubr.bf16.gmra.mrb[0].mxu0 %v1079
      %v2144 = vpop.f32.mrb[0].mxu0
      %v2145 = vadd.f32 %v1984, %v2144
      %v2146 = vpop.f32.mrb[0].mxu0
      %v2147 = vpop.f32.mrb[0].mxu0
      %v2148 = vadd.f32 %v1987, %v2147
      %v2149 = vpop.f32.mrb[0].mxu0
      %2150 = vmatprep.mubr.bf16.mxu0 %v1089
      %2151 = vmatmul.mubr.bf16.gmra.mrb[0].mxu0 %v1088
      %v2152 = vpop.f32.mrb[0].mxu0
      %v2153 = vadd.f32 %v1992, %v2152
      %v2154 = vpop.f32.mrb[0].mxu0
      %v2155 = vpop.f32.mrb[0].mxu0
      %v2156 = vadd.f32 %v1995, %v2155
      %v2157 = vpop.f32.mrb[0].mxu0
      %2158 = vmatprep.mubr.bf16.mxu0 %v1098
      %2159 = vmatmul.mubr.bf16.gmra.mrb[0].mxu0 %v1097
      %v2160 = vpop.f32.mrb[0].mxu0
      %v2161 = vadd.f32 %v2000, %v2160
      %v2162 = vpop.f32.mrb[0].mxu0
      %v2163 = vpop.f32.mrb[0].mxu0
      %v2164 = vadd.f32 %v2003, %v2163
      %v2165 = vpop.f32.mrb[0].mxu0
      %2166 = vmatprep.mubr.bf16.mxu0 %v1107
      %2167 = vmatmul.mubr.bf16.gmra.mrb[0].mxu0 %v1106
      %v2168 = vpop.f32.mrb[0].mxu0
      %v2169 = vadd.f32 %v2008, %v2168
      %v2170 = vpop.f32.mrb[0].mxu0
      %v2171 = vpop.f32.mrb[0].mxu0
      %v2172 = vadd.f32 %v2011, %v2171
      %v2173 = vpop.f32.mrb[0].mxu0
      %2174 = vmatprep.mubr.bf16.mxu0 %v1116
      %2175 = vmatmul.mubr.bf16.gmra.mrb[0].mxu0 %v1115
      %v2176 = vpop.f32.mrb[0].mxu0
      %v2177 = vadd.f32 %v2016, %v2176
      %v2178 = vpop.f32.mrb[0].mxu0
      %v2179 = vpop.f32.mrb[0].mxu0
      %v2180 = vadd.f32 %v2019, %v2179
      %v2181 = vpop.f32.mrb[0].mxu0
      %2182 = vmatprep.mubr.bf16.mxu0 %v1125
      %2183 = vmatmul.mubr.bf16.gmra.mrb[0].mxu0 %v1124
      %v2184 = vpop.f32.mrb[0].mxu0
      %v2185 = vadd.f32 %v2024, %v2184
      %v2186 = vpop.f32.mrb[0].mxu0
      %v2187 = vpop.f32.mrb[0].mxu0
      %v2188 = vadd.f32 %v2027, %v2187
      %v2189 = vpop.f32.mrb[0].mxu0
      %2190 = vmatprep.mubr.bf16.mxu0 %v1134
      %2191 = vmatmul.mubr.bf16.gmra.mrb[0].mxu0 %v1133
      %v2192 = vpop.f32.mrb[0].mxu0
      %v2193 = vadd.f32 %v2032, %v2192
      %v2194 = vpop.f32.mrb[0].mxu0
      %v2195 = vpop.f32.mrb[0].mxu0
      %v2196 = vadd.f32 %v2035, %v2195
      %v2197 = vpop.f32.mrb[0].mxu0
      %2198 = vmatprep.mubr.bf16.mxu0 %v1143
      %2199 = vmatmul.mubr.bf16.gmra.mrb[0].mxu0 %v1142
      %v2200 = vpop.f32.mrb[0].mxu0
      %v2201 = vadd.f32 %v2040, %v2200
      %v2202 = vpop.f32.mrb[0].mxu0
      %v2203 = vpop.f32.mrb[0].mxu0
      %v2204 = vadd.f32 %v2043, %v2203
      %v2205 = vpop.f32.mrb[0].mxu0
      %2206 = vmatprep.mubr.bf16.mxu0 %v1152
      %2207 = vmatmul.mubr.bf16.gmra.mrb[0].mxu0 %v1151
      %v2208 = vpop.f32.mrb[0].mxu0
      %v2209 = vadd.f32 %v2048, %v2208
      %v2210 = vpop.f32.mrb[0].mxu0
      %v2211 = vpop.f32.mrb[0].mxu0
      %v2212 = vadd.f32 %v2051, %v2211
      %v2213 = vpop.f32.mrb[0].mxu0
      %2214 = vdwg.mxu0
      %2215 = vmatprep.subr.bf16.mxu0 0
      %2216 = vmatpush1.bf16.msra.mxu0 %v1636
      %2217 = vmatprep.subr.bf16.mxu0 0
      %2218 = vmatpush1.bf16.msra.mxu0 %v1637
      %2219 = vmatprep.subr.bf16.mxu0 0
      %2220 = vmatpush1.bf16.msra.mxu0 %v1638
      %2221 = vmatprep.subr.bf16.mxu0 0
      %2222 = vmatpush1.bf16.msra.mxu0 %v1639
      %2223 = vmatprep.subr.bf16.mxu0 0
      %2224 = vmatpush1.bf16.msra.mxu0 %v1640
      %2225 = vmatprep.subr.bf16.mxu0 0
      %2226 = vmatpush1.bf16.msra.mxu0 %v1641
      %2227 = vmatprep.subr.bf16.mxu0 0
      %2228 = vmatpush1.bf16.msra.mxu0 %v1642
      %2229 = vmatprep.subr.bf16.mxu0 0
      %2230 = vmatpush1.bf16.msra.mxu0 %v1643
      %2231 = vmatprep.subr.bf16.mxu0 0
      %2232 = vmatpush1.bf16.msra.mxu0 %v1644
      %2233 = vmatprep.subr.bf16.mxu0 0
      %2234 = vmatpush1.bf16.msra.mxu0 %v1645
      %2235 = vmatprep.subr.bf16.mxu0 0
      %2236 = vmatpush1.bf16.msra.mxu0 %v1646
      %2237 = vmatprep.subr.bf16.mxu0 0
      %2238 = vmatpush1.bf16.msra.mxu0 %v1647
      %2239 = vmatprep.subr.bf16.mxu0 0
      %2240 = vmatpush1.bf16.msra.mxu0 %v1648
      %2241 = vmatprep.subr.bf16.mxu0 0
      %2242 = vmatpush1.bf16.msra.mxu0 %v1649
      %2243 = vmatprep.subr.bf16.mxu0 0
      %2244 = vmatpush1.bf16.msra.mxu0 %v1650
      %2245 = vmatprep.subr.bf16.mxu0 0
      %2246 = vmatpush1.bf16.msra.mxu0 %v1651
      %2247 = vmatprep.mubr.bf16.mxu0 %v1019
      %2248 = vmatmul.mubr.bf16.gmra.mrb[0].mxu0 %v1018
      %v2249 = vpop.f32.mrb[0].mxu0
      %v2250 = vadd.f32 %v2089, %v2249
      %v2251 = vpop.f32.mrb[0].mxu0
      %v2252 = vpop.f32.mrb[0].mxu0
      %v2253 = vadd.f32 %v2092, %v2252
      %v2254 = vpop.f32.mrb[0].mxu0
      %2255 = vmatprep.mubr.bf16.mxu0 %v1028
      %2256 = vmatmul.mubr.bf16.gmra.mrb[0].mxu0 %v1027
      %v2257 = vpop.f32.mrb[0].mxu0
      %v2258 = vadd.f32 %v2097, %v2257
      %v2259 = vpop.f32.mrb[0].mxu0
      %v2260 = vpop.f32.mrb[0].mxu0
      %v2261 = vadd.f32 %v2100, %v2260
      %v2262 = vpop.f32.mrb[0].mxu0
      %2263 = vmatprep.mubr.bf16.mxu0 %v1037
      %2264 = vmatmul.mubr.bf16.gmra.mrb[0].mxu0 %v1036
      %v2265 = vpop.f32.mrb[0].mxu0
      %v2266 = vadd.f32 %v2105, %v2265
      %v2267 = vpop.f32.mrb[0].mxu0
      %v2268 = vpop.f32.mrb[0].mxu0
      %v2269 = vadd.f32 %v2108, %v2268
      %v2270 = vpop.f32.mrb[0].mxu0
      %2271 = vmatprep.mubr.bf16.mxu0 %v1046
      %2272 = vmatmul.mubr.bf16.gmra.mrb[0].mxu0 %v1045
      %v2273 = vpop.f32.mrb[0].mxu0
      %v2274 = vadd.f32 %v2113, %v2273
      %v2275 = vpop.f32.mrb[0].mxu0
      %v2276 = vpop.f32.mrb[0].mxu0
      %v2277 = vadd.f32 %v2116, %v2276
      %v2278 = vpop.f32.mrb[0].mxu0
      %2279 = vmatprep.mubr.bf16.mxu0 %v1055
      %2280 = vmatmul.mubr.bf16.gmra.mrb[0].mxu0 %v1054
      %v2281 = vpop.f32.mrb[0].mxu0
      %v2282 = vadd.f32 %v2121, %v2281
      %v2283 = vpop.f32.mrb[0].mxu0
      %v2284 = vpop.f32.mrb[0].mxu0
      %v2285 = vadd.f32 %v2124, %v2284
      %v2286 = vpop.f32.mrb[0].mxu0
      %2287 = vmatprep.mubr.bf16.mxu0 %v1064
      %2288 = vmatmul.mubr.bf16.gmra.mrb[0].mxu0 %v1063
      %v2289 = vpop.f32.mrb[0].mxu0
      %v2290 = vadd.f32 %v2129, %v2289
      %v2291 = vpop.f32.mrb[0].mxu0
      %v2292 = vpop.f32.mrb[0].mxu0
      %v2293 = vadd.f32 %v2132, %v2292
      %v2294 = vpop.f32.mrb[0].mxu0
      %2295 = vmatprep.mubr.bf16.mxu0 %v1073
      %2296 = vmatmul.mubr.bf16.gmra.mrb[0].mxu0 %v1072
      %v2297 = vpop.f32.mrb[0].mxu0
      %v2298 = vadd.f32 %v2137, %v2297
      %v2299 = vpop.f32.mrb[0].mxu0
      %v2300 = vpop.f32.mrb[0].mxu0
      %v2301 = vadd.f32 %v2140, %v2300
      %v2302 = vpop.f32.mrb[0].mxu0
      %2303 = vmatprep.mubr.bf16.mxu0 %v1082
      %2304 = vmatmul.mubr.bf16.gmra.mrb[0].mxu0 %v1081
      %v2305 = vpop.f32.mrb[0].mxu0
      %v2306 = vadd.f32 %v2145, %v2305
      %v2307 = vpop.f32.mrb[0].mxu0
      %v2308 = vpop.f32.mrb[0].mxu0
      %v2309 = vadd.f32 %v2148, %v2308
      %v2310 = vpop.f32.mrb[0].mxu0
      %2311 = vmatprep.mubr.bf16.mxu0 %v1091
      %2312 = vmatmul.mubr.bf16.gmra.mrb[0].mxu0 %v1090
      %v2313 = vpop.f32.mrb[0].mxu0
      %v2314 = vadd.f32 %v2153, %v2313
      %v2315 = vpop.f32.mrb[0].mxu0
      %v2316 = vpop.f32.mrb[0].mxu0
      %v2317 = vadd.f32 %v2156, %v2316
      %v2318 = vpop.f32.mrb[0].mxu0
      %2319 = vmatprep.mubr.bf16.mxu0 %v1100
      %2320 = vmatmul.mubr.bf16.gmra.mrb[0].mxu0 %v1099
      %v2321 = vpop.f32.mrb[0].mxu0
      %v2322 = vadd.f32 %v2161, %v2321
      %v2323 = vpop.f32.mrb[0].mxu0
      %v2324 = vpop.f32.mrb[0].mxu0
      %v2325 = vadd.f32 %v2164, %v2324
      %v2326 = vpop.f32.mrb[0].mxu0
      %2327 = vmatprep.mubr.bf16.mxu0 %v1109
      %2328 = vmatmul.mubr.bf16.gmra.mrb[0].mxu0 %v1108
      %v2329 = vpop.f32.mrb[0].mxu0
      %v2330 = vadd.f32 %v2169, %v2329
      %v2331 = vpop.f32.mrb[0].mxu0
      %v2332 = vpop.f32.mrb[0].mxu0
      %v2333 = vadd.f32 %v2172, %v2332
      %v2334 = vpop.f32.mrb[0].mxu0
      %2335 = vmatprep.mubr.bf16.mxu0 %v1118
      %2336 = vmatmul.mubr.bf16.gmra.mrb[0].mxu0 %v1117
      %v2337 = vpop.f32.mrb[0].mxu0
      %v2338 = vadd.f32 %v2177, %v2337
      %v2339 = vpop.f32.mrb[0].mxu0
      %v2340 = vpop.f32.mrb[0].mxu0
      %v2341 = vadd.f32 %v2180, %v2340
      %v2342 = vpop.f32.mrb[0].mxu0
      %2343 = vmatprep.mubr.bf16.mxu0 %v1127
      %2344 = vmatmul.mubr.bf16.gmra.mrb[0].mxu0 %v1126
      %v2345 = vpop.f32.mrb[0].mxu0
      %v2346 = vadd.f32 %v2185, %v2345
      %v2347 = vpop.f32.mrb[0].mxu0
      %v2348 = vpop.f32.mrb[0].mxu0
      %v2349 = vadd.f32 %v2188, %v2348
      %v2350 = vpop.f32.mrb[0].mxu0
      %2351 = vmatprep.mubr.bf16.mxu0 %v1136
      %2352 = vmatmul.mubr.bf16.gmra.mrb[0].mxu0 %v1135
      %v2353 = vpop.f32.mrb[0].mxu0
      %v2354 = vadd.f32 %v2193, %v2353
      %v2355 = vpop.f32.mrb[0].mxu0
      %v2356 = vpop.f32.mrb[0].mxu0
      %v2357 = vadd.f32 %v2196, %v2356
      %v2358 = vpop.f32.mrb[0].mxu0
      %2359 = vmatprep.mubr.bf16.mxu0 %v1145
      %2360 = vmatmul.mubr.bf16.gmra.mrb[0].mxu0 %v1144
      %v2361 = vpop.f32.mrb[0].mxu0
      %v2362 = vadd.f32 %v2201, %v2361
      %v2363 = vpop.f32.mrb[0].mxu0
      %v2364 = vpop.f32.mrb[0].mxu0
      %v2365 = vadd.f32 %v2204, %v2364
      %v2366 = vpop.f32.mrb[0].mxu0
      %2367 = vmatprep.mubr.bf16.mxu0 %v1154
      %2368 = vmatmul.mubr.bf16.gmra.mrb[0].mxu0 %v1153
      %v2369 = vpop.f32.mrb[0].mxu0
      %v2370 = vadd.f32 %v2209, %v2369
      %v2371 = vpop.f32.mrb[0].mxu0
      %v2372 = vpop.f32.mrb[0].mxu0
      %v2373 = vadd.f32 %v2212, %v2372
      %v2374 = vpop.f32.mrb[0].mxu0
      %2375 = vdwg.mxu0
      %2376 = vmatprep.subr.bf16.mxu0 0
      %2377 = vmatpush1.bf16.msra.mxu0 %v1652
      %2378 = vmatprep.subr.bf16.mxu0 0
      %2379 = vmatpush1.bf16.msra.mxu0 %v1653
      %2380 = vmatprep.subr.bf16.mxu0 0
      %2381 = vmatpush1.bf16.msra.mxu0 %v1654
      %2382 = vmatprep.subr.bf16.mxu0 0
      %2383 = vmatpush1.bf16.msra.mxu0 %v1655
      %2384 = vmatprep.subr.bf16.mxu0 0
      %2385 = vmatpush1.bf16.msra.mxu0 %v1656
      %2386 = vmatprep.subr.bf16.mxu0 0
      %2387 = vmatpush1.bf16.msra.mxu0 %v1657
      %2388 = vmatprep.subr.bf16.mxu0 0
      %2389 = vmatpush1.bf16.msra.mxu0 %v1658
      %2390 = vmatprep.subr.bf16.mxu0 0
      %2391 = vmatpush1.bf16.msra.mxu0 %v1659
      %2392 = vmatprep.subr.bf16.mxu0 0
      %2393 = vmatpush1.bf16.msra.mxu0 0
      %2394 = vmatprep.subr.bf16.mxu0 0
      %2395 = vmatpush1.bf16.msra.mxu0 0
      %2396 = vmatprep.subr.bf16.mxu0 0
      %2397 = vmatpush1.bf16.msra.mxu0 0
      %2398 = vmatprep.subr.bf16.mxu0 0
      %2399 = vmatpush1.bf16.msra.mxu0 0
      %2400 = vmatprep.subr.bf16.mxu0 0
      %2401 = vmatpush1.bf16.msra.mxu0 0
      %2402 = vmatprep.subr.bf16.mxu0 0
      %2403 = vmatpush1.bf16.msra.mxu0 0
      %2404 = vmatprep.subr.bf16.mxu0 0
      %2405 = vmatpush1.bf16.msra.mxu0 0
      %2406 = vmatprep.subr.bf16.mxu0 0
      %2407 = vmatpush1.bf16.msra.mxu0 0
      %2408 = vmatprep.mubr.bf16.mxu0 0
      %2409 = vmatmul.mubr.bf16.gmra.mrb[0].mxu0 %v1020
      %v2410 = vpop.f32.mrb[0].mxu0
      %v2411 = vadd.f32 %v2250, %v2410
      %v2412 = vpop.f32.mrb[0].mxu0
      %v2413 = vpop.f32.mrb[0].mxu0
      %v2414 = vadd.f32 %v2253, %v2413
      %v2415 = vpop.f32.mrb[0].mxu0
      %2416 = vmatprep.mubr.bf16.mxu0 0
      %2417 = vmatmul.mubr.bf16.gmra.mrb[0].mxu0 %v1029
      %v2418 = vpop.f32.mrb[0].mxu0
      %v2419 = vadd.f32 %v2258, %v2418
      %v2420 = vpop.f32.mrb[0].mxu0
      %v2421 = vpop.f32.mrb[0].mxu0
      %v2422 = vadd.f32 %v2261, %v2421
      %v2423 = vpop.f32.mrb[0].mxu0
      %2424 = vmatprep.mubr.bf16.mxu0 0
      %2425 = vmatmul.mubr.bf16.gmra.mrb[0].mxu0 %v1038
      %v2426 = vpop.f32.mrb[0].mxu0
      %v2427 = vadd.f32 %v2266, %v2426
      %v2428 = vpop.f32.mrb[0].mxu0
      %v2429 = vpop.f32.mrb[0].mxu0
      %v2430 = vadd.f32 %v2269, %v2429
      %v2431 = vpop.f32.mrb[0].mxu0
      %2432 = vmatprep.mubr.bf16.mxu0 0
      %2433 = vmatmul.mubr.bf16.gmra.mrb[0].mxu0 %v1047
      %v2434 = vpop.f32.mrb[0].mxu0
      %v2435 = vadd.f32 %v2274, %v2434
      %v2436 = vpop.f32.mrb[0].mxu0
      %v2437 = vpop.f32.mrb[0].mxu0
      %v2438 = vadd.f32 %v2277, %v2437
      %v2439 = vpop.f32.mrb[0].mxu0
      %2440 = vmatprep.mubr.bf16.mxu0 0
      %2441 = vmatmul.mubr.bf16.gmra.mrb[0].mxu0 %v1056
      %v2442 = vpop.f32.mrb[0].mxu0
      %v2443 = vadd.f32 %v2282, %v2442
      %v2444 = vpop.f32.mrb[0].mxu0
      %v2445 = vpop.f32.mrb[0].mxu0
      %v2446 = vadd.f32 %v2285, %v2445
      %v2447 = vpop.f32.mrb[0].mxu0
      %2448 = vmatprep.mubr.bf16.mxu0 0
      %2449 = vmatmul.mubr.bf16.gmra.mrb[0].mxu0 %v1065
      %v2450 = vpop.f32.mrb[0].mxu0
      %v2451 = vadd.f32 %v2290, %v2450
      %v2452 = vpop.f32.mrb[0].mxu0
      %v2453 = vpop.f32.mrb[0].mxu0
      %v2454 = vadd.f32 %v2293, %v2453
      %v2455 = vpop.f32.mrb[0].mxu0
      %2456 = vmatprep.mubr.bf16.mxu0 0
      %2457 = vmatmul.mubr.bf16.gmra.mrb[0].mxu0 %v1074
      %v2458 = vpop.f32.mrb[0].mxu0
      %v2459 = vadd.f32 %v2298, %v2458
      %v2460 = vpop.f32.mrb[0].mxu0
      %v2461 = vpop.f32.mrb[0].mxu0
      %v2462 = vadd.f32 %v2301, %v2461
      %v2463 = vpop.f32.mrb[0].mxu0
      %2464 = vmatprep.mubr.bf16.mxu0 0
      %2465 = vmatmul.mubr.bf16.gmra.mrb[0].mxu0 %v1083
      %v2466 = vpop.f32.mrb[0].mxu0
      %v2467 = vadd.f32 %v2306, %v2466
      %v2468 = vpop.f32.mrb[0].mxu0
      %v2469 = vpop.f32.mrb[0].mxu0
      %v2470 = vadd.f32 %v2309, %v2469
      %v2471 = vpop.f32.mrb[0].mxu0
      %2472 = vmatprep.mubr.bf16.mxu0 0
      %2473 = vmatmul.mubr.bf16.gmra.mrb[0].mxu0 %v1092
      %v2474 = vpop.f32.mrb[0].mxu0
      %v2475 = vadd.f32 %v2314, %v2474
      %v2476 = vpop.f32.mrb[0].mxu0
      %v2477 = vpop.f32.mrb[0].mxu0
      %v2478 = vadd.f32 %v2317, %v2477
      %v2479 = vpop.f32.mrb[0].mxu0
      %2480 = vmatprep.mubr.bf16.mxu0 0
      %2481 = vmatmul.mubr.bf16.gmra.mrb[0].mxu0 %v1101
      %v2482 = vpop.f32.mrb[0].mxu0
      %v2483 = vadd.f32 %v2322, %v2482
      %v2484 = vpop.f32.mrb[0].mxu0
      %v2485 = vpop.f32.mrb[0].mxu0
      %v2486 = vadd.f32 %v2325, %v2485
      %v2487 = vpop.f32.mrb[0].mxu0
      %2488 = vmatprep.mubr.bf16.mxu0 0
      %2489 = vmatmul.mubr.bf16.gmra.mrb[0].mxu0 %v1110
      %v2490 = vpop.f32.mrb[0].mxu0
      %v2491 = vadd.f32 %v2330, %v2490
      %v2492 = vpop.f32.mrb[0].mxu0
      %v2493 = vpop.f32.mrb[0].mxu0
      %v2494 = vadd.f32 %v2333, %v2493
      %v2495 = vpop.f32.mrb[0].mxu0
      %2496 = vmatprep.mubr.bf16.mxu0 0
      %2497 = vmatmul.mubr.bf16.gmra.mrb[0].mxu0 %v1119
      %v2498 = vpop.f32.mrb[0].mxu0
      %v2499 = vadd.f32 %v2338, %v2498
      %v2500 = vpop.f32.mrb[0].mxu0
      %v2501 = vpop.f32.mrb[0].mxu0
      %v2502 = vadd.f32 %v2341, %v2501
      %v2503 = vpop.f32.mrb[0].mxu0
      %2504 = vmatprep.mubr.bf16.mxu0 0
      %2505 = vmatmul.mubr.bf16.gmra.mrb[0].mxu0 %v1128
      %v2506 = vpop.f32.mrb[0].mxu0
      %v2507 = vadd.f32 %v2346, %v2506
      %v2508 = vpop.f32.mrb[0].mxu0
      %v2509 = vpop.f32.mrb[0].mxu0
      %v2510 = vadd.f32 %v2349, %v2509
      %v2511 = vpop.f32.mrb[0].mxu0
      %2512 = vmatprep.mubr.bf16.mxu0 0
      %2513 = vmatmul.mubr.bf16.gmra.mrb[0].mxu0 %v1137
      %v2514 = vpop.f32.mrb[0].mxu0
      %v2515 = vadd.f32 %v2354, %v2514
      %v2516 = vpop.f32.mrb[0].mxu0
      %v2517 = vpop.f32.mrb[0].mxu0
      %v2518 = vadd.f32 %v2357, %v2517
      %v2519 = vpop.f32.mrb[0].mxu0
      %2520 = vmatprep.mubr.bf16.mxu0 0
      %2521 = vmatmul.mubr.bf16.gmra.mrb[0].mxu0 %v1146
      %v2522 = vpop.f32.mrb[0].mxu0
      %v2523 = vadd.f32 %v2362, %v2522
      %v2524 = vpop.f32.mrb[0].mxu0
      %v2525 = vpop.f32.mrb[0].mxu0
      %v2526 = vadd.f32 %v2365, %v2525
      %v2527 = vpop.f32.mrb[0].mxu0
      %2528 = vmatprep.mubr.bf16.mxu0 0
      %2529 = vmatmul.mubr.bf16.gmra.mrb[0].mxu0 %v1155
      %v2530 = vpop.f32.mrb[0].mxu0
      %v2531 = vadd.f32 %v2370, %v2530
      %v2532 = vpop.f32.mrb[0].mxu0
      %v2533 = vpop.f32.mrb[0].mxu0
      %v2534 = vadd.f32 %v2373, %v2533
      %v2535 = vpop.f32.mrb[0].mxu0
      %2536 = vdwg.mxu0
      %2537 = vst [vmem:[%s242] sm:$0xff] %v2411
      %2538 = vst [vmem:[%s242 + $0x8] sm:$0xff] %v2414
      %2539 = vst [vmem:[%s242 + $0x10] sm:$0xff] %v2419
      %2540 = vst [vmem:[%s242 + $0x18] sm:$0xff] %v2422
      %2541 = vst [vmem:[%s242 + $0x20] sm:$0xff] %v2427
      %2542 = vst [vmem:[%s242 + $0x28] sm:$0xff] %v2430
      %2543 = vst [vmem:[%s242 + $0x30] sm:$0xff] %v2435
      %2544 = vst [vmem:[%s242 + $0x38] sm:$0xff] %v2438
      %2545 = vst [vmem:[%s242 + $0x40] sm:$0xff] %v2443
      %2546 = vst [vmem:[%s242 + $0x48] sm:$0xff] %v2446
      %2547 = vst [vmem:[%s242 + $0x50] sm:$0xff] %v2451
      %2548 = vst [vmem:[%s242 + $0x58] sm:$0xff] %v2454
      %2549 = vst [vmem:[%s242 + $0x60] sm:$0xff] %v2459
      %2550 = vst [vmem:[%s242 + $0x68] sm:$0xff] %v2462
      %2551 = vst [vmem:[%s242 + $0x70] sm:$0xff] %v2467
      %2552 = vst [vmem:[%s242 + $0x78] sm:$0xff] %v2470
      %2553 = vst [vmem:[%s242 + $0x80] sm:$0xff] %v2475
      %2554 = vst [vmem:[%s242 + $0x88] sm:$0xff] %v2478
      %2555 = vst [vmem:[%s242 + $0x90] sm:$0xff] %v2483
      %2556 = vst [vmem:[%s242 + $0x98] sm:$0xff] %v2486
      %2557 = vst [vmem:[%s242 + $0xa0] sm:$0xff] %v2491
      %2558 = vst [vmem:[%s242 + $0xa8] sm:$0xff] %v2494
      %2559 = vst [vmem:[%s242 + $0xb0] sm:$0xff] %v2499
      %2560 = vst [vmem:[%s242 + $0xb8] sm:$0xff] %v2502
      %2561 = vst [vmem:[%s242 + $0xc0] sm:$0xff] %v2507
      %2562 = vst [vmem:[%s242 + $0xc8] sm:$0xff] %v2510
      %2563 = vst [vmem:[%s242 + $0xd0] sm:$0xff] %v2515
      %2564 = vst [vmem:[%s242 + $0xd8] sm:$0xff] %v2518
      %2565 = vst [vmem:[%s242 + $0xe0] sm:$0xff] %v2523
      %2566 = vst [vmem:[%s242 + $0xe8] sm:$0xff] %v2526
      %2567 = vst [vmem:[%s242 + $0xf0] sm:$0xff] %v2531
      %2568 = vst [vmem:[%s242 + $0xf8] sm:$0xff] %v2534
      %v2569 = vadd.f32 %v2411, %v2414
      %v2570 = vadd.f32 %v2569, %v2419
      %v2571 = vadd.f32 %v2570, %v2422
      %v2572 = vadd.f32 %v2571, %v2427
      %v2573 = vadd.f32 %v2572, %v2430
      %v2574 = vadd.f32 %v2573, %v2435
      %v2575 = vadd.f32 %v2574, %v2438
      %v2576 = vadd.f32 %v2575, %v2443
      %v2577 = vadd.f32 %v2576, %v2446
      %v2578 = vadd.f32 %v2577, %v2451
      %v2579 = vadd.f32 %v2578, %v2454
      %v2580 = vadd.f32 %v2579, %v2459
      %v2581 = vadd.f32 %v2580, %v2462
      %v2582 = vadd.f32 %v2581, %v2467
      %v2583 = vadd.f32 %v2582, %v2470
      %v2584 = vadd.f32 %v2583, %v2475
      %v2585 = vadd.f32 %v2584, %v2478
      %v2586 = vadd.f32 %v2585, %v2483
      %v2587 = vadd.f32 %v2586, %v2486
      %v2588 = vadd.f32 %v2587, %v2491
      %v2589 = vadd.f32 %v2588, %v2494
      %v2590 = vadd.f32 %v2589, %v2499
      %v2591 = vadd.f32 %v2590, %v2502
      %v2592 = vadd.f32 %v2591, %v2507
      %v2593 = vadd.f32 %v2592, %v2510
      %v2594 = vadd.f32 %v2593, %v2515
      %v2595 = vadd.f32 %v2594, %v2518
      %v2596 = vadd.f32 %v2595, %v2523
      %v2597 = vadd.f32 %v2596, %v2526
      %v2598 = vadd.f32 %v2597, %v2531
      %v2599 = vadd.f32 %v2598, %v2534
      %v2600 = vrot.slane %v2599, 4
      %v2601 = vadd.f32 %v2599, %v2600
      %v2602 = vrot.slane %v2601, 2
      %v2603 = vadd.f32 %v2601, %v2602
      %v2604 = vrot.slane %v2603, 1
      %v2605 = vadd.f32 %v2603, %v2604
      %v2606 = vmul.f32 %v2411, %v2411
      %v2607 = vmul.f32 %v2414, %v2414
      %v2608 = vmul.f32 %v2419, %v2419
      %v2609 = vmul.f32 %v2422, %v2422
      %v2610 = vmul.f32 %v2427, %v2427
      %v2611 = vmul.f32 %v2430, %v2430
      %v2612 = vmul.f32 %v2435, %v2435
      %v2613 = vmul.f32 %v2438, %v2438
      %v2614 = vmul.f32 %v2443, %v2443
      %v2615 = vmul.f32 %v2446, %v2446
      %v2616 = vmul.f32 %v2451, %v2451
      %v2617 = vmul.f32 %v2454, %v2454
      %v2618 = vmul.f32 %v2459, %v2459
      %v2619 = vmul.f32 %v2462, %v2462
      %v2620 = vmul.f32 %v2467, %v2467
      %v2621 = vmul.f32 %v2470, %v2470
      %v2622 = vmul.f32 %v2475, %v2475
      %v2623 = vmul.f32 %v2478, %v2478
      %v2624 = vmul.f32 %v2483, %v2483
      %v2625 = vmul.f32 %v2486, %v2486
      %v2626 = vmul.f32 %v2491, %v2491
      %v2627 = vmul.f32 %v2494, %v2494
      %v2628 = vmul.f32 %v2499, %v2499
      %v2629 = vmul.f32 %v2502, %v2502
      %v2630 = vmul.f32 %v2507, %v2507
      %v2631 = vmul.f32 %v2510, %v2510
      %v2632 = vmul.f32 %v2515, %v2515
      %v2633 = vmul.f32 %v2518, %v2518
      %v2634 = vmul.f32 %v2523, %v2523
      %v2635 = vmul.f32 %v2526, %v2526
      %v2636 = vmul.f32 %v2531, %v2531
      %v2637 = vmul.f32 %v2534, %v2534
      %v2638 = vadd.f32 %v2606, %v2607
      %v2639 = vadd.f32 %v2638, %v2608
      %v2640 = vadd.f32 %v2639, %v2609
      %v2641 = vadd.f32 %v2640, %v2610
      %v2642 = vadd.f32 %v2641, %v2611
      %v2643 = vadd.f32 %v2642, %v2612
      %v2644 = vadd.f32 %v2643, %v2613
      %v2645 = vadd.f32 %v2644, %v2614
      %v2646 = vadd.f32 %v2645, %v2615
      %v2647 = vadd.f32 %v2646, %v2616
      %v2648 = vadd.f32 %v2647, %v2617
      %v2649 = vadd.f32 %v2648, %v2618
      %v2650 = vadd.f32 %v2649, %v2619
      %v2651 = vadd.f32 %v2650, %v2620
      %v2652 = vadd.f32 %v2651, %v2621
      %v2653 = vadd.f32 %v2652, %v2622
      %v2654 = vadd.f32 %v2653, %v2623
      %v2655 = vadd.f32 %v2654, %v2624
      %v2656 = vadd.f32 %v2655, %v2625
      %v2657 = vadd.f32 %v2656, %v2626
      %v2658 = vadd.f32 %v2657, %v2627
      %v2659 = vadd.f32 %v2658, %v2628
      %v2660 = vadd.f32 %v2659, %v2629
      %v2661 = vadd.f32 %v2660, %v2630
      %v2662 = vadd.f32 %v2661, %v2631
      %v2663 = vadd.f32 %v2662, %v2632
      %v2664 = vadd.f32 %v2663, %v2633
      %v2665 = vadd.f32 %v2664, %v2634
      %v2666 = vadd.f32 %v2665, %v2635
      %v2667 = vadd.f32 %v2666, %v2636
      %v2668 = vadd.f32 %v2667, %v2637
      %v2669 = vrot.slane %v2668, 4
      %v2670 = vadd.f32 %v2668, %v2669
      %v2671 = vrot.slane %v2670, 2
      %v2672 = vadd.f32 %v2670, %v2671
      %v2673 = vrot.slane %v2672, 1
      %v2674 = vadd.f32 %v2672, %v2673
      %2675 = vst [vmem:[%s247] sm:$0xff] %v2605
      %2676 = vst [vmem:[%s251] sm:$0xff] %v2674
      %s2677 = smul.u32 32, %s17
      %p2678 = scmp.lt.s32.totalorder %s2677, 63
      %s2679 = scalar_select %p2678, %s2677, 63
      %s2680 = smul.addr %s2679, 8
      %s2681 = scalar_lea.vmem %s3, %s2680
      %p2682 = scmp.lt.s32.totalorder %s17, 1
      %s2683 = scalar_select %p2682, %s17, 1
      %s2684 = smul.addr %s2683, 8
      %s2685 = scalar_lea.vmem %s4, %s2684
      %p2686 = scmp.lt.s32.totalorder %s17, 1
      %s2687 = scalar_select %p2686, %s17, 1
      %s2688 = smul.addr %s2687, 8
      %s2689 = scalar_lea.vmem %s5, %s2688
      // Predicated region
      $region33: #{up_layer_forward.8} parent=31 // pred_check
        %p2690 = pneg %p103
      $region34: #{up_layer_forward.8} parent=31 // pred_check_branch
        %2692 = sbr.rel (%p2690) target = $region36
      $region35: #{up_layer_forward.8} parent=31 // pred_region
        %s2693 = smul.u32 32, %s17
      $region36: #{up_layer_forward.8} parent=31 // pred_fallthru
        _
      // Predicated region
      $region37: #{up_layer_forward.8} parent=31 // pred_check
        %p2694 = pneg %p129
      $region38: #{up_layer_forward.8} parent=31 // pred_check_branch
        %2696 = sbr.rel (%p2694) target = $region40
      $region39: #{up_layer_forward.8} parent=31 // pred_region
        _
      $region40: #{up_layer_forward.8} parent=31 // pred_fallthru
        _
      // Predicated region
      $region41: #{up_layer_forward.8} parent=31 // pred_check
        %p2697 = pneg %p155
      $region42: #{up_layer_forward.8} parent=31 // pred_check_branch
        %2699 = sbr.rel (%p2697) target = $region44
      $region43: #{up_layer_forward.8} parent=31 // pred_region
        _
      $region44: #{up_layer_forward.8} parent=31 // pred_fallthru
        _
    $region32: #{up_layer_forward.8} parent=5 // pred_fallthru
      _
    %p2700 = scmp.le.s32.totalorder 2, %s12
    // Predicated region
    $region45: #{up_layer_forward.8} parent=5 // pred_check
      %p2701 = pneg %p2700
    $region46: #{up_layer_forward.8} parent=5 // pred_check_branch
      %2703 = sbr.rel (%p2701) target = $region48
    $region47: #{up_layer_forward.8} parent=5 // pred_region
      %s2704 = ssub.s32 %s12, 2
      // Predicated region
      $region49: #{up_layer_forward.8} parent=47 // pred_check
        %p2705 = pneg %p109
      $region50: #{up_layer_forward.8} parent=47 // pred_check_branch
        %2707 = sbr.rel (%p2705) target = $region52
      $region51: #{up_layer_forward.8} parent=47 // pred_region
        %s2708 = smul.u32 32, %s18
        %p2709 = scmp.lt.s32.totalorder %s2708, 63
        %s2710 = scalar_select %p2709, %s2708, 63
        %s2711 = smul.addr %s2710, 8
        %s2712 = scalar_lea.vmem %s3, %s2711
      $region52: #{up_layer_forward.8} parent=47 // pred_fallthru
        _
      // Predicated region
      $region53: #{up_layer_forward.8} parent=47 // pred_check
        %p2713 = pneg %p135
      $region54: #{up_layer_forward.8} parent=47 // pred_check_branch
        %2715 = sbr.rel (%p2713) target = $region56
      $region55: #{up_layer_forward.8} parent=47 // pred_region
        %p2716 = scmp.lt.s32.totalorder %s18, 1
        %s2717 = scalar_select %p2716, %s18, 1
        %s2718 = smul.addr %s2717, 8
        %s2719 = scalar_lea.vmem %s4, %s2718
      $region56: #{up_layer_forward.8} parent=47 // pred_fallthru
        _
      // Predicated region
      $region57: #{up_layer_forward.8} parent=47 // pred_check
        %p2720 = pneg %p161
      $region58: #{up_layer_forward.8} parent=47 // pred_check_branch
        %2722 = sbr.rel (%p2720) target = $region60
      $region59: #{up_layer_forward.8} parent=47 // pred_region
        %p2723 = scmp.lt.s32.totalorder %s18, 1
        %s2724 = scalar_select %p2723, %s18, 1
        %s2725 = smul.addr %s2724, 8
        %s2726 = scalar_lea.vmem %s5, %s2725
      $region60: #{up_layer_forward.8} parent=47 // pred_fallthru
        _
    $region48: #{up_layer_forward.8} parent=5 // pred_fallthru
      _
  $region6: #{up_layer_forward.8} parent=0 // loop_footer
    %s16 = sadd.s32 1, %s12
  $region7: #{up_layer_forward.8} parent=0 // loop_footer_branch
    %11 = sbr.rel target = $region3
  $region8: #{up_layer_forward.8} parent=0 // loop_exit
    _

</llo_original>
